<compile_context>
chip_gen: v7x
topology: tpu7x:2x2x1
jax: 0.10.0
libtpu: 0.0.40
codegen_flags: <defaults>
</compile_context>

<pallas_src>
import jax
import jax.numpy as jnp
import numpy as np
from jax import lax
from jax.experimental import pallas as pl
from jax.experimental.pallas import tpu as pltpu

H = W = 32            # input spatial size implied by fc (16*16*16 after pool)
CIN, COUT = 3, 16
HP = WP = 16          # pooled spatial size
NCLS = 5
K_RAW = 3 * 3 * CIN   # 27
K_PAD = 32            # contraction dim padded to a sublane-aligned size
N_PAD = 128           # class dim padded to one full lane group
SPATIAL = H * W       # 1024
POOLED = HP * WP      # 256
FLAT = COUT * POOLED  # 4096


# ------------------------- Pallas kernel (fully fused) -------------------------

def fused_kernel(p_ref, wc_ref, bc_ref, wf_ref, bf_ref, o_ref, flat_ref):
    # p_ref:    (B_BLK, 32, 1024) im2col patches, K on sublanes,
    #           lane index = dh*512 + dw*256 + hp*16 + wp (pool-parity-major)
    # wc_ref:   (16, 32)    conv weight as GEMM matrix (K zero-padded)
    # bc_ref:   (16, 1)     conv bias
    # wf_ref:   (4096, 128) fc weight (classes zero-padded), VMEM-resident
    # bf_ref:   (1, 128)    fc bias (padded)
    # o_ref:    (B_BLK, 128) padded logits
    # flat_ref: (B_BLK, 4096) scratch, PyTorch flatten order c*256 + hw
    b_blk = p_ref.shape[0]
    wc = wc_ref[...]
    bc = bc_ref[...]
    for b in range(b_blk):                          # static unroll over batch tile
        conv = jnp.dot(wc, p_ref[b], preferred_element_type=jnp.float32)  # (16,1024)
        conv = jnp.maximum(conv + bc, 0.0)          # bias + ReLU, lane-dense
        # 2x2 max-pool = max over the four contiguous 256-lane parity slabs
        pooled = jnp.maximum(
            jnp.maximum(conv[:, 0:POOLED], conv[:, POOLED:2 * POOLED]),
            jnp.maximum(conv[:, 2 * POOLED:3 * POOLED],
                        conv[:, 3 * POOLED:4 * POOLED]),
        )                                           # (16, 256)
        # flatten (C, HW) -> row of length 4096 in c*256 + hw (PyTorch) order
        for c in range(COUT):
            flat_ref[pl.ds(b, 1), pl.ds(c * POOLED, POOLED)] = pooled[c:c + 1, :]
    # fused FC on the whole batch tile; weight stays resident in VMEM
    o_ref[...] = (
        jnp.dot(flat_ref[...], wf_ref[...], preferred_element_type=jnp.float32)
        + bf_ref[...]
    )


# ------------------------- wrapper (plain JAX glue) -------------------------

def im2col_T(x_nchw):
    """(B,3,32,32) NCHW -> (B, 32, 1024): K (padded 27->32) on dim 1,
    spatial on dim 2 with lane index = dh*512 + dw*256 + hp*16 + wp."""
    B = x_nchw.shape[0]
    x = jnp.transpose(x_nchw, (0, 2, 3, 1))                  # NHWC
    xp = jnp.pad(x, ((0, 0), (1, 1), (1, 1), (0, 0)))        # (B, 34, 34, 3)
    taps = [xp[:, kh:kh + H, kw:kw + W, :]
            for kh in range(3) for kw in range(3)]           # each (B,32,32,3)
    pf = jnp.stack(taps, axis=3).reshape(B, H, W, K_RAW)     # k = kh*9+kw*3+c
    # h = 2*hp + dh, w = 2*wp + dw -> (B, hp, dh, wp, dw, k) -> (B, k, dh, dw, hp, wp)
    pf = pf.reshape(B, HP, 2, WP, 2, K_RAW).transpose(0, 5, 2, 4, 1, 3)
    pf = pf.reshape(B, K_RAW, SPATIAL)
    return jnp.pad(pf, ((0, 0), (0, K_PAD - K_RAW), (0, 0)))  # K 27 -> 32


def weather_cnn_forward(x_nchw, params, *, b_blk=8):
    w_conv, b_conv, w_fc, b_fc = params   # PyTorch layouts: OIHW, (16,), (5,4096), (5,)
    B = x_nchw.shape[0]
    bb = b_blk if B >= b_blk else B
    B_pad = ((B + bb - 1) // bb) * bb

    patches = im2col_T(x_nchw).astype(jnp.float32)            # (B, 32, 1024)
    if B_pad != B:
        patches = jnp.pad(patches, ((0, B_pad - B), (0, 0), (0, 0)))

    # conv weight (O,I,KH,KW) -> (O, kh*9+kw*3+cin), zero-padded to K_PAD
    w_mat = jnp.transpose(w_conv, (0, 2, 3, 1)).reshape(COUT, K_RAW)
    w_mat = jnp.pad(w_mat, ((0, 0), (0, K_PAD - K_RAW)))      # (16, 32)
    b_mat = b_conv.reshape(COUT, 1)                            # (16, 1)
    # flatten order c*256+hw == PyTorch .view(C,H,W) order -> use w_fc.T directly
    w_fc_mat = jnp.pad(jnp.transpose(w_fc), ((0, 0), (0, N_PAD - NCLS)))  # (4096,128)
    b_fc_mat = jnp.pad(b_fc, (0, N_PAD - NCLS)).reshape(1, N_PAD)

    out_pad = pl.pallas_call(
        fused_kernel,
        out_shape=jax.ShapeDtypeStruct((B_pad, N_PAD), jnp.float32),
        grid_spec=pltpu.PrefetchScalarGridSpec(
            num_scalar_prefetch=0,
            grid=(B_pad // bb,),
            in_specs=[
                pl.BlockSpec((bb, K_PAD, SPATIAL), lambda i: (i, 0, 0)),
                pl.BlockSpec((COUT, K_PAD), lambda i: (0, 0)),
                pl.BlockSpec((COUT, 1), lambda i: (0, 0)),
                pl.BlockSpec((FLAT, N_PAD), lambda i: (0, 0)),   # VMEM-resident
                pl.BlockSpec((1, N_PAD), lambda i: (0, 0)),
            ],
            out_specs=pl.BlockSpec((bb, N_PAD), lambda i: (i, 0)),
            scratch_shapes=[pltpu.VMEM((bb, FLAT), jnp.float32)],
        ),
        compiler_params=pltpu.CompilerParams(dimension_semantics=("parallel",)),
    )(patches, w_mat, b_mat, w_fc_mat, b_fc_mat)
    return out_pad[:B, :NCLS]


# ------------------------- reference (pure JAX) -------------------------

def reference_forward(x_nchw, params):
    w_conv, b_conv, w_fc, b_fc = params
    B = x_nchw.shape[0]
    conv = lax.conv_general_dilated(
        x_nchw, w_conv, window_strides=(1, 1), padding="SAME",
        dimension_numbers=("NCHW", "OIHW", "NCHW")) + b_conv[None, :, None, None]
    act = jnp.maximum(conv, 0.0)
    pooled = act.reshape(B, COUT, HP, 2, WP, 2).max(axis=(3, 5))
    flat = pooled.reshape(B, COUT * HP * WP)        # PyTorch .view order (C,H,W)
    return flat @ w_fc.T + b_fc[None, :]


# ------------------------- main -------------------------

if __name__ == "__main__":
    key = jax.random.PRNGKey(0)
    k_x, k_cw, k_cb, k_fw, k_fb = jax.random.split(key, 5)

    B = 2
    x = jax.random.normal(k_x, (B, CIN, H, W), dtype=jnp.float32)

    # deterministic synthetic parameters (shapes from the PyTorch __init__)
    w_conv = 0.05 * jax.random.normal(k_cw, (COUT, CIN, 3, 3), dtype=jnp.float32)
    b_conv = 0.05 * jax.random.normal(k_cb, (COUT,), dtype=jnp.float32)
    w_fc = 0.02 * jax.random.normal(k_fw, (NCLS, COUT * HP * WP), dtype=jnp.float32)
    b_fc = 0.02 * jax.random.normal(k_fb, (NCLS,), dtype=jnp.float32)
    params = (w_conv, b_conv, w_fc, b_fc)

    out = jax.block_until_ready(weather_cnn_forward(x, params))
    ref = jax.block_until_ready(reference_forward(x, params))

    assert out.shape == (B, NCLS), out.shape
    if not np.allclose(np.asarray(out), np.asarray(ref), rtol=1e-3, atol=1e-3):
        raise AssertionError("Pallas result does not match JAX reference")
    print("KERNEL_OK")
</pallas_src>

<mosaic_0001>
module attributes {stable_mosaic.version = 11 : i64} {
  func.func @fused_kernel(%arg0: i32, %arg1: memref<2x32x1024xf32, #tpu.memory_space<vmem>>, %arg2: memref<16x32xf32, #tpu.memory_space<vmem>>, %arg3: memref<16x1xf32, #tpu.memory_space<vmem>>, %arg4: memref<4096x128xf32, #tpu.memory_space<vmem>>, %arg5: memref<1x128xf32, #tpu.memory_space<vmem>>, %arg6: memref<2x128xf32, #tpu.memory_space<vmem>>, %arg7: memref<2x4096xf32, #tpu.memory_space<vmem>>) attributes {dimension_semantics = [#tpu.dimension_semantics<parallel>], iteration_bounds = array<i64: 1>, scalar_prefetch = 0 : i64, scratch_operands = 1 : i64, tpu.core_type = #tpu.core_type<tc>, window_params = [{transform_indices = @transform_0, window_bounds = array<i64: 2, 32, 1024>}, {pipeline_mode = #tpu.pipeline_mode<synchronous>, transform_indices = @transform_1, window_bounds = array<i64: 16, 32>}, {pipeline_mode = #tpu.pipeline_mode<synchronous>, transform_indices = @transform_2, window_bounds = array<i64: 16, 1>}, {pipeline_mode = #tpu.pipeline_mode<synchronous>, transform_indices = @transform_3, window_bounds = array<i64: 4096, 128>}, {pipeline_mode = #tpu.pipeline_mode<synchronous>, transform_indices = @transform_4, window_bounds = array<i64: 1, 128>}, {transform_indices = @transform_5, window_bounds = array<i64: 2, 128>}]} {
    %c0 = arith.constant 0 : index
    %c0_0 = arith.constant 0 : index
    %0 = vector.load %arg2[%c0, %c0_0] : memref<16x32xf32, #tpu.memory_space<vmem>>, vector<16x32xf32>
    %c0_1 = arith.constant 0 : index
    %c0_2 = arith.constant 0 : index
    %1 = vector.load %arg3[%c0_1, %c0_2] : memref<16x1xf32, #tpu.memory_space<vmem>>, vector<16x1xf32>
    %c0_3 = arith.constant 0 : index
    %c0_4 = arith.constant 0 : index
    %c0_5 = arith.constant 0 : index
    %2 = vector.load %arg1[%c0_3, %c0_4, %c0_5] : memref<2x32x1024xf32, #tpu.memory_space<vmem>>, vector<1x32x1024xf32>
    %3 = vector.shape_cast %2 : vector<1x32x1024xf32> to vector<32x1024xf32>
    %cst = arith.constant dense<0.000000e+00> : vector<16x1024xf32>
    %4 = tpu.matmul %0, %3, %cst {dimension_numbers = #tpu.dot_dimension_numbers<[1], [0], [0], [1], [0, 0, 1, 1], [], []>} : vector<16x32xf32>, vector<32x1024xf32>, vector<16x1024xf32> -> vector<16x1024xf32>
    %5 = vector.broadcast %1 : vector<16x1xf32> to vector<16x1024xf32>
    %6 = arith.addf %4, %5 : vector<16x1024xf32>
    %cst_6 = arith.constant 0.000000e+00 : f32
    %7 = vector.broadcast %cst_6 : f32 to vector<16x1024xf32>
    %8 = arith.maximumf %6, %7 : vector<16x1024xf32>
    %9 = vector.extract_strided_slice %8 {offsets = [0, 0], sizes = [16, 256], strides = [1, 1]} : vector<16x1024xf32> to vector<16x256xf32>
    %10 = vector.extract_strided_slice %8 {offsets = [0, 256], sizes = [16, 256], strides = [1, 1]} : vector<16x1024xf32> to vector<16x256xf32>
    %11 = arith.maximumf %9, %10 : vector<16x256xf32>
    %12 = vector.extract_strided_slice %8 {offsets = [0, 512], sizes = [16, 256], strides = [1, 1]} : vector<16x1024xf32> to vector<16x256xf32>
    %13 = vector.extract_strided_slice %8 {offsets = [0, 768], sizes = [16, 256], strides = [1, 1]} : vector<16x1024xf32> to vector<16x256xf32>
    %14 = arith.maximumf %12, %13 : vector<16x256xf32>
    %15 = arith.maximumf %11, %14 : vector<16x256xf32>
    %16 = vector.extract_strided_slice %15 {offsets = [0, 0], sizes = [1, 256], strides = [1, 1]} : vector<16x256xf32> to vector<1x256xf32>
    %c0_7 = arith.constant 0 : index
    %c0_8 = arith.constant 0 : index
    %17 = vector.load %arg7[%c0_7, %c0_8] : memref<2x4096xf32, #tpu.memory_space<vmem>>, vector<1x256xf32>
    tpu.vector_store %arg7[%c0_7, %c0_8], %16 {strides = array<i32>} : memref<2x4096xf32, #tpu.memory_space<vmem>>, vector<1x256xf32>,
    %18 = vector.extract_strided_slice %15 {offsets = [1, 0], sizes = [1, 256], strides = [1, 1]} : vector<16x256xf32> to vector<1x256xf32>
    %c0_9 = arith.constant 0 : index
    %c256 = arith.constant 256 : index
    %19 = vector.load %arg7[%c0_9, %c256] : memref<2x4096xf32, #tpu.memory_space<vmem>>, vector<1x256xf32>
    tpu.vector_store %arg7[%c0_9, %c256], %18 {strides = array<i32>} : memref<2x4096xf32, #tpu.memory_space<vmem>>, vector<1x256xf32>,
    %20 = vector.extract_strided_slice %15 {offsets = [2, 0], sizes = [1, 256], strides = [1, 1]} : vector<16x256xf32> to vector<1x256xf32>
    %c0_10 = arith.constant 0 : index
    %c512 = arith.constant 512 : index
    %21 = vector.load %arg7[%c0_10, %c512] : memref<2x4096xf32, #tpu.memory_space<vmem>>, vector<1x256xf32>
    tpu.vector_store %arg7[%c0_10, %c512], %20 {strides = array<i32>} : memref<2x4096xf32, #tpu.memory_space<vmem>>, vector<1x256xf32>,
    %22 = vector.extract_strided_slice %15 {offsets = [3, 0], sizes = [1, 256], strides = [1, 1]} : vector<16x256xf32> to vector<1x256xf32>
    %c0_11 = arith.constant 0 : index
    %c768 = arith.constant 768 : index
    %23 = vector.load %arg7[%c0_11, %c768] : memref<2x4096xf32, #tpu.memory_space<vmem>>, vector<1x256xf32>
    tpu.vector_store %arg7[%c0_11, %c768], %22 {strides = array<i32>} : memref<2x4096xf32, #tpu.memory_space<vmem>>, vector<1x256xf32>,
    %24 = vector.extract_strided_slice %15 {offsets = [4, 0], sizes = [1, 256], strides = [1, 1]} : vector<16x256xf32> to vector<1x256xf32>
    %c0_12 = arith.constant 0 : index
    %c1024 = arith.constant 1024 : index
    %25 = vector.load %arg7[%c0_12, %c1024] : memref<2x4096xf32, #tpu.memory_space<vmem>>, vector<1x256xf32>
    tpu.vector_store %arg7[%c0_12, %c1024], %24 {strides = array<i32>} : memref<2x4096xf32, #tpu.memory_space<vmem>>, vector<1x256xf32>,
    %26 = vector.extract_strided_slice %15 {offsets = [5, 0], sizes = [1, 256], strides = [1, 1]} : vector<16x256xf32> to vector<1x256xf32>
    %c0_13 = arith.constant 0 : index
    %c1280 = arith.constant 1280 : index
    %27 = vector.load %arg7[%c0_13, %c1280] : memref<2x4096xf32, #tpu.memory_space<vmem>>, vector<1x256xf32>
    tpu.vector_store %arg7[%c0_13, %c1280], %26 {strides = array<i32>} : memref<2x4096xf32, #tpu.memory_space<vmem>>, vector<1x256xf32>,
    %28 = vector.extract_strided_slice %15 {offsets = [6, 0], sizes = [1, 256], strides = [1, 1]} : vector<16x256xf32> to vector<1x256xf32>
    %c0_14 = arith.constant 0 : index
    %c1536 = arith.constant 1536 : index
    %29 = vector.load %arg7[%c0_14, %c1536] : memref<2x4096xf32, #tpu.memory_space<vmem>>, vector<1x256xf32>
    tpu.vector_store %arg7[%c0_14, %c1536], %28 {strides = array<i32>} : memref<2x4096xf32, #tpu.memory_space<vmem>>, vector<1x256xf32>,
    %30 = vector.extract_strided_slice %15 {offsets = [7, 0], sizes = [1, 256], strides = [1, 1]} : vector<16x256xf32> to vector<1x256xf32>
    %c0_15 = arith.constant 0 : index
    %c1792 = arith.constant 1792 : index
    %31 = vector.load %arg7[%c0_15, %c1792] : memref<2x4096xf32, #tpu.memory_space<vmem>>, vector<1x256xf32>
    tpu.vector_store %arg7[%c0_15, %c1792], %30 {strides = array<i32>} : memref<2x4096xf32, #tpu.memory_space<vmem>>, vector<1x256xf32>,
    %32 = vector.extract_strided_slice %15 {offsets = [8, 0], sizes = [1, 256], strides = [1, 1]} : vector<16x256xf32> to vector<1x256xf32>
    %c0_16 = arith.constant 0 : index
    %c2048 = arith.constant 2048 : index
    %33 = vector.load %arg7[%c0_16, %c2048] : memref<2x4096xf32, #tpu.memory_space<vmem>>, vector<1x256xf32>
    tpu.vector_store %arg7[%c0_16, %c2048], %32 {strides = array<i32>} : memref<2x4096xf32, #tpu.memory_space<vmem>>, vector<1x256xf32>,
    %34 = vector.extract_strided_slice %15 {offsets = [9, 0], sizes = [1, 256], strides = [1, 1]} : vector<16x256xf32> to vector<1x256xf32>
    %c0_17 = arith.constant 0 : index
    %c2304 = arith.constant 2304 : index
    %35 = vector.load %arg7[%c0_17, %c2304] : memref<2x4096xf32, #tpu.memory_space<vmem>>, vector<1x256xf32>
    tpu.vector_store %arg7[%c0_17, %c2304], %34 {strides = array<i32>} : memref<2x4096xf32, #tpu.memory_space<vmem>>, vector<1x256xf32>,
    %36 = vector.extract_strided_slice %15 {offsets = [10, 0], sizes = [1, 256], strides = [1, 1]} : vector<16x256xf32> to vector<1x256xf32>
    %c0_18 = arith.constant 0 : index
    %c2560 = arith.constant 2560 : index
    %37 = vector.load %arg7[%c0_18, %c2560] : memref<2x4096xf32, #tpu.memory_space<vmem>>, vector<1x256xf32>
    tpu.vector_store %arg7[%c0_18, %c2560], %36 {strides = array<i32>} : memref<2x4096xf32, #tpu.memory_space<vmem>>, vector<1x256xf32>,
    %38 = vector.extract_strided_slice %15 {offsets = [11, 0], sizes = [1, 256], strides = [1, 1]} : vector<16x256xf32> to vector<1x256xf32>
    %c0_19 = arith.constant 0 : index
    %c2816 = arith.constant 2816 : index
    %39 = vector.load %arg7[%c0_19, %c2816] : memref<2x4096xf32, #tpu.memory_space<vmem>>, vector<1x256xf32>
    tpu.vector_store %arg7[%c0_19, %c2816], %38 {strides = array<i32>} : memref<2x4096xf32, #tpu.memory_space<vmem>>, vector<1x256xf32>,
    %40 = vector.extract_strided_slice %15 {offsets = [12, 0], sizes = [1, 256], strides = [1, 1]} : vector<16x256xf32> to vector<1x256xf32>
    %c0_20 = arith.constant 0 : index
    %c3072 = arith.constant 3072 : index
    %41 = vector.load %arg7[%c0_20, %c3072] : memref<2x4096xf32, #tpu.memory_space<vmem>>, vector<1x256xf32>
    tpu.vector_store %arg7[%c0_20, %c3072], %40 {strides = array<i32>} : memref<2x4096xf32, #tpu.memory_space<vmem>>, vector<1x256xf32>,
    %42 = vector.extract_strided_slice %15 {offsets = [13, 0], sizes = [1, 256], strides = [1, 1]} : vector<16x256xf32> to vector<1x256xf32>
    %c0_21 = arith.constant 0 : index
    %c3328 = arith.constant 3328 : index
    %43 = vector.load %arg7[%c0_21, %c3328] : memref<2x4096xf32, #tpu.memory_space<vmem>>, vector<1x256xf32>
    tpu.vector_store %arg7[%c0_21, %c3328], %42 {strides = array<i32>} : memref<2x4096xf32, #tpu.memory_space<vmem>>, vector<1x256xf32>,
    %44 = vector.extract_strided_slice %15 {offsets = [14, 0], sizes = [1, 256], strides = [1, 1]} : vector<16x256xf32> to vector<1x256xf32>
    %c0_22 = arith.constant 0 : index
    %c3584 = arith.constant 3584 : index
    %45 = vector.load %arg7[%c0_22, %c3584] : memref<2x4096xf32, #tpu.memory_space<vmem>>, vector<1x256xf32>
    tpu.vector_store %arg7[%c0_22, %c3584], %44 {strides = array<i32>} : memref<2x4096xf32, #tpu.memory_space<vmem>>, vector<1x256xf32>,
    %46 = vector.extract_strided_slice %15 {offsets = [15, 0], sizes = [1, 256], strides = [1, 1]} : vector<16x256xf32> to vector<1x256xf32>
    %c0_23 = arith.constant 0 : index
    %c3840 = arith.constant 3840 : index
    %47 = vector.load %arg7[%c0_23, %c3840] : memref<2x4096xf32, #tpu.memory_space<vmem>>, vector<1x256xf32>
    tpu.vector_store %arg7[%c0_23, %c3840], %46 {strides = array<i32>} : memref<2x4096xf32, #tpu.memory_space<vmem>>, vector<1x256xf32>,
    %c1 = arith.constant 1 : index
    %c0_24 = arith.constant 0 : index
    %c0_25 = arith.constant 0 : index
    %48 = vector.load %arg1[%c1, %c0_24, %c0_25] : memref<2x32x1024xf32, #tpu.memory_space<vmem>>, vector<1x32x1024xf32>
    %49 = vector.shape_cast %48 : vector<1x32x1024xf32> to vector<32x1024xf32>
    %cst_26 = arith.constant dense<0.000000e+00> : vector<16x1024xf32>
    %50 = tpu.matmul %0, %49, %cst_26 {dimension_numbers = #tpu.dot_dimension_numbers<[1], [0], [0], [1], [0, 0, 1, 1], [], []>} : vector<16x32xf32>, vector<32x1024xf32>, vector<16x1024xf32> -> vector<16x1024xf32>
    %51 = vector.broadcast %1 : vector<16x1xf32> to vector<16x1024xf32>
    %52 = arith.addf %50, %51 : vector<16x1024xf32>
    %cst_27 = arith.constant 0.000000e+00 : f32
    %53 = vector.broadcast %cst_27 : f32 to vector<16x1024xf32>
    %54 = arith.maximumf %52, %53 : vector<16x1024xf32>
    %55 = vector.extract_strided_slice %54 {offsets = [0, 0], sizes = [16, 256], strides = [1, 1]} : vector<16x1024xf32> to vector<16x256xf32>
    %56 = vector.extract_strided_slice %54 {offsets = [0, 256], sizes = [16, 256], strides = [1, 1]} : vector<16x1024xf32> to vector<16x256xf32>
    %57 = arith.maximumf %55, %56 : vector<16x256xf32>
    %58 = vector.extract_strided_slice %54 {offsets = [0, 512], sizes = [16, 256], strides = [1, 1]} : vector<16x1024xf32> to vector<16x256xf32>
    %59 = vector.extract_strided_slice %54 {offsets = [0, 768], sizes = [16, 256], strides = [1, 1]} : vector<16x1024xf32> to vector<16x256xf32>
    %60 = arith.maximumf %58, %59 : vector<16x256xf32>
    %61 = arith.maximumf %57, %60 : vector<16x256xf32>
    %62 = vector.extract_strided_slice %61 {offsets = [0, 0], sizes = [1, 256], strides = [1, 1]} : vector<16x256xf32> to vector<1x256xf32>
    %c1_28 = arith.constant 1 : index
    %c0_29 = arith.constant 0 : index
    %63 = vector.load %arg7[%c1_28, %c0_29] : memref<2x4096xf32, #tpu.memory_space<vmem>>, vector<1x256xf32>
    tpu.vector_store %arg7[%c1_28, %c0_29], %62 {strides = array<i32>} : memref<2x4096xf32, #tpu.memory_space<vmem>>, vector<1x256xf32>,
    %64 = vector.extract_strided_slice %61 {offsets = [1, 0], sizes = [1, 256], strides = [1, 1]} : vector<16x256xf32> to vector<1x256xf32>
    %c1_30 = arith.constant 1 : index
    %c256_31 = arith.constant 256 : index
    %65 = vector.load %arg7[%c1_30, %c256_31] : memref<2x4096xf32, #tpu.memory_space<vmem>>, vector<1x256xf32>
    tpu.vector_store %arg7[%c1_30, %c256_31], %64 {strides = array<i32>} : memref<2x4096xf32, #tpu.memory_space<vmem>>, vector<1x256xf32>,
    %66 = vector.extract_strided_slice %61 {offsets = [2, 0], sizes = [1, 256], strides = [1, 1]} : vector<16x256xf32> to vector<1x256xf32>
    %c1_32 = arith.constant 1 : index
    %c512_33 = arith.constant 512 : index
    %67 = vector.load %arg7[%c1_32, %c512_33] : memref<2x4096xf32, #tpu.memory_space<vmem>>, vector<1x256xf32>
    tpu.vector_store %arg7[%c1_32, %c512_33], %66 {strides = array<i32>} : memref<2x4096xf32, #tpu.memory_space<vmem>>, vector<1x256xf32>,
    %68 = vector.extract_strided_slice %61 {offsets = [3, 0], sizes = [1, 256], strides = [1, 1]} : vector<16x256xf32> to vector<1x256xf32>
    %c1_34 = arith.constant 1 : index
    %c768_35 = arith.constant 768 : index
    %69 = vector.load %arg7[%c1_34, %c768_35] : memref<2x4096xf32, #tpu.memory_space<vmem>>, vector<1x256xf32>
    tpu.vector_store %arg7[%c1_34, %c768_35], %68 {strides = array<i32>} : memref<2x4096xf32, #tpu.memory_space<vmem>>, vector<1x256xf32>,
    %70 = vector.extract_strided_slice %61 {offsets = [4, 0], sizes = [1, 256], strides = [1, 1]} : vector<16x256xf32> to vector<1x256xf32>
    %c1_36 = arith.constant 1 : index
    %c1024_37 = arith.constant 1024 : index
    %71 = vector.load %arg7[%c1_36, %c1024_37] : memref<2x4096xf32, #tpu.memory_space<vmem>>, vector<1x256xf32>
    tpu.vector_store %arg7[%c1_36, %c1024_37], %70 {strides = array<i32>} : memref<2x4096xf32, #tpu.memory_space<vmem>>, vector<1x256xf32>,
    %72 = vector.extract_strided_slice %61 {offsets = [5, 0], sizes = [1, 256], strides = [1, 1]} : vector<16x256xf32> to vector<1x256xf32>
    %c1_38 = arith.constant 1 : index
    %c1280_39 = arith.constant 1280 : index
    %73 = vector.load %arg7[%c1_38, %c1280_39] : memref<2x4096xf32, #tpu.memory_space<vmem>>, vector<1x256xf32>
    tpu.vector_store %arg7[%c1_38, %c1280_39], %72 {strides = array<i32>} : memref<2x4096xf32, #tpu.memory_space<vmem>>, vector<1x256xf32>,
    %74 = vector.extract_strided_slice %61 {offsets = [6, 0], sizes = [1, 256], strides = [1, 1]} : vector<16x256xf32> to vector<1x256xf32>
    %c1_40 = arith.constant 1 : index
    %c1536_41 = arith.constant 1536 : index
    %75 = vector.load %arg7[%c1_40, %c1536_41] : memref<2x4096xf32, #tpu.memory_space<vmem>>, vector<1x256xf32>
    tpu.vector_store %arg7[%c1_40, %c1536_41], %74 {strides = array<i32>} : memref<2x4096xf32, #tpu.memory_space<vmem>>, vector<1x256xf32>,
    %76 = vector.extract_strided_slice %61 {offsets = [7, 0], sizes = [1, 256], strides = [1, 1]} : vector<16x256xf32> to vector<1x256xf32>
    %c1_42 = arith.constant 1 : index
    %c1792_43 = arith.constant 1792 : index
    %77 = vector.load %arg7[%c1_42, %c1792_43] : memref<2x4096xf32, #tpu.memory_space<vmem>>, vector<1x256xf32>
    tpu.vector_store %arg7[%c1_42, %c1792_43], %76 {strides = array<i32>} : memref<2x4096xf32, #tpu.memory_space<vmem>>, vector<1x256xf32>,
    %78 = vector.extract_strided_slice %61 {offsets = [8, 0], sizes = [1, 256], strides = [1, 1]} : vector<16x256xf32> to vector<1x256xf32>
    %c1_44 = arith.constant 1 : index
    %c2048_45 = arith.constant 2048 : index
    %79 = vector.load %arg7[%c1_44, %c2048_45] : memref<2x4096xf32, #tpu.memory_space<vmem>>, vector<1x256xf32>
    tpu.vector_store %arg7[%c1_44, %c2048_45], %78 {strides = array<i32>} : memref<2x4096xf32, #tpu.memory_space<vmem>>, vector<1x256xf32>,
    %80 = vector.extract_strided_slice %61 {offsets = [9, 0], sizes = [1, 256], strides = [1, 1]} : vector<16x256xf32> to vector<1x256xf32>
    %c1_46 = arith.constant 1 : index
    %c2304_47 = arith.constant 2304 : index
    %81 = vector.load %arg7[%c1_46, %c2304_47] : memref<2x4096xf32, #tpu.memory_space<vmem>>, vector<1x256xf32>
    tpu.vector_store %arg7[%c1_46, %c2304_47], %80 {strides = array<i32>} : memref<2x4096xf32, #tpu.memory_space<vmem>>, vector<1x256xf32>,
    %82 = vector.extract_strided_slice %61 {offsets = [10, 0], sizes = [1, 256], strides = [1, 1]} : vector<16x256xf32> to vector<1x256xf32>
    %c1_48 = arith.constant 1 : index
    %c2560_49 = arith.constant 2560 : index
    %83 = vector.load %arg7[%c1_48, %c2560_49] : memref<2x4096xf32, #tpu.memory_space<vmem>>, vector<1x256xf32>
    tpu.vector_store %arg7[%c1_48, %c2560_49], %82 {strides = array<i32>} : memref<2x4096xf32, #tpu.memory_space<vmem>>, vector<1x256xf32>,
    %84 = vector.extract_strided_slice %61 {offsets = [11, 0], sizes = [1, 256], strides = [1, 1]} : vector<16x256xf32> to vector<1x256xf32>
    %c1_50 = arith.constant 1 : index
    %c2816_51 = arith.constant 2816 : index
    %85 = vector.load %arg7[%c1_50, %c2816_51] : memref<2x4096xf32, #tpu.memory_space<vmem>>, vector<1x256xf32>
    tpu.vector_store %arg7[%c1_50, %c2816_51], %84 {strides = array<i32>} : memref<2x4096xf32, #tpu.memory_space<vmem>>, vector<1x256xf32>,
    %86 = vector.extract_strided_slice %61 {offsets = [12, 0], sizes = [1, 256], strides = [1, 1]} : vector<16x256xf32> to vector<1x256xf32>
    %c1_52 = arith.constant 1 : index
    %c3072_53 = arith.constant 3072 : index
    %87 = vector.load %arg7[%c1_52, %c3072_53] : memref<2x4096xf32, #tpu.memory_space<vmem>>, vector<1x256xf32>
    tpu.vector_store %arg7[%c1_52, %c3072_53], %86 {strides = array<i32>} : memref<2x4096xf32, #tpu.memory_space<vmem>>, vector<1x256xf32>,
    %88 = vector.extract_strided_slice %61 {offsets = [13, 0], sizes = [1, 256], strides = [1, 1]} : vector<16x256xf32> to vector<1x256xf32>
    %c1_54 = arith.constant 1 : index
    %c3328_55 = arith.constant 3328 : index
    %89 = vector.load %arg7[%c1_54, %c3328_55] : memref<2x4096xf32, #tpu.memory_space<vmem>>, vector<1x256xf32>
    tpu.vector_store %arg7[%c1_54, %c3328_55], %88 {strides = array<i32>} : memref<2x4096xf32, #tpu.memory_space<vmem>>, vector<1x256xf32>,
    %90 = vector.extract_strided_slice %61 {offsets = [14, 0], sizes = [1, 256], strides = [1, 1]} : vector<16x256xf32> to vector<1x256xf32>
    %c1_56 = arith.constant 1 : index
    %c3584_57 = arith.constant 3584 : index
    %91 = vector.load %arg7[%c1_56, %c3584_57] : memref<2x4096xf32, #tpu.memory_space<vmem>>, vector<1x256xf32>
    tpu.vector_store %arg7[%c1_56, %c3584_57], %90 {strides = array<i32>} : memref<2x4096xf32, #tpu.memory_space<vmem>>, vector<1x256xf32>,
    %92 = vector.extract_strided_slice %61 {offsets = [15, 0], sizes = [1, 256], strides = [1, 1]} : vector<16x256xf32> to vector<1x256xf32>
    %c1_58 = arith.constant 1 : index
    %c3840_59 = arith.constant 3840 : index
    %93 = vector.load %arg7[%c1_58, %c3840_59] : memref<2x4096xf32, #tpu.memory_space<vmem>>, vector<1x256xf32>
    tpu.vector_store %arg7[%c1_58, %c3840_59], %92 {strides = array<i32>} : memref<2x4096xf32, #tpu.memory_space<vmem>>, vector<1x256xf32>,
    %c0_60 = arith.constant 0 : index
    %c0_61 = arith.constant 0 : index
    %94 = vector.load %arg7[%c0_60, %c0_61] : memref<2x4096xf32, #tpu.memory_space<vmem>>, vector<2x4096xf32>
    %c0_62 = arith.constant 0 : index
    %c0_63 = arith.constant 0 : index
    %95 = vector.load %arg4[%c0_62, %c0_63] : memref<4096x128xf32, #tpu.memory_space<vmem>>, vector<4096x128xf32>
    %cst_64 = arith.constant dense<0.000000e+00> : vector<2x128xf32>
    %96 = tpu.matmul %94, %95, %cst_64 {dimension_numbers = #tpu.dot_dimension_numbers<[1], [0], [0], [1], [0, 0, 1, 1], [], []>} : vector<2x4096xf32>, vector<4096x128xf32>, vector<2x128xf32> -> vector<2x128xf32>
    %c0_65 = arith.constant 0 : index
    %c0_66 = arith.constant 0 : index
    %97 = vector.load %arg5[%c0_65, %c0_66] : memref<1x128xf32, #tpu.memory_space<vmem>>, vector<1x128xf32>
    %98 = vector.broadcast %97 : vector<1x128xf32> to vector<2x128xf32>
    %99 = arith.addf %96, %98 : vector<2x128xf32>
    %c0_67 = arith.constant 0 : index
    %c0_68 = arith.constant 0 : index
    %100 = vector.load %arg6[%c0_67, %c0_68] : memref<2x128xf32, #tpu.memory_space<vmem>>, vector<2x128xf32>
    tpu.vector_store %arg6[%c0_67, %c0_68], %99 {strides = array<i32>} : memref<2x128xf32, #tpu.memory_space<vmem>>, vector<2x128xf32>,
    return
  }
  func.func @transform_0(%arg0: i32) -> (i32, i32, i32) {
    %c0_i32 = arith.constant 0 : i32
    %c0_i32_0 = arith.constant 0 : i32
    %c0_i32_1 = arith.constant 0 : i32
    return %arg0, %c0_i32, %c0_i32_0 : i32, i32, i32
  }
  func.func @transform_1(%arg0: i32) -> (i32, i32) {
    %c0_i32 = arith.constant 0 : i32
    %c0_i32_0 = arith.constant 0 : i32
    %c0_i32_1 = arith.constant 0 : i32
    return %c0_i32, %c0_i32_0 : i32, i32
  }
  func.func @transform_2(%arg0: i32) -> (i32, i32) {
    %c0_i32 = arith.constant 0 : i32
    %c0_i32_0 = arith.constant 0 : i32
    %c0_i32_1 = arith.constant 0 : i32
    return %c0_i32, %c0_i32_0 : i32, i32
  }
  func.func @transform_3(%arg0: i32) -> (i32, i32) {
    %c0_i32 = arith.constant 0 : i32
    %c0_i32_0 = arith.constant 0 : i32
    %c0_i32_1 = arith.constant 0 : i32
    return %c0_i32, %c0_i32_0 : i32, i32
  }
  func.func @transform_4(%arg0: i32) -> (i32, i32) {
    %c0_i32 = arith.constant 0 : i32
    %c0_i32_0 = arith.constant 0 : i32
    %c0_i32_1 = arith.constant 0 : i32
    return %c0_i32, %c0_i32_0 : i32, i32
  }
  func.func @transform_5(%arg0: i32) -> (i32, i32) {
    %c0_i32 = arith.constant 0 : i32
    %c0_i32_0 = arith.constant 0 : i32
    return %arg0, %c0_i32 : i32, i32
  }
}

</mosaic_0001>

<llo_original>
// kernel: tpu_custom_call.1
$region0: #{tpu_custom_call.1}
  #allocation0 [shape = 'u32[]', space=smem, size = 0x4, offset = 0x4, fixed_abs, tag = 'smem constant byte address 0x4 - core index']
  #allocation1 [shape = 'u32[144,128]{1,0:T(1,128)}', space=vmem, size = 0x12000, scoped, tag = 'internal scratch']
  #allocation2 [shape = 'f32[2,4096]{1,0:T(2,128)}', space=vmem, size = 0x8000, scoped, tag = 'scratch operand']
  %s0 = inlined_call_operand.hbm [shape: f32[2,32,1024], index: 0, kind: input, shape index: {}]
  %s1 = inlined_call_operand.hbm [shape: f32[16,32], index: 1, kind: input, shape index: {}]
  %s2 = inlined_call_operand.vmem [shape: f32[16,1], index: 2, kind: input, shape index: {}]
  %s3 = inlined_call_operand.hbm [shape: f32[4096,128], index: 3, kind: input, shape index: {}]
  %s4 = inlined_call_operand.hbm [shape: f32[1,128], index: 4, kind: input, shape index: {}]
  %s5 = inlined_call_operand.hbm [shape: f32[2,128], index: 5, kind: output, shape index: {}]
  %s6 = sld [smem:[#allocation0]]
  $region46: #{tpu_custom_call.1} parent=0
    _
  %s8 = ssub.s32 1, %s6
  %s9 = scalar_select 0, %s8, %s6
  $region1: #{tpu_custom_call.1} parent=0
    #allocation3 [shape = 'u8[262144]{0}', space=vmem, size = 0x40000, scoped, tag = 'input window, operand 0, single buffered']
    #allocation4 [shape = 's32[1]{0}', space=sflag, size = 0x4, scoped, tag = 'scoped memory for tpu_custom_call.1']
    #allocation5 [shape = 's32[1]{0}', space=sflag, size = 0x4, scoped, tag = 'scoped memory for tpu_custom_call.1']
    #allocation6 [shape = 'u8[8192]{0}', space=vmem, size = 0x2000, scoped, tag = 'input window, operand 1, single buffered']
    #allocation7 [shape = 's32[1]{0}', space=sflag, size = 0x4, scoped, tag = 'scoped memory for tpu_custom_call.1']
    #allocation8 [shape = 'u8[2097152]{0}', space=vmem, size = 0x200000, scoped, tag = 'input window, operand 3, single buffered']
    #allocation9 [shape = 'u8[512]{0}', space=vmem, size = 0x400, scoped, tag = 'input window, operand 4, single buffered']
    #allocation10 [shape = 's32[1]{0}', space=sflag, size = 0x4, scoped, tag = 'scoped memory for tpu_custom_call.1']
    #allocation11 [shape = 'u8[1024]{0}', space=vmem, size = 0x400, scoped, tag = 'output window, operand 0, single buffered']
    %10 = vsyncpa [#allocation4], 0
    %11 = vsyncpa [#allocation7], 0
    %12 = vsyncpa [#allocation10], 0
    %13 = vsyncpa [#allocation5], 0
    // Predicated region
    $region2: #{tpu_custom_call.1} parent=1 // pred_check
      _
    $region3: #{tpu_custom_call.1} parent=1 // pred_check_branch
      %15 = sbr.rel (0) target = $region5
    $region4: #{tpu_custom_call.1} parent=1 // pred_region
      %s17 = ssub.s32 8192, 8192
      %18 = vsyncadd [#allocation4], %s17
      %s19 = sshll.u32 [#allocation3], 4
      %s20 = int_to_ptr.vmem [resolvable:$true] %s19
      %25 = dma.hbm_to_vmem [thread:$0]  %s0, 8192, %s20, [#allocation4], 1024, 1024, 64
    $region5: #{tpu_custom_call.1} parent=1 // pred_fallthru
      _
    // Predicated region
    $region6: #{tpu_custom_call.1} parent=1 // pred_check
      _
    $region7: #{tpu_custom_call.1} parent=1 // pred_check_branch
      %27 = sbr.rel (0) target = $region9
    $region8: #{tpu_custom_call.1} parent=1 // pred_region
      %s29 = ssub.s32 256, 256
      %30 = vsyncadd [#allocation7], %s29
      %s31 = sshll.u32 [#allocation6], 4
      %s32 = int_to_ptr.vmem [resolvable:$true] %s31
      %37 = dma.hbm_to_vmem [thread:$0]  %s1, 256, %s32, [#allocation7], 128, 128, 8
    $region9: #{tpu_custom_call.1} parent=1 // pred_fallthru
      _
    // Predicated region
    $region10: #{tpu_custom_call.1} parent=1 // pred_check
      _
    $region11: #{tpu_custom_call.1} parent=1 // pred_check_branch
      %39 = sbr.rel (0) target = $region13
    $region12: #{tpu_custom_call.1} parent=1 // pred_region
      _
    $region13: #{tpu_custom_call.1} parent=1 // pred_fallthru
      _
    // Predicated region
    $region14: #{tpu_custom_call.1} parent=1 // pred_check
      _
    $region15: #{tpu_custom_call.1} parent=1 // pred_check_branch
      %41 = sbr.rel (0) target = $region17
    $region16: #{tpu_custom_call.1} parent=1 // pred_region
      %s43 = ssub.s32 65536, 65536
      %44 = vsyncadd [#allocation7], %s43
      %s45 = sshll.u32 [#allocation8], 4
      %s46 = int_to_ptr.vmem [resolvable:$true] %s45
      %51 = dma.hbm_to_vmem [thread:$0]  %s3, 65536, %s46, [#allocation7], 128, 128, 8
    $region17: #{tpu_custom_call.1} parent=1 // pred_fallthru
      _
    // Predicated region
    $region18: #{tpu_custom_call.1} parent=1 // pred_check
      _
    $region19: #{tpu_custom_call.1} parent=1 // pred_check_branch
      %53 = sbr.rel (0) target = $region21
    $region20: #{tpu_custom_call.1} parent=1 // pred_region
      %s55 = ssub.s32 16, 16
      %56 = vsyncadd [#allocation10], %s55
      %s58 = sshll.u32 [#allocation9], 4
      %s59 = int_to_ptr.vmem [resolvable:$true] %s58
      %61 = dma.hbm_to_vmem [thread:$0]  %s4, 16, %s59, [#allocation10]
    $region21: #{tpu_custom_call.1} parent=1 // pred_fallthru
      _
    // Predicated region
    $region22: #{tpu_custom_call.1} parent=1 // pred_check
      _
    $region23: #{tpu_custom_call.1} parent=1 // pred_check_branch
      %63 = sbr.rel (0) target = $region25
    $region24: #{tpu_custom_call.1} parent=1 // pred_region
      %64 = dma.done [#allocation4], 8192
    $region25: #{tpu_custom_call.1} parent=1 // pred_fallthru
      _
    // Predicated region
    $region26: #{tpu_custom_call.1} parent=1 // pred_check
      _
    $region27: #{tpu_custom_call.1} parent=1 // pred_check_branch
      %66 = sbr.rel (0) target = $region29
    $region28: #{tpu_custom_call.1} parent=1 // pred_region
      %67 = dma.done [#allocation7], 256
    $region29: #{tpu_custom_call.1} parent=1 // pred_fallthru
      _
    // Predicated region
    $region30: #{tpu_custom_call.1} parent=1 // pred_check
      _
    $region31: #{tpu_custom_call.1} parent=1 // pred_check_branch
      %69 = sbr.rel (0) target = $region33
    $region32: #{tpu_custom_call.1} parent=1 // pred_region
      %70 = dma.done [#allocation7], 65536
    $region33: #{tpu_custom_call.1} parent=1 // pred_fallthru
      _
    // Predicated region
    $region34: #{tpu_custom_call.1} parent=1 // pred_check
      _
    $region35: #{tpu_custom_call.1} parent=1 // pred_check_branch
      %72 = sbr.rel (0) target = $region37
    $region36: #{tpu_custom_call.1} parent=1 // pred_region
      %73 = dma.done [#allocation10], 16
    $region37: #{tpu_custom_call.1} parent=1 // pred_fallthru
      _
    %v74 = vld [vmem:[#allocation6] sm:$0xff]
    %v75 = vld [vmem:[#allocation6 + $0x8] sm:$0xff]
    %v76 = vld [vmem:[%s2] sm:$0xff]
    %v77 = vld [vmem:[%s2 + $0x8] sm:$0xff]
    %v78 = vld [vmem:[#allocation3] sm:$0xff]
    %v79 = vld [vmem:[#allocation3 + $0x8] sm:$0xff]
    %v80 = vld [vmem:[#allocation3 + $0x10] sm:$0xff]
    %v81 = vld [vmem:[#allocation3 + $0x18] sm:$0xff]
    %v82 = vld [vmem:[#allocation3 + $0x20] sm:$0xff]
    %v83 = vld [vmem:[#allocation3 + $0x28] sm:$0xff]
    %v84 = vld [vmem:[#allocation3 + $0x30] sm:$0xff]
    %v85 = vld [vmem:[#allocation3 + $0x38] sm:$0xff]
    %v86 = vld [vmem:[#allocation3 + $0x40] sm:$0xff]
    %v87 = vld [vmem:[#allocation3 + $0x48] sm:$0xff]
    %v88 = vld [vmem:[#allocation3 + $0x50] sm:$0xff]
    %v89 = vld [vmem:[#allocation3 + $0x58] sm:$0xff]
    %v90 = vld [vmem:[#allocation3 + $0x60] sm:$0xff]
    %v91 = vld [vmem:[#allocation3 + $0x68] sm:$0xff]
    %v92 = vld [vmem:[#allocation3 + $0x70] sm:$0xff]
    %v93 = vld [vmem:[#allocation3 + $0x78] sm:$0xff]
    %v94 = vld [vmem:[#allocation3 + $0x80] sm:$0xff]
    %v95 = vld [vmem:[#allocation3 + $0x88] sm:$0xff]
    %v96 = vld [vmem:[#allocation3 + $0x90] sm:$0xff]
    %v97 = vld [vmem:[#allocation3 + $0x98] sm:$0xff]
    %v98 = vld [vmem:[#allocation3 + $0xa0] sm:$0xff]
    %v99 = vld [vmem:[#allocation3 + $0xa8] sm:$0xff]
    %v100 = vld [vmem:[#allocation3 + $0xb0] sm:$0xff]
    %v101 = vld [vmem:[#allocation3 + $0xb8] sm:$0xff]
    %v102 = vld [vmem:[#allocation3 + $0xc0] sm:$0xff]
    %v103 = vld [vmem:[#allocation3 + $0xc8] sm:$0xff]
    %v104 = vld [vmem:[#allocation3 + $0xd0] sm:$0xff]
    %v105 = vld [vmem:[#allocation3 + $0xd8] sm:$0xff]
    %v106 = vld [vmem:[#allocation3 + $0xe0] sm:$0xff]
    %v107 = vld [vmem:[#allocation3 + $0xe8] sm:$0xff]
    %v108 = vld [vmem:[#allocation3 + $0xf0] sm:$0xff]
    %v109 = vld [vmem:[#allocation3 + $0xf8] sm:$0xff]
    %111 = vset.pattern.permute.xlu0 0
    %112 = vperm.xlu0 %111, %v76
    %v113 = vpop.permute.xlu0 %112
    %116 = vset.pattern.permute.xlu0 0
    %117 = vperm.xlu0 %116, %v77
    %v118 = vpop.permute.xlu0 %117
    %vm120 = vcmask 261120
    %v122 = vsel %vm120, %v74, 0
    %v125 = vsel %vm120, %v75, 0
    %127 = vmatprep.subr.mxu0 %v79
    %128 = vmatpush1.msra.mxu0 %v78
    %129 = vmatprep.subr.mxu0 %v87
    %130 = vmatpush1.msra.mxu0 %v86
    %131 = vmatprep.subr.mxu0 %v95
    %132 = vmatpush1.msra.mxu0 %v94
    %133 = vmatprep.subr.mxu0 %v103
    %134 = vmatpush1.msra.mxu0 %v102
    %135 = vmatprep.subr.mxu0 0.0
    %136 = vmatpush1.msra.mxu0 0.0
    %137 = vmatprep.subr.mxu0 0.0
    %138 = vmatpush1.msra.mxu0 0.0
    %139 = vmatprep.subr.mxu0 0.0
    %140 = vmatpush1.msra.mxu0 0.0
    %141 = vmatprep.subr.mxu0 0.0
    %142 = vmatpush1.msra.mxu0 0.0
    %143 = vmatprep.subr.mxu0 0.0
    %144 = vmatpush1.msra.mxu0 0.0
    %145 = vmatprep.subr.mxu0 0.0
    %146 = vmatpush1.msra.mxu0 0.0
    %147 = vmatprep.subr.mxu0 0.0
    %148 = vmatpush1.msra.mxu0 0.0
    %149 = vmatprep.subr.mxu0 0.0
    %150 = vmatpush1.msra.mxu0 0.0
    %151 = vmatprep.subr.mxu0 0.0
    %152 = vmatpush1.msra.mxu0 0.0
    %153 = vmatprep.subr.mxu0 0.0
    %154 = vmatpush1.msra.mxu0 0.0
    %155 = vmatprep.subr.mxu0 0.0
    %156 = vmatpush1.msra.mxu0 0.0
    %157 = vmatprep.subr.mxu0 0.0
    %158 = vmatpush1.msra.mxu0 0.0
    %159 = vmatprep.subr.mxu0 0.0
    %160 = vmatpush1.msra.mxu0 0.0
    %161 = vmatprep.subr.mxu0 0.0
    %162 = vmatpush1.msra.mxu0 0.0
    %163 = vmatprep.subr.mxu0 0.0
    %164 = vmatpush1.msra.mxu0 0.0
    %165 = vmatprep.subr.mxu0 0.0
    %166 = vmatpush1.msra.mxu0 0.0
    %167 = vmatprep.subr.mxu0 0.0
    %168 = vmatpush1.msra.mxu0 0.0
    %169 = vmatprep.subr.mxu0 0.0
    %170 = vmatpush1.msra.mxu0 0.0
    %171 = vmatprep.subr.mxu0 0.0
    %172 = vmatpush1.msra.mxu0 0.0
    %173 = vmatprep.subr.mxu0 0.0
    %174 = vmatpush1.msra.mxu0 0.0
    %175 = vmatprep.subr.mxu0 0.0
    %176 = vmatpush1.msra.mxu0 0.0
    %177 = vmatprep.subr.mxu0 0.0
    %178 = vmatpush1.msra.mxu0 0.0
    %179 = vmatprep.subr.mxu0 0.0
    %180 = vmatpush1.msra.mxu0 0.0
    %181 = vmatprep.subr.mxu0 0.0
    %182 = vmatpush1.msra.mxu0 0.0
    %183 = vmatprep.subr.mxu0 0.0
    %184 = vmatpush1.msra.mxu0 0.0
    %185 = vmatprep.subr.mxu0 0.0
    %186 = vmatpush1.msra.mxu0 0.0
    %187 = vmatprep.subr.mxu0 0.0
    %188 = vmatpush1.msra.mxu0 0.0
    %189 = vmatprep.subr.mxu0 0.0
    %190 = vmatpush1.msra.mxu0 0.0
    %191 = vmatprep.mubr.f32.mxu0 0.0
    %192 = vmatmul.mubr.f32.gmra.mrb[0].mxu0 %v122
    %v193 = vpop.f32.mrb[0].mxu0
    %v194 = vadd.f32 %v113, %v193
    %v195 = vpop.f32.mrb[0].mxu0
    %v196 = vadd.f32 %v113, %v195
    %197 = vmatprep.mubr.f32.mxu0 0.0
    %198 = vmatmul.mubr.f32.gmra.mrb[0].mxu0 %v125
    %v199 = vpop.f32.mrb[0].mxu0
    %v200 = vadd.f32 %v118, %v199
    %v201 = vpop.f32.mrb[0].mxu0
    %v202 = vadd.f32 %v118, %v201
    %203 = vdwg.mxu0
    %204 = vmatprep.subr.mxu0 %v81
    %205 = vmatpush1.msra.mxu0 %v80
    %206 = vmatprep.subr.mxu0 %v89
    %207 = vmatpush1.msra.mxu0 %v88
    %208 = vmatprep.subr.mxu0 %v97
    %209 = vmatpush1.msra.mxu0 %v96
    %210 = vmatprep.subr.mxu0 %v105
    %211 = vmatpush1.msra.mxu0 %v104
    %212 = vmatprep.subr.mxu0 0.0
    %213 = vmatpush1.msra.mxu0 0.0
    %214 = vmatprep.subr.mxu0 0.0
    %215 = vmatpush1.msra.mxu0 0.0
    %216 = vmatprep.subr.mxu0 0.0
    %217 = vmatpush1.msra.mxu0 0.0
    %218 = vmatprep.subr.mxu0 0.0
    %219 = vmatpush1.msra.mxu0 0.0
    %220 = vmatprep.subr.mxu0 0.0
    %221 = vmatpush1.msra.mxu0 0.0
    %222 = vmatprep.subr.mxu0 0.0
    %223 = vmatpush1.msra.mxu0 0.0
    %224 = vmatprep.subr.mxu0 0.0
    %225 = vmatpush1.msra.mxu0 0.0
    %226 = vmatprep.subr.mxu0 0.0
    %227 = vmatpush1.msra.mxu0 0.0
    %228 = vmatprep.subr.mxu0 0.0
    %229 = vmatpush1.msra.mxu0 0.0
    %230 = vmatprep.subr.mxu0 0.0
    %231 = vmatpush1.msra.mxu0 0.0
    %232 = vmatprep.subr.mxu0 0.0
    %233 = vmatpush1.msra.mxu0 0.0
    %234 = vmatprep.subr.mxu0 0.0
    %235 = vmatpush1.msra.mxu0 0.0
    %236 = vmatprep.subr.mxu0 0.0
    %237 = vmatpush1.msra.mxu0 0.0
    %238 = vmatprep.subr.mxu0 0.0
    %239 = vmatpush1.msra.mxu0 0.0
    %240 = vmatprep.subr.mxu0 0.0
    %241 = vmatpush1.msra.mxu0 0.0
    %242 = vmatprep.subr.mxu0 0.0
    %243 = vmatpush1.msra.mxu0 0.0
    %244 = vmatprep.subr.mxu0 0.0
    %245 = vmatpush1.msra.mxu0 0.0
    %246 = vmatprep.subr.mxu0 0.0
    %247 = vmatpush1.msra.mxu0 0.0
    %248 = vmatprep.subr.mxu0 0.0
    %249 = vmatpush1.msra.mxu0 0.0
    %250 = vmatprep.subr.mxu0 0.0
    %251 = vmatpush1.msra.mxu0 0.0
    %252 = vmatprep.subr.mxu0 0.0
    %253 = vmatpush1.msra.mxu0 0.0
    %254 = vmatprep.subr.mxu0 0.0
    %255 = vmatpush1.msra.mxu0 0.0
    %256 = vmatprep.subr.mxu0 0.0
    %257 = vmatpush1.msra.mxu0 0.0
    %258 = vmatprep.subr.mxu0 0.0
    %259 = vmatpush1.msra.mxu0 0.0
    %260 = vmatprep.subr.mxu0 0.0
    %261 = vmatpush1.msra.mxu0 0.0
    %262 = vmatprep.subr.mxu0 0.0
    %263 = vmatpush1.msra.mxu0 0.0
    %264 = vmatprep.subr.mxu0 0.0
    %265 = vmatpush1.msra.mxu0 0.0
    %266 = vmatprep.subr.mxu0 0.0
    %267 = vmatpush1.msra.mxu0 0.0
    %268 = vmatprep.mubr.f32.mxu0 0.0
    %269 = vmatmul.mubr.f32.gmra.mrb[0].mxu0 %v122
    %v270 = vpop.f32.mrb[0].mxu0
    %v271 = vadd.f32 %v113, %v270
    %v272 = vpop.f32.mrb[0].mxu0
    %v273 = vadd.f32 %v113, %v272
    %274 = vmatprep.mubr.f32.mxu0 0.0
    %275 = vmatmul.mubr.f32.gmra.mrb[0].mxu0 %v125
    %v276 = vpop.f32.mrb[0].mxu0
    %v277 = vadd.f32 %v118, %v276
    %v278 = vpop.f32.mrb[0].mxu0
    %v279 = vadd.f32 %v118, %v278
    %280 = vdwg.mxu0
    %281 = vmatprep.subr.mxu0 %v83
    %282 = vmatpush1.msra.mxu0 %v82
    %283 = vmatprep.subr.mxu0 %v91
    %284 = vmatpush1.msra.mxu0 %v90
    %285 = vmatprep.subr.mxu0 %v99
    %286 = vmatpush1.msra.mxu0 %v98
    %287 = vmatprep.subr.mxu0 %v107
    %288 = vmatpush1.msra.mxu0 %v106
    %289 = vmatprep.subr.mxu0 0.0
    %290 = vmatpush1.msra.mxu0 0.0
    %291 = vmatprep.subr.mxu0 0.0
    %292 = vmatpush1.msra.mxu0 0.0
    %293 = vmatprep.subr.mxu0 0.0
    %294 = vmatpush1.msra.mxu0 0.0
    %295 = vmatprep.subr.mxu0 0.0
    %296 = vmatpush1.msra.mxu0 0.0
    %297 = vmatprep.subr.mxu0 0.0
    %298 = vmatpush1.msra.mxu0 0.0
    %299 = vmatprep.subr.mxu0 0.0
    %300 = vmatpush1.msra.mxu0 0.0
    %301 = vmatprep.subr.mxu0 0.0
    %302 = vmatpush1.msra.mxu0 0.0
    %303 = vmatprep.subr.mxu0 0.0
    %304 = vmatpush1.msra.mxu0 0.0
    %305 = vmatprep.subr.mxu0 0.0
    %306 = vmatpush1.msra.mxu0 0.0
    %307 = vmatprep.subr.mxu0 0.0
    %308 = vmatpush1.msra.mxu0 0.0
    %309 = vmatprep.subr.mxu0 0.0
    %310 = vmatpush1.msra.mxu0 0.0
    %311 = vmatprep.subr.mxu0 0.0
    %312 = vmatpush1.msra.mxu0 0.0
    %313 = vmatprep.subr.mxu0 0.0
    %314 = vmatpush1.msra.mxu0 0.0
    %315 = vmatprep.subr.mxu0 0.0
    %316 = vmatpush1.msra.mxu0 0.0
    %317 = vmatprep.subr.mxu0 0.0
    %318 = vmatpush1.msra.mxu0 0.0
    %319 = vmatprep.subr.mxu0 0.0
    %320 = vmatpush1.msra.mxu0 0.0
    %321 = vmatprep.subr.mxu0 0.0
    %322 = vmatpush1.msra.mxu0 0.0
    %323 = vmatprep.subr.mxu0 0.0
    %324 = vmatpush1.msra.mxu0 0.0
    %325 = vmatprep.subr.mxu0 0.0
    %326 = vmatpush1.msra.mxu0 0.0
    %327 = vmatprep.subr.mxu0 0.0
    %328 = vmatpush1.msra.mxu0 0.0
    %329 = vmatprep.subr.mxu0 0.0
    %330 = vmatpush1.msra.mxu0 0.0
    %331 = vmatprep.subr.mxu0 0.0
    %332 = vmatpush1.msra.mxu0 0.0
    %333 = vmatprep.subr.mxu0 0.0
    %334 = vmatpush1.msra.mxu0 0.0
    %335 = vmatprep.subr.mxu0 0.0
    %336 = vmatpush1.msra.mxu0 0.0
    %337 = vmatprep.subr.mxu0 0.0
    %338 = vmatpush1.msra.mxu0 0.0
    %339 = vmatprep.subr.mxu0 0.0
    %340 = vmatpush1.msra.mxu0 0.0
    %341 = vmatprep.subr.mxu0 0.0
    %342 = vmatpush1.msra.mxu0 0.0
    %343 = vmatprep.subr.mxu0 0.0
    %344 = vmatpush1.msra.mxu0 0.0
    %345 = vmatprep.mubr.f32.mxu0 0.0
    %346 = vmatmul.mubr.f32.gmra.mrb[0].mxu0 %v122
    %v347 = vpop.f32.mrb[0].mxu0
    %v348 = vadd.f32 %v113, %v347
    %v349 = vpop.f32.mrb[0].mxu0
    %v350 = vadd.f32 %v113, %v349
    %351 = vmatprep.mubr.f32.mxu0 0.0
    %352 = vmatmul.mubr.f32.gmra.mrb[0].mxu0 %v125
    %v353 = vpop.f32.mrb[0].mxu0
    %v354 = vadd.f32 %v118, %v353
    %v355 = vpop.f32.mrb[0].mxu0
    %v356 = vadd.f32 %v118, %v355
    %357 = vdwg.mxu0
    %358 = vmatprep.subr.mxu0 %v85
    %359 = vmatpush1.msra.mxu0 %v84
    %360 = vmatprep.subr.mxu0 %v93
    %361 = vmatpush1.msra.mxu0 %v92
    %362 = vmatprep.subr.mxu0 %v101
    %363 = vmatpush1.msra.mxu0 %v100
    %364 = vmatprep.subr.mxu0 %v109
    %365 = vmatpush1.msra.mxu0 %v108
    %366 = vmatprep.subr.mxu0 0.0
    %367 = vmatpush1.msra.mxu0 0.0
    %368 = vmatprep.subr.mxu0 0.0
    %369 = vmatpush1.msra.mxu0 0.0
    %370 = vmatprep.subr.mxu0 0.0
    %371 = vmatpush1.msra.mxu0 0.0
    %372 = vmatprep.subr.mxu0 0.0
    %373 = vmatpush1.msra.mxu0 0.0
    %374 = vmatprep.subr.mxu0 0.0
    %375 = vmatpush1.msra.mxu0 0.0
    %376 = vmatprep.subr.mxu0 0.0
    %377 = vmatpush1.msra.mxu0 0.0
    %378 = vmatprep.subr.mxu0 0.0
    %379 = vmatpush1.msra.mxu0 0.0
    %380 = vmatprep.subr.mxu0 0.0
    %381 = vmatpush1.msra.mxu0 0.0
    %382 = vmatprep.subr.mxu0 0.0
    %383 = vmatpush1.msra.mxu0 0.0
    %384 = vmatprep.subr.mxu0 0.0
    %385 = vmatpush1.msra.mxu0 0.0
    %386 = vmatprep.subr.mxu0 0.0
    %387 = vmatpush1.msra.mxu0 0.0
    %388 = vmatprep.subr.mxu0 0.0
    %389 = vmatpush1.msra.mxu0 0.0
    %390 = vmatprep.subr.mxu0 0.0
    %391 = vmatpush1.msra.mxu0 0.0
    %392 = vmatprep.subr.mxu0 0.0
    %393 = vmatpush1.msra.mxu0 0.0
    %394 = vmatprep.subr.mxu0 0.0
    %395 = vmatpush1.msra.mxu0 0.0
    %396 = vmatprep.subr.mxu0 0.0
    %397 = vmatpush1.msra.mxu0 0.0
    %398 = vmatprep.subr.mxu0 0.0
    %399 = vmatpush1.msra.mxu0 0.0
    %400 = vmatprep.subr.mxu0 0.0
    %401 = vmatpush1.msra.mxu0 0.0
    %402 = vmatprep.subr.mxu0 0.0
    %403 = vmatpush1.msra.mxu0 0.0
    %404 = vmatprep.subr.mxu0 0.0
    %405 = vmatpush1.msra.mxu0 0.0
    %406 = vmatprep.subr.mxu0 0.0
    %407 = vmatpush1.msra.mxu0 0.0
    %408 = vmatprep.subr.mxu0 0.0
    %409 = vmatpush1.msra.mxu0 0.0
    %410 = vmatprep.subr.mxu0 0.0
    %411 = vmatpush1.msra.mxu0 0.0
    %412 = vmatprep.subr.mxu0 0.0
    %413 = vmatpush1.msra.mxu0 0.0
    %414 = vmatprep.subr.mxu0 0.0
    %415 = vmatpush1.msra.mxu0 0.0
    %416 = vmatprep.subr.mxu0 0.0
    %417 = vmatpush1.msra.mxu0 0.0
    %418 = vmatprep.subr.mxu0 0.0
    %419 = vmatpush1.msra.mxu0 0.0
    %420 = vmatprep.subr.mxu0 0.0
    %421 = vmatpush1.msra.mxu0 0.0
    %422 = vmatprep.mubr.f32.mxu0 0.0
    %423 = vmatmul.mubr.f32.gmra.mrb[0].mxu0 %v122
    %v424 = vpop.f32.mrb[0].mxu0
    %v425 = vadd.f32 %v113, %v424
    %v426 = vpop.f32.mrb[0].mxu0
    %v427 = vadd.f32 %v113, %v426
    %428 = vmatprep.mubr.f32.mxu0 0.0
    %429 = vmatmul.mubr.f32.gmra.mrb[0].mxu0 %v125
    %v430 = vpop.f32.mrb[0].mxu0
    %v431 = vadd.f32 %v118, %v430
    %v432 = vpop.f32.mrb[0].mxu0
    %v433 = vadd.f32 %v118, %v432
    %434 = vdwg.mxu0
    %v435 = vmax.f32 %v194, 0.0
    %v436 = vmax.f32 %v196, 0.0
    %v437 = vmax.f32 %v271, 0.0
    %v438 = vmax.f32 %v273, 0.0
    %v439 = vmax.f32 %v348, 0.0
    %v440 = vmax.f32 %v350, 0.0
    %v441 = vmax.f32 %v425, 0.0
    %v442 = vmax.f32 %v427, 0.0
    %v443 = vmax.f32 %v200, 0.0
    %v444 = vmax.f32 %v202, 0.0
    %v445 = vmax.f32 %v277, 0.0
    %v446 = vmax.f32 %v279, 0.0
    %v447 = vmax.f32 %v354, 0.0
    %v448 = vmax.f32 %v356, 0.0
    %v449 = vmax.f32 %v431, 0.0
    %v450 = vmax.f32 %v433, 0.0
    %v451 = vmax.f32 %v435, %v437
    %v452 = vmax.f32 %v436, %v438
    %v453 = vmax.f32 %v443, %v445
    %v454 = vmax.f32 %v444, %v446
    %v455 = vmax.f32 %v439, %v441
    %v456 = vmax.f32 %v440, %v442
    %v457 = vmax.f32 %v447, %v449
    %v458 = vmax.f32 %v448, %v450
    %v459 = vmax.f32 %v451, %v455
    %v460 = vmax.f32 %v452, %v456
    %v461 = vmax.f32 %v453, %v457
    %v462 = vmax.f32 %v454, %v458
    %v465 = vcombine.low %v459, %v460
    %v467 = vunpack.c.l.s4 1966171168
    %v468 = vunpack.c.0.s8 %v467
    %v469 = vlaneseq
    %v470 = vshrl.u32 %v469, 7
    %v471 = vsub.s32 %v468, %v470
    %v472 = vrot.slane %v465, %v471
    %v474 = vunpack.c.l.s4 1966171168
    %v475 = vunpack.c.0.s8 %v474
    %v476 = vlaneseq
    %v477 = vshrl.u32 %v476, 7
    %v478 = vsub.s32 %v475, %v477
    %v479 = vrot.slane %v472, %v478
    %v481 = vlaneseq
    %vm482 = vcmp.ge.s32.totalorder %v481, 0
    %vm483 = vcmp.lt.s32.totalorder %v481, 256
    %vm484 = vmand %vm482, %vm483
    %485 = vst.msk [vmem:[#allocation2] ss:$2 sm:$0x3] %vm484, %v479
    %v486 = vcombine.high %v472, %v472
    %v488 = vunpack.c.l.s4 1966171168
    %v489 = vunpack.c.0.s8 %v488
    %v490 = vlaneseq
    %v491 = vshrl.u32 %v490, 7
    %v492 = vsub.s32 %v489, %v491
    %v493 = vrot.slane %v486, %v492
    %s495 = scalar_lea.vmem [#allocation2], 4
    %496 = vst.msk [vmem:[%s495] ss:$2 sm:$0x3] %vm484, %v493
    %v497 = vcombine.high %v479, %v479
    %s499 = scalar_lea.vmem [#allocation2], 8
    %500 = vst.msk [vmem:[%s499] ss:$2 sm:$0x3] %vm484, %v497
    %v501 = vcombine.high %v493, %v493
    %s503 = scalar_lea.vmem [#allocation2], 12
    %504 = vst.msk [vmem:[%s503] ss:$2 sm:$0x3] %vm484, %v501
    %v505 = vcombine.high %v459, %v460
    %v507 = vunpack.c.l.s4 1966171168
    %v508 = vunpack.c.0.s8 %v507
    %v509 = vlaneseq
    %v510 = vshrl.u32 %v509, 7
    %v511 = vsub.s32 %v508, %v510
    %v512 = vrot.slane %v505, %v511
    %v514 = vunpack.c.l.s4 1966171168
    %v515 = vunpack.c.0.s8 %v514
    %v516 = vlaneseq
    %v517 = vshrl.u32 %v516, 7
    %v518 = vsub.s32 %v515, %v517
    %v519 = vrot.slane %v512, %v518
    %s521 = scalar_lea.vmem [#allocation2], 16
    %522 = vst.msk [vmem:[%s521] ss:$2 sm:$0x3] %vm484, %v519
    %v523 = vcombine.high %v512, %v512
    %v525 = vunpack.c.l.s4 1966171168
    %v526 = vunpack.c.0.s8 %v525
    %v527 = vlaneseq
    %v528 = vshrl.u32 %v527, 7
    %v529 = vsub.s32 %v526, %v528
    %v530 = vrot.slane %v523, %v529
    %s532 = scalar_lea.vmem [#allocation2], 20
    %533 = vst.msk [vmem:[%s532] ss:$2 sm:$0x3] %vm484, %v530
    %v534 = vcombine.high %v519, %v519
    %s536 = scalar_lea.vmem [#allocation2], 24
    %537 = vst.msk [vmem:[%s536] ss:$2 sm:$0x3] %vm484, %v534
    %v538 = vcombine.high %v530, %v530
    %s540 = scalar_lea.vmem [#allocation2], 28
    %541 = vst.msk [vmem:[%s540] ss:$2 sm:$0x3] %vm484, %v538
    %v544 = vcombine.low %v461, %v462
    %v546 = vunpack.c.l.s4 1966171168
    %v547 = vunpack.c.0.s8 %v546
    %v548 = vlaneseq
    %v549 = vshrl.u32 %v548, 7
    %v550 = vsub.s32 %v547, %v549
    %v551 = vrot.slane %v544, %v550
    %v553 = vunpack.c.l.s4 1966171168
    %v554 = vunpack.c.0.s8 %v553
    %v555 = vlaneseq
    %v556 = vshrl.u32 %v555, 7
    %v557 = vsub.s32 %v554, %v556
    %v558 = vrot.slane %v551, %v557
    %s560 = scalar_lea.vmem [#allocation2], 32
    %561 = vst.msk [vmem:[%s560] ss:$2 sm:$0x3] %vm484, %v558
    %v562 = vcombine.high %v551, %v551
    %v564 = vunpack.c.l.s4 1966171168
    %v565 = vunpack.c.0.s8 %v564
    %v566 = vlaneseq
    %v567 = vshrl.u32 %v566, 7
    %v568 = vsub.s32 %v565, %v567
    %v569 = vrot.slane %v562, %v568
    %s571 = scalar_lea.vmem [#allocation2], 36
    %572 = vst.msk [vmem:[%s571] ss:$2 sm:$0x3] %vm484, %v569
    %v573 = vcombine.high %v558, %v558
    %s575 = scalar_lea.vmem [#allocation2], 40
    %576 = vst.msk [vmem:[%s575] ss:$2 sm:$0x3] %vm484, %v573
    %v577 = vcombine.high %v569, %v569
    %s579 = scalar_lea.vmem [#allocation2], 44
    %580 = vst.msk [vmem:[%s579] ss:$2 sm:$0x3] %vm484, %v577
    %v581 = vcombine.high %v461, %v462
    %v583 = vunpack.c.l.s4 1966171168
    %v584 = vunpack.c.0.s8 %v583
    %v585 = vlaneseq
    %v586 = vshrl.u32 %v585, 7
    %v587 = vsub.s32 %v584, %v586
    %v588 = vrot.slane %v581, %v587
    %v590 = vunpack.c.l.s4 1966171168
    %v591 = vunpack.c.0.s8 %v590
    %v592 = vlaneseq
    %v593 = vshrl.u32 %v592, 7
    %v594 = vsub.s32 %v591, %v593
    %v595 = vrot.slane %v588, %v594
    %s597 = scalar_lea.vmem [#allocation2], 48
    %598 = vst.msk [vmem:[%s597] ss:$2 sm:$0x3] %vm484, %v595
    %v599 = vcombine.high %v588, %v588
    %v601 = vunpack.c.l.s4 1966171168
    %v602 = vunpack.c.0.s8 %v601
    %v603 = vlaneseq
    %v604 = vshrl.u32 %v603, 7
    %v605 = vsub.s32 %v602, %v604
    %v606 = vrot.slane %v599, %v605
    %s608 = scalar_lea.vmem [#allocation2], 52
    %609 = vst.msk [vmem:[%s608] ss:$2 sm:$0x3] %vm484, %v606
    %v610 = vcombine.high %v595, %v595
    %s612 = scalar_lea.vmem [#allocation2], 56
    %613 = vst.msk [vmem:[%s612] ss:$2 sm:$0x3] %vm484, %v610
    %v614 = vcombine.high %v606, %v606
    %s616 = scalar_lea.vmem [#allocation2], 60
    %617 = vst.msk [vmem:[%s616] ss:$2 sm:$0x3] %vm484, %v614
    %s618 = scalar_lea.vmem [#allocation3], 256
    %v619 = vld [vmem:[%s618] sm:$0xff]
    %v620 = vld [vmem:[%s618 + $0x8] sm:$0xff]
    %v621 = vld [vmem:[%s618 + $0x10] sm:$0xff]
    %v622 = vld [vmem:[%s618 + $0x18] sm:$0xff]
    %v623 = vld [vmem:[%s618 + $0x20] sm:$0xff]
    %v624 = vld [vmem:[%s618 + $0x28] sm:$0xff]
    %v625 = vld [vmem:[%s618 + $0x30] sm:$0xff]
    %v626 = vld [vmem:[%s618 + $0x38] sm:$0xff]
    %v627 = vld [vmem:[%s618 + $0x40] sm:$0xff]
    %v628 = vld [vmem:[%s618 + $0x48] sm:$0xff]
    %v629 = vld [vmem:[%s618 + $0x50] sm:$0xff]
    %v630 = vld [vmem:[%s618 + $0x58] sm:$0xff]
    %v631 = vld [vmem:[%s618 + $0x60] sm:$0xff]
    %v632 = vld [vmem:[%s618 + $0x68] sm:$0xff]
    %v633 = vld [vmem:[%s618 + $0x70] sm:$0xff]
    %v634 = vld [vmem:[%s618 + $0x78] sm:$0xff]
    %v635 = vld [vmem:[%s618 + $0x80] sm:$0xff]
    %v636 = vld [vmem:[%s618 + $0x88] sm:$0xff]
    %v637 = vld [vmem:[%s618 + $0x90] sm:$0xff]
    %v638 = vld [vmem:[%s618 + $0x98] sm:$0xff]
    %v639 = vld [vmem:[%s618 + $0xa0] sm:$0xff]
    %v640 = vld [vmem:[%s618 + $0xa8] sm:$0xff]
    %v641 = vld [vmem:[%s618 + $0xb0] sm:$0xff]
    %v642 = vld [vmem:[%s618 + $0xb8] sm:$0xff]
    %v643 = vld [vmem:[%s618 + $0xc0] sm:$0xff]
    %v644 = vld [vmem:[%s618 + $0xc8] sm:$0xff]
    %v645 = vld [vmem:[%s618 + $0xd0] sm:$0xff]
    %v646 = vld [vmem:[%s618 + $0xd8] sm:$0xff]
    %v647 = vld [vmem:[%s618 + $0xe0] sm:$0xff]
    %v648 = vld [vmem:[%s618 + $0xe8] sm:$0xff]
    %v649 = vld [vmem:[%s618 + $0xf0] sm:$0xff]
    %v650 = vld [vmem:[%s618 + $0xf8] sm:$0xff]
    %651 = vmatprep.subr.mxu0 %v620
    %652 = vmatpush1.msra.mxu0 %v619
    %653 = vmatprep.subr.mxu0 %v628
    %654 = vmatpush1.msra.mxu0 %v627
    %655 = vmatprep.subr.mxu0 %v636
    %656 = vmatpush1.msra.mxu0 %v635
    %657 = vmatprep.subr.mxu0 %v644
    %658 = vmatpush1.msra.mxu0 %v643
    %659 = vmatprep.subr.mxu0 0.0
    %660 = vmatpush1.msra.mxu0 0.0
    %661 = vmatprep.subr.mxu0 0.0
    %662 = vmatpush1.msra.mxu0 0.0
    %663 = vmatprep.subr.mxu0 0.0
    %664 = vmatpush1.msra.mxu0 0.0
    %665 = vmatprep.subr.mxu0 0.0
    %666 = vmatpush1.msra.mxu0 0.0
    %667 = vmatprep.subr.mxu0 0.0
    %668 = vmatpush1.msra.mxu0 0.0
    %669 = vmatprep.subr.mxu0 0.0
    %670 = vmatpush1.msra.mxu0 0.0
    %671 = vmatprep.subr.mxu0 0.0
    %672 = vmatpush1.msra.mxu0 0.0
    %673 = vmatprep.subr.mxu0 0.0
    %674 = vmatpush1.msra.mxu0 0.0
    %675 = vmatprep.subr.mxu0 0.0
    %676 = vmatpush1.msra.mxu0 0.0
    %677 = vmatprep.subr.mxu0 0.0
    %678 = vmatpush1.msra.mxu0 0.0
    %679 = vmatprep.subr.mxu0 0.0
    %680 = vmatpush1.msra.mxu0 0.0
    %681 = vmatprep.subr.mxu0 0.0
    %682 = vmatpush1.msra.mxu0 0.0
    %683 = vmatprep.subr.mxu0 0.0
    %684 = vmatpush1.msra.mxu0 0.0
    %685 = vmatprep.subr.mxu0 0.0
    %686 = vmatpush1.msra.mxu0 0.0
    %687 = vmatprep.subr.mxu0 0.0
    %688 = vmatpush1.msra.mxu0 0.0
    %689 = vmatprep.subr.mxu0 0.0
    %690 = vmatpush1.msra.mxu0 0.0
    %691 = vmatprep.subr.mxu0 0.0
    %692 = vmatpush1.msra.mxu0 0.0
    %693 = vmatprep.subr.mxu0 0.0
    %694 = vmatpush1.msra.mxu0 0.0
    %695 = vmatprep.subr.mxu0 0.0
    %696 = vmatpush1.msra.mxu0 0.0
    %697 = vmatprep.subr.mxu0 0.0
    %698 = vmatpush1.msra.mxu0 0.0
    %699 = vmatprep.subr.mxu0 0.0
    %700 = vmatpush1.msra.mxu0 0.0
    %701 = vmatprep.subr.mxu0 0.0
    %702 = vmatpush1.msra.mxu0 0.0
    %703 = vmatprep.subr.mxu0 0.0
    %704 = vmatpush1.msra.mxu0 0.0
    %705 = vmatprep.subr.mxu0 0.0
    %706 = vmatpush1.msra.mxu0 0.0
    %707 = vmatprep.subr.mxu0 0.0
    %708 = vmatpush1.msra.mxu0 0.0
    %709 = vmatprep.subr.mxu0 0.0
    %710 = vmatpush1.msra.mxu0 0.0
    %711 = vmatprep.subr.mxu0 0.0
    %712 = vmatpush1.msra.mxu0 0.0
    %713 = vmatprep.subr.mxu0 0.0
    %714 = vmatpush1.msra.mxu0 0.0
    %715 = vmatprep.mubr.f32.mxu0 0.0
    %716 = vmatmul.mubr.f32.gmra.mrb[0].mxu0 %v122
    %v717 = vpop.f32.mrb[0].mxu0
    %v718 = vadd.f32 %v113, %v717
    %v719 = vpop.f32.mrb[0].mxu0
    %v720 = vadd.f32 %v113, %v719
    %721 = vmatprep.mubr.f32.mxu0 0.0
    %722 = vmatmul.mubr.f32.gmra.mrb[0].mxu0 %v125
    %v723 = vpop.f32.mrb[0].mxu0
    %v724 = vadd.f32 %v118, %v723
    %v725 = vpop.f32.mrb[0].mxu0
    %v726 = vadd.f32 %v118, %v725
    %727 = vdwg.mxu0
    %728 = vmatprep.subr.mxu0 %v622
    %729 = vmatpush1.msra.mxu0 %v621
    %730 = vmatprep.subr.mxu0 %v630
    %731 = vmatpush1.msra.mxu0 %v629
    %732 = vmatprep.subr.mxu0 %v638
    %733 = vmatpush1.msra.mxu0 %v637
    %734 = vmatprep.subr.mxu0 %v646
    %735 = vmatpush1.msra.mxu0 %v645
    %736 = vmatprep.subr.mxu0 0.0
    %737 = vmatpush1.msra.mxu0 0.0
    %738 = vmatprep.subr.mxu0 0.0
    %739 = vmatpush1.msra.mxu0 0.0
    %740 = vmatprep.subr.mxu0 0.0
    %741 = vmatpush1.msra.mxu0 0.0
    %742 = vmatprep.subr.mxu0 0.0
    %743 = vmatpush1.msra.mxu0 0.0
    %744 = vmatprep.subr.mxu0 0.0
    %745 = vmatpush1.msra.mxu0 0.0
    %746 = vmatprep.subr.mxu0 0.0
    %747 = vmatpush1.msra.mxu0 0.0
    %748 = vmatprep.subr.mxu0 0.0
    %749 = vmatpush1.msra.mxu0 0.0
    %750 = vmatprep.subr.mxu0 0.0
    %751 = vmatpush1.msra.mxu0 0.0
    %752 = vmatprep.subr.mxu0 0.0
    %753 = vmatpush1.msra.mxu0 0.0
    %754 = vmatprep.subr.mxu0 0.0
    %755 = vmatpush1.msra.mxu0 0.0
    %756 = vmatprep.subr.mxu0 0.0
    %757 = vmatpush1.msra.mxu0 0.0
    %758 = vmatprep.subr.mxu0 0.0
    %759 = vmatpush1.msra.mxu0 0.0
    %760 = vmatprep.subr.mxu0 0.0
    %761 = vmatpush1.msra.mxu0 0.0
    %762 = vmatprep.subr.mxu0 0.0
    %763 = vmatpush1.msra.mxu0 0.0
    %764 = vmatprep.subr.mxu0 0.0
    %765 = vmatpush1.msra.mxu0 0.0
    %766 = vmatprep.subr.mxu0 0.0
    %767 = vmatpush1.msra.mxu0 0.0
    %768 = vmatprep.subr.mxu0 0.0
    %769 = vmatpush1.msra.mxu0 0.0
    %770 = vmatprep.subr.mxu0 0.0
    %771 = vmatpush1.msra.mxu0 0.0
    %772 = vmatprep.subr.mxu0 0.0
    %773 = vmatpush1.msra.mxu0 0.0
    %774 = vmatprep.subr.mxu0 0.0
    %775 = vmatpush1.msra.mxu0 0.0
    %776 = vmatprep.subr.mxu0 0.0
    %777 = vmatpush1.msra.mxu0 0.0
    %778 = vmatprep.subr.mxu0 0.0
    %779 = vmatpush1.msra.mxu0 0.0
    %780 = vmatprep.subr.mxu0 0.0
    %781 = vmatpush1.msra.mxu0 0.0
    %782 = vmatprep.subr.mxu0 0.0
    %783 = vmatpush1.msra.mxu0 0.0
    %784 = vmatprep.subr.mxu0 0.0
    %785 = vmatpush1.msra.mxu0 0.0
    %786 = vmatprep.subr.mxu0 0.0
    %787 = vmatpush1.msra.mxu0 0.0
    %788 = vmatprep.subr.mxu0 0.0
    %789 = vmatpush1.msra.mxu0 0.0
    %790 = vmatprep.subr.mxu0 0.0
    %791 = vmatpush1.msra.mxu0 0.0
    %792 = vmatprep.mubr.f32.mxu0 0.0
    %793 = vmatmul.mubr.f32.gmra.mrb[0].mxu0 %v122
    %v794 = vpop.f32.mrb[0].mxu0
    %v795 = vadd.f32 %v113, %v794
    %v796 = vpop.f32.mrb[0].mxu0
    %v797 = vadd.f32 %v113, %v796
    %798 = vmatprep.mubr.f32.mxu0 0.0
    %799 = vmatmul.mubr.f32.gmra.mrb[0].mxu0 %v125
    %v800 = vpop.f32.mrb[0].mxu0
    %v801 = vadd.f32 %v118, %v800
    %v802 = vpop.f32.mrb[0].mxu0
    %v803 = vadd.f32 %v118, %v802
    %804 = vdwg.mxu0
    %805 = vmatprep.subr.mxu0 %v624
    %806 = vmatpush1.msra.mxu0 %v623
    %807 = vmatprep.subr.mxu0 %v632
    %808 = vmatpush1.msra.mxu0 %v631
    %809 = vmatprep.subr.mxu0 %v640
    %810 = vmatpush1.msra.mxu0 %v639
    %811 = vmatprep.subr.mxu0 %v648
    %812 = vmatpush1.msra.mxu0 %v647
    %813 = vmatprep.subr.mxu0 0.0
    %814 = vmatpush1.msra.mxu0 0.0
    %815 = vmatprep.subr.mxu0 0.0
    %816 = vmatpush1.msra.mxu0 0.0
    %817 = vmatprep.subr.mxu0 0.0
    %818 = vmatpush1.msra.mxu0 0.0
    %819 = vmatprep.subr.mxu0 0.0
    %820 = vmatpush1.msra.mxu0 0.0
    %821 = vmatprep.subr.mxu0 0.0
    %822 = vmatpush1.msra.mxu0 0.0
    %823 = vmatprep.subr.mxu0 0.0
    %824 = vmatpush1.msra.mxu0 0.0
    %825 = vmatprep.subr.mxu0 0.0
    %826 = vmatpush1.msra.mxu0 0.0
    %827 = vmatprep.subr.mxu0 0.0
    %828 = vmatpush1.msra.mxu0 0.0
    %829 = vmatprep.subr.mxu0 0.0
    %830 = vmatpush1.msra.mxu0 0.0
    %831 = vmatprep.subr.mxu0 0.0
    %832 = vmatpush1.msra.mxu0 0.0
    %833 = vmatprep.subr.mxu0 0.0
    %834 = vmatpush1.msra.mxu0 0.0
    %835 = vmatprep.subr.mxu0 0.0
    %836 = vmatpush1.msra.mxu0 0.0
    %837 = vmatprep.subr.mxu0 0.0
    %838 = vmatpush1.msra.mxu0 0.0
    %839 = vmatprep.subr.mxu0 0.0
    %840 = vmatpush1.msra.mxu0 0.0
    %841 = vmatprep.subr.mxu0 0.0
    %842 = vmatpush1.msra.mxu0 0.0
    %843 = vmatprep.subr.mxu0 0.0
    %844 = vmatpush1.msra.mxu0 0.0
    %845 = vmatprep.subr.mxu0 0.0
    %846 = vmatpush1.msra.mxu0 0.0
    %847 = vmatprep.subr.mxu0 0.0
    %848 = vmatpush1.msra.mxu0 0.0
    %849 = vmatprep.subr.mxu0 0.0
    %850 = vmatpush1.msra.mxu0 0.0
    %851 = vmatprep.subr.mxu0 0.0
    %852 = vmatpush1.msra.mxu0 0.0
    %853 = vmatprep.subr.mxu0 0.0
    %854 = vmatpush1.msra.mxu0 0.0
    %855 = vmatprep.subr.mxu0 0.0
    %856 = vmatpush1.msra.mxu0 0.0
    %857 = vmatprep.subr.mxu0 0.0
    %858 = vmatpush1.msra.mxu0 0.0
    %859 = vmatprep.subr.mxu0 0.0
    %860 = vmatpush1.msra.mxu0 0.0
    %861 = vmatprep.subr.mxu0 0.0
    %862 = vmatpush1.msra.mxu0 0.0
    %863 = vmatprep.subr.mxu0 0.0
    %864 = vmatpush1.msra.mxu0 0.0
    %865 = vmatprep.subr.mxu0 0.0
    %866 = vmatpush1.msra.mxu0 0.0
    %867 = vmatprep.subr.mxu0 0.0
    %868 = vmatpush1.msra.mxu0 0.0
    %869 = vmatprep.mubr.f32.mxu0 0.0
    %870 = vmatmul.mubr.f32.gmra.mrb[0].mxu0 %v122
    %v871 = vpop.f32.mrb[0].mxu0
    %v872 = vadd.f32 %v113, %v871
    %v873 = vpop.f32.mrb[0].mxu0
    %v874 = vadd.f32 %v113, %v873
    %875 = vmatprep.mubr.f32.mxu0 0.0
    %876 = vmatmul.mubr.f32.gmra.mrb[0].mxu0 %v125
    %v877 = vpop.f32.mrb[0].mxu0
    %v878 = vadd.f32 %v118, %v877
    %v879 = vpop.f32.mrb[0].mxu0
    %v880 = vadd.f32 %v118, %v879
    %881 = vdwg.mxu0
    %882 = vmatprep.subr.mxu0 %v626
    %883 = vmatpush1.msra.mxu0 %v625
    %884 = vmatprep.subr.mxu0 %v634
    %885 = vmatpush1.msra.mxu0 %v633
    %886 = vmatprep.subr.mxu0 %v642
    %887 = vmatpush1.msra.mxu0 %v641
    %888 = vmatprep.subr.mxu0 %v650
    %889 = vmatpush1.msra.mxu0 %v649
    %890 = vmatprep.subr.mxu0 0.0
    %891 = vmatpush1.msra.mxu0 0.0
    %892 = vmatprep.subr.mxu0 0.0
    %893 = vmatpush1.msra.mxu0 0.0
    %894 = vmatprep.subr.mxu0 0.0
    %895 = vmatpush1.msra.mxu0 0.0
    %896 = vmatprep.subr.mxu0 0.0
    %897 = vmatpush1.msra.mxu0 0.0
    %898 = vmatprep.subr.mxu0 0.0
    %899 = vmatpush1.msra.mxu0 0.0
    %900 = vmatprep.subr.mxu0 0.0
    %901 = vmatpush1.msra.mxu0 0.0
    %902 = vmatprep.subr.mxu0 0.0
    %903 = vmatpush1.msra.mxu0 0.0
    %904 = vmatprep.subr.mxu0 0.0
    %905 = vmatpush1.msra.mxu0 0.0
    %906 = vmatprep.subr.mxu0 0.0
    %907 = vmatpush1.msra.mxu0 0.0
    %908 = vmatprep.subr.mxu0 0.0
    %909 = vmatpush1.msra.mxu0 0.0
    %910 = vmatprep.subr.mxu0 0.0
    %911 = vmatpush1.msra.mxu0 0.0
    %912 = vmatprep.subr.mxu0 0.0
    %913 = vmatpush1.msra.mxu0 0.0
    %914 = vmatprep.subr.mxu0 0.0
    %915 = vmatpush1.msra.mxu0 0.0
    %916 = vmatprep.subr.mxu0 0.0
    %917 = vmatpush1.msra.mxu0 0.0
    %918 = vmatprep.subr.mxu0 0.0
    %919 = vmatpush1.msra.mxu0 0.0
    %920 = vmatprep.subr.mxu0 0.0
    %921 = vmatpush1.msra.mxu0 0.0
    %922 = vmatprep.subr.mxu0 0.0
    %923 = vmatpush1.msra.mxu0 0.0
    %924 = vmatprep.subr.mxu0 0.0
    %925 = vmatpush1.msra.mxu0 0.0
    %926 = vmatprep.subr.mxu0 0.0
    %927 = vmatpush1.msra.mxu0 0.0
    %928 = vmatprep.subr.mxu0 0.0
    %929 = vmatpush1.msra.mxu0 0.0
    %930 = vmatprep.subr.mxu0 0.0
    %931 = vmatpush1.msra.mxu0 0.0
    %932 = vmatprep.subr.mxu0 0.0
    %933 = vmatpush1.msra.mxu0 0.0
    %934 = vmatprep.subr.mxu0 0.0
    %935 = vmatpush1.msra.mxu0 0.0
    %936 = vmatprep.subr.mxu0 0.0
    %937 = vmatpush1.msra.mxu0 0.0
    %938 = vmatprep.subr.mxu0 0.0
    %939 = vmatpush1.msra.mxu0 0.0
    %940 = vmatprep.subr.mxu0 0.0
    %941 = vmatpush1.msra.mxu0 0.0
    %942 = vmatprep.subr.mxu0 0.0
    %943 = vmatpush1.msra.mxu0 0.0
    %944 = vmatprep.subr.mxu0 0.0
    %945 = vmatpush1.msra.mxu0 0.0
    %946 = vmatprep.mubr.f32.mxu0 0.0
    %947 = vmatmul.mubr.f32.gmra.mrb[0].mxu0 %v122
    %v948 = vpop.f32.mrb[0].mxu0
    %v949 = vadd.f32 %v113, %v948
    %v950 = vpop.f32.mrb[0].mxu0
    %v951 = vadd.f32 %v113, %v950
    %952 = vmatprep.mubr.f32.mxu0 0.0
    %953 = vmatmul.mubr.f32.gmra.mrb[0].mxu0 %v125
    %v954 = vpop.f32.mrb[0].mxu0
    %v955 = vadd.f32 %v118, %v954
    %v956 = vpop.f32.mrb[0].mxu0
    %v957 = vadd.f32 %v118, %v956
    %958 = vdwg.mxu0
    %v959 = vmax.f32 %v718, 0.0
    %v960 = vmax.f32 %v720, 0.0
    %v961 = vmax.f32 %v795, 0.0
    %v962 = vmax.f32 %v797, 0.0
    %v963 = vmax.f32 %v872, 0.0
    %v964 = vmax.f32 %v874, 0.0
    %v965 = vmax.f32 %v949, 0.0
    %v966 = vmax.f32 %v951, 0.0
    %v967 = vmax.f32 %v724, 0.0
    %v968 = vmax.f32 %v726, 0.0
    %v969 = vmax.f32 %v801, 0.0
    %v970 = vmax.f32 %v803, 0.0
    %v971 = vmax.f32 %v878, 0.0
    %v972 = vmax.f32 %v880, 0.0
    %v973 = vmax.f32 %v955, 0.0
    %v974 = vmax.f32 %v957, 0.0
    %v975 = vmax.f32 %v959, %v961
    %v976 = vmax.f32 %v960, %v962
    %v977 = vmax.f32 %v967, %v969
    %v978 = vmax.f32 %v968, %v970
    %v979 = vmax.f32 %v963, %v965
    %v980 = vmax.f32 %v964, %v966
    %v981 = vmax.f32 %v971, %v973
    %v982 = vmax.f32 %v972, %v974
    %v983 = vmax.f32 %v975, %v979
    %v984 = vmax.f32 %v976, %v980
    %v985 = vmax.f32 %v977, %v981
    %v986 = vmax.f32 %v978, %v982
    %v989 = vcombine.low %v983, %v984
    %v991 = vunpack.c.l.s4 1966171168
    %v992 = vunpack.c.0.s8 %v991
    %v993 = vlaneseq
    %v994 = vshrl.u32 %v993, 7
    %v995 = vsub.s32 %v992, %v994
    %v996 = vrot.slane %v989, %v995
    %v998 = vunpack.c.l.s4 1966171168
    %v999 = vunpack.c.0.s8 %v998
    %v1000 = vlaneseq
    %v1001 = vshrl.u32 %v1000, 7
    %v1002 = vsub.s32 %v999, %v1001
    %v1003 = vrot.slane %v996, %v1002
    %s1005 = scalar_lea.vmem [#allocation2], 1
    %1006 = vst.msk [vmem:[%s1005] ss:$2 sm:$0x3] %vm484, %v1003
    %v1007 = vcombine.high %v996, %v996
    %v1009 = vunpack.c.l.s4 1966171168
    %v1010 = vunpack.c.0.s8 %v1009
    %v1011 = vlaneseq
    %v1012 = vshrl.u32 %v1011, 7
    %v1013 = vsub.s32 %v1010, %v1012
    %v1014 = vrot.slane %v1007, %v1013
    %s1016 = scalar_lea.vmem [#allocation2], 5
    %1017 = vst.msk [vmem:[%s1016] ss:$2 sm:$0x3] %vm484, %v1014
    %v1018 = vcombine.high %v1003, %v1003
    %s1020 = scalar_lea.vmem [#allocation2], 9
    %1021 = vst.msk [vmem:[%s1020] ss:$2 sm:$0x3] %vm484, %v1018
    %v1022 = vcombine.high %v1014, %v1014
    %s1024 = scalar_lea.vmem [#allocation2], 13
    %1025 = vst.msk [vmem:[%s1024] ss:$2 sm:$0x3] %vm484, %v1022
    %v1026 = vcombine.high %v983, %v984
    %v1028 = vunpack.c.l.s4 1966171168
    %v1029 = vunpack.c.0.s8 %v1028
    %v1030 = vlaneseq
    %v1031 = vshrl.u32 %v1030, 7
    %v1032 = vsub.s32 %v1029, %v1031
    %v1033 = vrot.slane %v1026, %v1032
    %v1035 = vunpack.c.l.s4 1966171168
    %v1036 = vunpack.c.0.s8 %v1035
    %v1037 = vlaneseq
    %v1038 = vshrl.u32 %v1037, 7
    %v1039 = vsub.s32 %v1036, %v1038
    %v1040 = vrot.slane %v1033, %v1039
    %s1042 = scalar_lea.vmem [#allocation2], 17
    %1043 = vst.msk [vmem:[%s1042] ss:$2 sm:$0x3] %vm484, %v1040
    %v1044 = vcombine.high %v1033, %v1033
    %v1046 = vunpack.c.l.s4 1966171168
    %v1047 = vunpack.c.0.s8 %v1046
    %v1048 = vlaneseq
    %v1049 = vshrl.u32 %v1048, 7
    %v1050 = vsub.s32 %v1047, %v1049
    %v1051 = vrot.slane %v1044, %v1050
    %s1053 = scalar_lea.vmem [#allocation2], 21
    %1054 = vst.msk [vmem:[%s1053] ss:$2 sm:$0x3] %vm484, %v1051
    %v1055 = vcombine.high %v1040, %v1040
    %s1057 = scalar_lea.vmem [#allocation2], 25
    %1058 = vst.msk [vmem:[%s1057] ss:$2 sm:$0x3] %vm484, %v1055
    %v1059 = vcombine.high %v1051, %v1051
    %s1061 = scalar_lea.vmem [#allocation2], 29
    %1062 = vst.msk [vmem:[%s1061] ss:$2 sm:$0x3] %vm484, %v1059
    %v1065 = vcombine.low %v985, %v986
    %v1067 = vunpack.c.l.s4 1966171168
    %v1068 = vunpack.c.0.s8 %v1067
    %v1069 = vlaneseq
    %v1070 = vshrl.u32 %v1069, 7
    %v1071 = vsub.s32 %v1068, %v1070
    %v1072 = vrot.slane %v1065, %v1071
    %v1074 = vunpack.c.l.s4 1966171168
    %v1075 = vunpack.c.0.s8 %v1074
    %v1076 = vlaneseq
    %v1077 = vshrl.u32 %v1076, 7
    %v1078 = vsub.s32 %v1075, %v1077
    %v1079 = vrot.slane %v1072, %v1078
    %s1081 = scalar_lea.vmem [#allocation2], 33
    %1082 = vst.msk [vmem:[%s1081] ss:$2 sm:$0x3] %vm484, %v1079
    %v1083 = vcombine.high %v1072, %v1072
    %v1085 = vunpack.c.l.s4 1966171168
    %v1086 = vunpack.c.0.s8 %v1085
    %v1087 = vlaneseq
    %v1088 = vshrl.u32 %v1087, 7
    %v1089 = vsub.s32 %v1086, %v1088
    %v1090 = vrot.slane %v1083, %v1089
    %s1092 = scalar_lea.vmem [#allocation2], 37
    %1093 = vst.msk [vmem:[%s1092] ss:$2 sm:$0x3] %vm484, %v1090
    %v1094 = vcombine.high %v1079, %v1079
    %s1096 = scalar_lea.vmem [#allocation2], 41
    %1097 = vst.msk [vmem:[%s1096] ss:$2 sm:$0x3] %vm484, %v1094
    %v1098 = vcombine.high %v1090, %v1090
    %s1100 = scalar_lea.vmem [#allocation2], 45
    %1101 = vst.msk [vmem:[%s1100] ss:$2 sm:$0x3] %vm484, %v1098
    %v1102 = vcombine.high %v985, %v986
    %v1104 = vunpack.c.l.s4 1966171168
    %v1105 = vunpack.c.0.s8 %v1104
    %v1106 = vlaneseq
    %v1107 = vshrl.u32 %v1106, 7
    %v1108 = vsub.s32 %v1105, %v1107
    %v1109 = vrot.slane %v1102, %v1108
    %v1111 = vunpack.c.l.s4 1966171168
    %v1112 = vunpack.c.0.s8 %v1111
    %v1113 = vlaneseq
    %v1114 = vshrl.u32 %v1113, 7
    %v1115 = vsub.s32 %v1112, %v1114
    %v1116 = vrot.slane %v1109, %v1115
    %s1118 = scalar_lea.vmem [#allocation2], 49
    %1119 = vst.msk [vmem:[%s1118] ss:$2 sm:$0x3] %vm484, %v1116
    %v1120 = vcombine.high %v1109, %v1109
    %v1122 = vunpack.c.l.s4 1966171168
    %v1123 = vunpack.c.0.s8 %v1122
    %v1124 = vlaneseq
    %v1125 = vshrl.u32 %v1124, 7
    %v1126 = vsub.s32 %v1123, %v1125
    %v1127 = vrot.slane %v1120, %v1126
    %s1129 = scalar_lea.vmem [#allocation2], 53
    %1130 = vst.msk [vmem:[%s1129] ss:$2 sm:$0x3] %vm484, %v1127
    %v1131 = vcombine.high %v1116, %v1116
    %s1133 = scalar_lea.vmem [#allocation2], 57
    %1134 = vst.msk [vmem:[%s1133] ss:$2 sm:$0x3] %vm484, %v1131
    %v1135 = vcombine.high %v1127, %v1127
    %s1137 = scalar_lea.vmem [#allocation2], 61
    %1138 = vst.msk [vmem:[%s1137] ss:$2 sm:$0x3] %vm484, %v1135
    %v1139 = vld [vmem:[#allocation2] sm:$0xff]
    %v1140 = vld [vmem:[#allocation2 + $0x8] sm:$0xff]
    %v1141 = vld [vmem:[#allocation2 + $0x10] sm:$0xff]
    %v1142 = vld [vmem:[#allocation2 + $0x18] sm:$0xff]
    %v1143 = vld [vmem:[#allocation2 + $0x20] sm:$0xff]
    %v1144 = vld [vmem:[#allocation2 + $0x28] sm:$0xff]
    %v1145 = vld [vmem:[#allocation2 + $0x30] sm:$0xff]
    %v1146 = vld [vmem:[#allocation2 + $0x38] sm:$0xff]
    %v1147 = vld [vmem:[#allocation8] sm:$0xff]
    %v1148 = vld [vmem:[#allocation8 + $0x8] sm:$0xff]
    %v1149 = vld [vmem:[#allocation8 + $0x10] sm:$0xff]
    %v1150 = vld [vmem:[#allocation8 + $0x18] sm:$0xff]
    %v1151 = vld [vmem:[#allocation8 + $0x20] sm:$0xff]
    %v1152 = vld [vmem:[#allocation8 + $0x28] sm:$0xff]
    %v1153 = vld [vmem:[#allocation8 + $0x30] sm:$0xff]
    %v1154 = vld [vmem:[#allocation8 + $0x38] sm:$0xff]
    %v1155 = vld [vmem:[#allocation8 + $0x40] sm:$0xff]
    %v1156 = vld [vmem:[#allocation8 + $0x48] sm:$0xff]
    %v1157 = vld [vmem:[#allocation8 + $0x50] sm:$0xff]
    %v1158 = vld [vmem:[#allocation8 + $0x58] sm:$0xff]
    %v1159 = vld [vmem:[#allocation8 + $0x60] sm:$0xff]
    %v1160 = vld [vmem:[#allocation8 + $0x68] sm:$0xff]
    %v1161 = vld [vmem:[#allocation8 + $0x70] sm:$0xff]
    %v1162 = vld [vmem:[#allocation8 + $0x78] sm:$0xff]
    %v1163 = vld [vmem:[#allocation8 + $0x80] sm:$0xff]
    %v1164 = vld [vmem:[#allocation8 + $0x88] sm:$0xff]
    %v1165 = vld [vmem:[#allocation8 + $0x90] sm:$0xff]
    %v1166 = vld [vmem:[#allocation8 + $0x98] sm:$0xff]
    %v1167 = vld [vmem:[#allocation8 + $0xa0] sm:$0xff]
    %v1168 = vld [vmem:[#allocation8 + $0xa8] sm:$0xff]
    %v1169 = vld [vmem:[#allocation8 + $0xb0] sm:$0xff]
    %v1170 = vld [vmem:[#allocation8 + $0xb8] sm:$0xff]
    %v1171 = vld [vmem:[#allocation8 + $0xc0] sm:$0xff]
    %v1172 = vld [vmem:[#allocation8 + $0xc8] sm:$0xff]
    %v1173 = vld [vmem:[#allocation8 + $0xd0] sm:$0xff]
    %v1174 = vld [vmem:[#allocation8 + $0xd8] sm:$0xff]
    %v1175 = vld [vmem:[#allocation8 + $0xe0] sm:$0xff]
    %v1176 = vld [vmem:[#allocation8 + $0xe8] sm:$0xff]
    %v1177 = vld [vmem:[#allocation8 + $0xf0] sm:$0xff]
    %v1178 = vld [vmem:[#allocation8 + $0xf8] sm:$0xff]
    %v1179 = vld [vmem:[#allocation8 + $0x100] sm:$0xff]
    %v1180 = vld [vmem:[#allocation8 + $0x108] sm:$0xff]
    %v1181 = vld [vmem:[#allocation8 + $0x110] sm:$0xff]
    %v1182 = vld [vmem:[#allocation8 + $0x118] sm:$0xff]
    %v1183 = vld [vmem:[#allocation8 + $0x120] sm:$0xff]
    %v1184 = vld [vmem:[#allocation8 + $0x128] sm:$0xff]
    %v1185 = vld [vmem:[#allocation8 + $0x130] sm:$0xff]
    %v1186 = vld [vmem:[#allocation8 + $0x138] sm:$0xff]
    %v1187 = vld [vmem:[#allocation8 + $0x140] sm:$0xff]
    %v1188 = vld [vmem:[#allocation8 + $0x148] sm:$0xff]
    %v1189 = vld [vmem:[#allocation8 + $0x150] sm:$0xff]
    %v1190 = vld [vmem:[#allocation8 + $0x158] sm:$0xff]
    %v1191 = vld [vmem:[#allocation8 + $0x160] sm:$0xff]
    %v1192 = vld [vmem:[#allocation8 + $0x168] sm:$0xff]
    %v1193 = vld [vmem:[#allocation8 + $0x170] sm:$0xff]
    %v1194 = vld [vmem:[#allocation8 + $0x178] sm:$0xff]
    %v1195 = vld [vmem:[#allocation8 + $0x180] sm:$0xff]
    %v1196 = vld [vmem:[#allocation8 + $0x188] sm:$0xff]
    %v1197 = vld [vmem:[#allocation8 + $0x190] sm:$0xff]
    %v1198 = vld [vmem:[#allocation8 + $0x198] sm:$0xff]
    %v1199 = vld [vmem:[#allocation8 + $0x1a0] sm:$0xff]
    %v1200 = vld [vmem:[#allocation8 + $0x1a8] sm:$0xff]
    %v1201 = vld [vmem:[#allocation8 + $0x1b0] sm:$0xff]
    %v1202 = vld [vmem:[#allocation8 + $0x1b8] sm:$0xff]
    %v1203 = vld [vmem:[#allocation8 + $0x1c0] sm:$0xff]
    %v1204 = vld [vmem:[#allocation8 + $0x1c8] sm:$0xff]
    %v1205 = vld [vmem:[#allocation8 + $0x1d0] sm:$0xff]
    %v1206 = vld [vmem:[#allocation8 + $0x1d8] sm:$0xff]
    %v1207 = vld [vmem:[#allocation8 + $0x1e0] sm:$0xff]
    %v1208 = vld [vmem:[#allocation8 + $0x1e8] sm:$0xff]
    %v1209 = vld [vmem:[#allocation8 + $0x1f0] sm:$0xff]
    %v1210 = vld [vmem:[#allocation8 + $0x1f8] sm:$0xff]
    %v1211 = vld [vmem:[#allocation8 + $0x200] sm:$0xff]
    %v1212 = vld [vmem:[#allocation8 + $0x208] sm:$0xff]
    %v1213 = vld [vmem:[#allocation8 + $0x210] sm:$0xff]
    %v1214 = vld [vmem:[#allocation8 + $0x218] sm:$0xff]
    %v1215 = vld [vmem:[#allocation8 + $0x220] sm:$0xff]
    %v1216 = vld [vmem:[#allocation8 + $0x228] sm:$0xff]
    %v1217 = vld [vmem:[#allocation8 + $0x230] sm:$0xff]
    %v1218 = vld [vmem:[#allocation8 + $0x238] sm:$0xff]
    %v1219 = vld [vmem:[#allocation8 + $0x240] sm:$0xff]
    %v1220 = vld [vmem:[#allocation8 + $0x248] sm:$0xff]
    %v1221 = vld [vmem:[#allocation8 + $0x250] sm:$0xff]
    %v1222 = vld [vmem:[#allocation8 + $0x258] sm:$0xff]
    %v1223 = vld [vmem:[#allocation8 + $0x260] sm:$0xff]
    %v1224 = vld [vmem:[#allocation8 + $0x268] sm:$0xff]
    %v1225 = vld [vmem:[#allocation8 + $0x270] sm:$0xff]
    %v1226 = vld [vmem:[#allocation8 + $0x278] sm:$0xff]
    %v1227 = vld [vmem:[#allocation8 + $0x280] sm:$0xff]
    %v1228 = vld [vmem:[#allocation8 + $0x288] sm:$0xff]
    %v1229 = vld [vmem:[#allocation8 + $0x290] sm:$0xff]
    %v1230 = vld [vmem:[#allocation8 + $0x298] sm:$0xff]
    %v1231 = vld [vmem:[#allocation8 + $0x2a0] sm:$0xff]
    %v1232 = vld [vmem:[#allocation8 + $0x2a8] sm:$0xff]
    %v1233 = vld [vmem:[#allocation8 + $0x2b0] sm:$0xff]
    %v1234 = vld [vmem:[#allocation8 + $0x2b8] sm:$0xff]
    %v1235 = vld [vmem:[#allocation8 + $0x2c0] sm:$0xff]
    %v1236 = vld [vmem:[#allocation8 + $0x2c8] sm:$0xff]
    %v1237 = vld [vmem:[#allocation8 + $0x2d0] sm:$0xff]
    %v1238 = vld [vmem:[#allocation8 + $0x2d8] sm:$0xff]
    %v1239 = vld [vmem:[#allocation8 + $0x2e0] sm:$0xff]
    %v1240 = vld [vmem:[#allocation8 + $0x2e8] sm:$0xff]
    %v1241 = vld [vmem:[#allocation8 + $0x2f0] sm:$0xff]
    %v1242 = vld [vmem:[#allocation8 + $0x2f8] sm:$0xff]
    %v1243 = vld [vmem:[#allocation8 + $0x300] sm:$0xff]
    %v1244 = vld [vmem:[#allocation8 + $0x308] sm:$0xff]
    %v1245 = vld [vmem:[#allocation8 + $0x310] sm:$0xff]
    %v1246 = vld [vmem:[#allocation8 + $0x318] sm:$0xff]
    %v1247 = vld [vmem:[#allocation8 + $0x320] sm:$0xff]
    %v1248 = vld [vmem:[#allocation8 + $0x328] sm:$0xff]
    %v1249 = vld [vmem:[#allocation8 + $0x330] sm:$0xff]
    %v1250 = vld [vmem:[#allocation8 + $0x338] sm:$0xff]
    %v1251 = vld [vmem:[#allocation8 + $0x340] sm:$0xff]
    %v1252 = vld [vmem:[#allocation8 + $0x348] sm:$0xff]
    %v1253 = vld [vmem:[#allocation8 + $0x350] sm:$0xff]
    %v1254 = vld [vmem:[#allocation8 + $0x358] sm:$0xff]
    %v1255 = vld [vmem:[#allocation8 + $0x360] sm:$0xff]
    %v1256 = vld [vmem:[#allocation8 + $0x368] sm:$0xff]
    %v1257 = vld [vmem:[#allocation8 + $0x370] sm:$0xff]
    %v1258 = vld [vmem:[#allocation8 + $0x378] sm:$0xff]
    %v1259 = vld [vmem:[#allocation8 + $0x380] sm:$0xff]
    %v1260 = vld [vmem:[#allocation8 + $0x388] sm:$0xff]
    %v1261 = vld [vmem:[#allocation8 + $0x390] sm:$0xff]
    %v1262 = vld [vmem:[#allocation8 + $0x398] sm:$0xff]
    %v1263 = vld [vmem:[#allocation8 + $0x3a0] sm:$0xff]
    %v1264 = vld [vmem:[#allocation8 + $0x3a8] sm:$0xff]
    %v1265 = vld [vmem:[#allocation8 + $0x3b0] sm:$0xff]
    %v1266 = vld [vmem:[#allocation8 + $0x3b8] sm:$0xff]
    %v1267 = vld [vmem:[#allocation8 + $0x3c0] sm:$0xff]
    %v1268 = vld [vmem:[#allocation8 + $0x3c8] sm:$0xff]
    %v1269 = vld [vmem:[#allocation8 + $0x3d0] sm:$0xff]
    %v1270 = vld [vmem:[#allocation8 + $0x3d8] sm:$0xff]
    %v1271 = vld [vmem:[#allocation8 + $0x3e0] sm:$0xff]
    %v1272 = vld [vmem:[#allocation8 + $0x3e8] sm:$0xff]
    %v1273 = vld [vmem:[#allocation8 + $0x3f0] sm:$0xff]
    %v1274 = vld [vmem:[#allocation8 + $0x3f8] sm:$0xff]
    %v1275 = vld [vmem:[#allocation8 + $0x400] sm:$0xff]
    %v1276 = vld [vmem:[#allocation8 + $0x408] sm:$0xff]
    %v1277 = vld [vmem:[#allocation8 + $0x410] sm:$0xff]
    %v1278 = vld [vmem:[#allocation8 + $0x418] sm:$0xff]
    %v1279 = vld [vmem:[#allocation8 + $0x420] sm:$0xff]
    %v1280 = vld [vmem:[#allocation8 + $0x428] sm:$0xff]
    %v1281 = vld [vmem:[#allocation8 + $0x430] sm:$0xff]
    %v1282 = vld [vmem:[#allocation8 + $0x438] sm:$0xff]
    %v1283 = vld [vmem:[#allocation8 + $0x440] sm:$0xff]
    %v1284 = vld [vmem:[#allocation8 + $0x448] sm:$0xff]
    %v1285 = vld [vmem:[#allocation8 + $0x450] sm:$0xff]
    %v1286 = vld [vmem:[#allocation8 + $0x458] sm:$0xff]
    %v1287 = vld [vmem:[#allocation8 + $0x460] sm:$0xff]
    %v1288 = vld [vmem:[#allocation8 + $0x468] sm:$0xff]
    %v1289 = vld [vmem:[#allocation8 + $0x470] sm:$0xff]
    %v1290 = vld [vmem:[#allocation8 + $0x478] sm:$0xff]
    %v1291 = vld [vmem:[#allocation8 + $0x480] sm:$0xff]
    %v1292 = vld [vmem:[#allocation8 + $0x488] sm:$0xff]
    %v1293 = vld [vmem:[#allocation8 + $0x490] sm:$0xff]
    %v1294 = vld [vmem:[#allocation8 + $0x498] sm:$0xff]
    %v1295 = vld [vmem:[#allocation8 + $0x4a0] sm:$0xff]
    %v1296 = vld [vmem:[#allocation8 + $0x4a8] sm:$0xff]
    %v1297 = vld [vmem:[#allocation8 + $0x4b0] sm:$0xff]
    %v1298 = vld [vmem:[#allocation8 + $0x4b8] sm:$0xff]
    %v1299 = vld [vmem:[#allocation8 + $0x4c0] sm:$0xff]
    %v1300 = vld [vmem:[#allocation8 + $0x4c8] sm:$0xff]
    %v1301 = vld [vmem:[#allocation8 + $0x4d0] sm:$0xff]
    %v1302 = vld [vmem:[#allocation8 + $0x4d8] sm:$0xff]
    %v1303 = vld [vmem:[#allocation8 + $0x4e0] sm:$0xff]
    %v1304 = vld [vmem:[#allocation8 + $0x4e8] sm:$0xff]
    %v1305 = vld [vmem:[#allocation8 + $0x4f0] sm:$0xff]
    %v1306 = vld [vmem:[#allocation8 + $0x4f8] sm:$0xff]
    %v1307 = vld [vmem:[#allocation8 + $0x500] sm:$0xff]
    %v1308 = vld [vmem:[#allocation8 + $0x508] sm:$0xff]
    %v1309 = vld [vmem:[#allocation8 + $0x510] sm:$0xff]
    %v1310 = vld [vmem:[#allocation8 + $0x518] sm:$0xff]
    %v1311 = vld [vmem:[#allocation8 + $0x520] sm:$0xff]
    %v1312 = vld [vmem:[#allocation8 + $0x528] sm:$0xff]
    %v1313 = vld [vmem:[#allocation8 + $0x530] sm:$0xff]
    %v1314 = vld [vmem:[#allocation8 + $0x538] sm:$0xff]
    %v1315 = vld [vmem:[#allocation8 + $0x540] sm:$0xff]
    %v1316 = vld [vmem:[#allocation8 + $0x548] sm:$0xff]
    %v1317 = vld [vmem:[#allocation8 + $0x550] sm:$0xff]
    %v1318 = vld [vmem:[#allocation8 + $0x558] sm:$0xff]
    %v1319 = vld [vmem:[#allocation8 + $0x560] sm:$0xff]
    %v1320 = vld [vmem:[#allocation8 + $0x568] sm:$0xff]
    %v1321 = vld [vmem:[#allocation8 + $0x570] sm:$0xff]
    %v1322 = vld [vmem:[#allocation8 + $0x578] sm:$0xff]
    %v1323 = vld [vmem:[#allocation8 + $0x580] sm:$0xff]
    %v1324 = vld [vmem:[#allocation8 + $0x588] sm:$0xff]
    %v1325 = vld [vmem:[#allocation8 + $0x590] sm:$0xff]
    %v1326 = vld [vmem:[#allocation8 + $0x598] sm:$0xff]
    %v1327 = vld [vmem:[#allocation8 + $0x5a0] sm:$0xff]
    %v1328 = vld [vmem:[#allocation8 + $0x5a8] sm:$0xff]
    %v1329 = vld [vmem:[#allocation8 + $0x5b0] sm:$0xff]
    %v1330 = vld [vmem:[#allocation8 + $0x5b8] sm:$0xff]
    %v1331 = vld [vmem:[#allocation8 + $0x5c0] sm:$0xff]
    %v1332 = vld [vmem:[#allocation8 + $0x5c8] sm:$0xff]
    %v1333 = vld [vmem:[#allocation8 + $0x5d0] sm:$0xff]
    %v1334 = vld [vmem:[#allocation8 + $0x5d8] sm:$0xff]
    %v1335 = vld [vmem:[#allocation8 + $0x5e0] sm:$0xff]
    %v1336 = vld [vmem:[#allocation8 + $0x5e8] sm:$0xff]
    %v1337 = vld [vmem:[#allocation8 + $0x5f0] sm:$0xff]
    %v1338 = vld [vmem:[#allocation8 + $0x5f8] sm:$0xff]
    %v1339 = vld [vmem:[#allocation8 + $0x600] sm:$0xff]
    %v1340 = vld [vmem:[#allocation8 + $0x608] sm:$0xff]
    %v1341 = vld [vmem:[#allocation8 + $0x610] sm:$0xff]
    %v1342 = vld [vmem:[#allocation8 + $0x618] sm:$0xff]
    %v1343 = vld [vmem:[#allocation8 + $0x620] sm:$0xff]
    %v1344 = vld [vmem:[#allocation8 + $0x628] sm:$0xff]
    %v1345 = vld [vmem:[#allocation8 + $0x630] sm:$0xff]
    %v1346 = vld [vmem:[#allocation8 + $0x638] sm:$0xff]
    %v1347 = vld [vmem:[#allocation8 + $0x640] sm:$0xff]
    %v1348 = vld [vmem:[#allocation8 + $0x648] sm:$0xff]
    %v1349 = vld [vmem:[#allocation8 + $0x650] sm:$0xff]
    %v1350 = vld [vmem:[#allocation8 + $0x658] sm:$0xff]
    %v1351 = vld [vmem:[#allocation8 + $0x660] sm:$0xff]
    %v1352 = vld [vmem:[#allocation8 + $0x668] sm:$0xff]
    %v1353 = vld [vmem:[#allocation8 + $0x670] sm:$0xff]
    %v1354 = vld [vmem:[#allocation8 + $0x678] sm:$0xff]
    %v1355 = vld [vmem:[#allocation8 + $0x680] sm:$0xff]
    %v1356 = vld [vmem:[#allocation8 + $0x688] sm:$0xff]
    %v1357 = vld [vmem:[#allocation8 + $0x690] sm:$0xff]
    %v1358 = vld [vmem:[#allocation8 + $0x698] sm:$0xff]
    %v1359 = vld [vmem:[#allocation8 + $0x6a0] sm:$0xff]
    %v1360 = vld [vmem:[#allocation8 + $0x6a8] sm:$0xff]
    %v1361 = vld [vmem:[#allocation8 + $0x6b0] sm:$0xff]
    %v1362 = vld [vmem:[#allocation8 + $0x6b8] sm:$0xff]
    %v1363 = vld [vmem:[#allocation8 + $0x6c0] sm:$0xff]
    %v1364 = vld [vmem:[#allocation8 + $0x6c8] sm:$0xff]
    %v1365 = vld [vmem:[#allocation8 + $0x6d0] sm:$0xff]
    %v1366 = vld [vmem:[#allocation8 + $0x6d8] sm:$0xff]
    %v1367 = vld [vmem:[#allocation8 + $0x6e0] sm:$0xff]
    %v1368 = vld [vmem:[#allocation8 + $0x6e8] sm:$0xff]
    %v1369 = vld [vmem:[#allocation8 + $0x6f0] sm:$0xff]
    %v1370 = vld [vmem:[#allocation8 + $0x6f8] sm:$0xff]
    %v1371 = vld [vmem:[#allocation8 + $0x700] sm:$0xff]
    %v1372 = vld [vmem:[#allocation8 + $0x708] sm:$0xff]
    %v1373 = vld [vmem:[#allocation8 + $0x710] sm:$0xff]
    %v1374 = vld [vmem:[#allocation8 + $0x718] sm:$0xff]
    %v1375 = vld [vmem:[#allocation8 + $0x720] sm:$0xff]
    %v1376 = vld [vmem:[#allocation8 + $0x728] sm:$0xff]
    %v1377 = vld [vmem:[#allocation8 + $0x730] sm:$0xff]
    %v1378 = vld [vmem:[#allocation8 + $0x738] sm:$0xff]
    %v1379 = vld [vmem:[#allocation8 + $0x740] sm:$0xff]
    %v1380 = vld [vmem:[#allocation8 + $0x748] sm:$0xff]
    %v1381 = vld [vmem:[#allocation8 + $0x750] sm:$0xff]
    %v1382 = vld [vmem:[#allocation8 + $0x758] sm:$0xff]
    %v1383 = vld [vmem:[#allocation8 + $0x760] sm:$0xff]
    %v1384 = vld [vmem:[#allocation8 + $0x768] sm:$0xff]
    %v1385 = vld [vmem:[#allocation8 + $0x770] sm:$0xff]
    %v1386 = vld [vmem:[#allocation8 + $0x778] sm:$0xff]
    %v1387 = vld [vmem:[#allocation8 + $0x780] sm:$0xff]
    %v1388 = vld [vmem:[#allocation8 + $0x788] sm:$0xff]
    %v1389 = vld [vmem:[#allocation8 + $0x790] sm:$0xff]
    %v1390 = vld [vmem:[#allocation8 + $0x798] sm:$0xff]
    %v1391 = vld [vmem:[#allocation8 + $0x7a0] sm:$0xff]
    %v1392 = vld [vmem:[#allocation8 + $0x7a8] sm:$0xff]
    %v1393 = vld [vmem:[#allocation8 + $0x7b0] sm:$0xff]
    %v1394 = vld [vmem:[#allocation8 + $0x7b8] sm:$0xff]
    %v1395 = vld [vmem:[#allocation8 + $0x7c0] sm:$0xff]
    %v1396 = vld [vmem:[#allocation8 + $0x7c8] sm:$0xff]
    %v1397 = vld [vmem:[#allocation8 + $0x7d0] sm:$0xff]
    %v1398 = vld [vmem:[#allocation8 + $0x7d8] sm:$0xff]
    %v1399 = vld [vmem:[#allocation8 + $0x7e0] sm:$0xff]
    %v1400 = vld [vmem:[#allocation8 + $0x7e8] sm:$0xff]
    %v1401 = vld [vmem:[#allocation8 + $0x7f0] sm:$0xff]
    %v1402 = vld [vmem:[#allocation8 + $0x7f8] sm:$0xff]
    %v1403 = vld [vmem:[#allocation8 + $0x800] sm:$0xff]
    %v1404 = vld [vmem:[#allocation8 + $0x808] sm:$0xff]
    %v1405 = vld [vmem:[#allocation8 + $0x810] sm:$0xff]
    %v1406 = vld [vmem:[#allocation8 + $0x818] sm:$0xff]
    %v1407 = vld [vmem:[#allocation8 + $0x820] sm:$0xff]
    %v1408 = vld [vmem:[#allocation8 + $0x828] sm:$0xff]
    %v1409 = vld [vmem:[#allocation8 + $0x830] sm:$0xff]
    %v1410 = vld [vmem:[#allocation8 + $0x838] sm:$0xff]
    %v1411 = vld [vmem:[#allocation8 + $0x840] sm:$0xff]
    %v1412 = vld [vmem:[#allocation8 + $0x848] sm:$0xff]
    %v1413 = vld [vmem:[#allocation8 + $0x850] sm:$0xff]
    %v1414 = vld [vmem:[#allocation8 + $0x858] sm:$0xff]
    %v1415 = vld [vmem:[#allocation8 + $0x860] sm:$0xff]
    %v1416 = vld [vmem:[#allocation8 + $0x868] sm:$0xff]
    %v1417 = vld [vmem:[#allocation8 + $0x870] sm:$0xff]
    %v1418 = vld [vmem:[#allocation8 + $0x878] sm:$0xff]
    %v1419 = vld [vmem:[#allocation8 + $0x880] sm:$0xff]
    %v1420 = vld [vmem:[#allocation8 + $0x888] sm:$0xff]
    %v1421 = vld [vmem:[#allocation8 + $0x890] sm:$0xff]
    %v1422 = vld [vmem:[#allocation8 + $0x898] sm:$0xff]
    %v1423 = vld [vmem:[#allocation8 + $0x8a0] sm:$0xff]
    %v1424 = vld [vmem:[#allocation8 + $0x8a8] sm:$0xff]
    %v1425 = vld [vmem:[#allocation8 + $0x8b0] sm:$0xff]
    %v1426 = vld [vmem:[#allocation8 + $0x8b8] sm:$0xff]
    %v1427 = vld [vmem:[#allocation8 + $0x8c0] sm:$0xff]
    %v1428 = vld [vmem:[#allocation8 + $0x8c8] sm:$0xff]
    %v1429 = vld [vmem:[#allocation8 + $0x8d0] sm:$0xff]
    %v1430 = vld [vmem:[#allocation8 + $0x8d8] sm:$0xff]
    %v1431 = vld [vmem:[#allocation8 + $0x8e0] sm:$0xff]
    %v1432 = vld [vmem:[#allocation8 + $0x8e8] sm:$0xff]
    %v1433 = vld [vmem:[#allocation8 + $0x8f0] sm:$0xff]
    %v1434 = vld [vmem:[#allocation8 + $0x8f8] sm:$0xff]
    %v1435 = vld [vmem:[#allocation8 + $0x900] sm:$0xff]
    %v1436 = vld [vmem:[#allocation8 + $0x908] sm:$0xff]
    %v1437 = vld [vmem:[#allocation8 + $0x910] sm:$0xff]
    %v1438 = vld [vmem:[#allocation8 + $0x918] sm:$0xff]
    %v1439 = vld [vmem:[#allocation8 + $0x920] sm:$0xff]
    %v1440 = vld [vmem:[#allocation8 + $0x928] sm:$0xff]
    %v1441 = vld [vmem:[#allocation8 + $0x930] sm:$0xff]
    %v1442 = vld [vmem:[#allocation8 + $0x938] sm:$0xff]
    %v1443 = vld [vmem:[#allocation8 + $0x940] sm:$0xff]
    %v1444 = vld [vmem:[#allocation8 + $0x948] sm:$0xff]
    %v1445 = vld [vmem:[#allocation8 + $0x950] sm:$0xff]
    %v1446 = vld [vmem:[#allocation8 + $0x958] sm:$0xff]
    %v1447 = vld [vmem:[#allocation8 + $0x960] sm:$0xff]
    %v1448 = vld [vmem:[#allocation8 + $0x968] sm:$0xff]
    %v1449 = vld [vmem:[#allocation8 + $0x970] sm:$0xff]
    %v1450 = vld [vmem:[#allocation8 + $0x978] sm:$0xff]
    %v1451 = vld [vmem:[#allocation8 + $0x980] sm:$0xff]
    %v1452 = vld [vmem:[#allocation8 + $0x988] sm:$0xff]
    %v1453 = vld [vmem:[#allocation8 + $0x990] sm:$0xff]
    %v1454 = vld [vmem:[#allocation8 + $0x998] sm:$0xff]
    %v1455 = vld [vmem:[#allocation8 + $0x9a0] sm:$0xff]
    %v1456 = vld [vmem:[#allocation8 + $0x9a8] sm:$0xff]
    %v1457 = vld [vmem:[#allocation8 + $0x9b0] sm:$0xff]
    %v1458 = vld [vmem:[#allocation8 + $0x9b8] sm:$0xff]
    %v1459 = vld [vmem:[#allocation8 + $0x9c0] sm:$0xff]
    %v1460 = vld [vmem:[#allocation8 + $0x9c8] sm:$0xff]
    %v1461 = vld [vmem:[#allocation8 + $0x9d0] sm:$0xff]
    %v1462 = vld [vmem:[#allocation8 + $0x9d8] sm:$0xff]
    %v1463 = vld [vmem:[#allocation8 + $0x9e0] sm:$0xff]
    %v1464 = vld [vmem:[#allocation8 + $0x9e8] sm:$0xff]
    %v1465 = vld [vmem:[#allocation8 + $0x9f0] sm:$0xff]
    %v1466 = vld [vmem:[#allocation8 + $0x9f8] sm:$0xff]
    %v1467 = vld [vmem:[#allocation8 + $0xa00] sm:$0xff]
    %v1468 = vld [vmem:[#allocation8 + $0xa08] sm:$0xff]
    %v1469 = vld [vmem:[#allocation8 + $0xa10] sm:$0xff]
    %v1470 = vld [vmem:[#allocation8 + $0xa18] sm:$0xff]
    %v1471 = vld [vmem:[#allocation8 + $0xa20] sm:$0xff]
    %v1472 = vld [vmem:[#allocation8 + $0xa28] sm:$0xff]
    %v1473 = vld [vmem:[#allocation8 + $0xa30] sm:$0xff]
    %v1474 = vld [vmem:[#allocation8 + $0xa38] sm:$0xff]
    %v1475 = vld [vmem:[#allocation8 + $0xa40] sm:$0xff]
    %v1476 = vld [vmem:[#allocation8 + $0xa48] sm:$0xff]
    %v1477 = vld [vmem:[#allocation8 + $0xa50] sm:$0xff]
    %v1478 = vld [vmem:[#allocation8 + $0xa58] sm:$0xff]
    %v1479 = vld [vmem:[#allocation8 + $0xa60] sm:$0xff]
    %v1480 = vld [vmem:[#allocation8 + $0xa68] sm:$0xff]
    %v1481 = vld [vmem:[#allocation8 + $0xa70] sm:$0xff]
    %v1482 = vld [vmem:[#allocation8 + $0xa78] sm:$0xff]
    %v1483 = vld [vmem:[#allocation8 + $0xa80] sm:$0xff]
    %v1484 = vld [vmem:[#allocation8 + $0xa88] sm:$0xff]
    %v1485 = vld [vmem:[#allocation8 + $0xa90] sm:$0xff]
    %v1486 = vld [vmem:[#allocation8 + $0xa98] sm:$0xff]
    %v1487 = vld [vmem:[#allocation8 + $0xaa0] sm:$0xff]
    %v1488 = vld [vmem:[#allocation8 + $0xaa8] sm:$0xff]
    %v1489 = vld [vmem:[#allocation8 + $0xab0] sm:$0xff]
    %v1490 = vld [vmem:[#allocation8 + $0xab8] sm:$0xff]
    %v1491 = vld [vmem:[#allocation8 + $0xac0] sm:$0xff]
    %v1492 = vld [vmem:[#allocation8 + $0xac8] sm:$0xff]
    %v1493 = vld [vmem:[#allocation8 + $0xad0] sm:$0xff]
    %v1494 = vld [vmem:[#allocation8 + $0xad8] sm:$0xff]
    %v1495 = vld [vmem:[#allocation8 + $0xae0] sm:$0xff]
    %v1496 = vld [vmem:[#allocation8 + $0xae8] sm:$0xff]
    %v1497 = vld [vmem:[#allocation8 + $0xaf0] sm:$0xff]
    %v1498 = vld [vmem:[#allocation8 + $0xaf8] sm:$0xff]
    %v1499 = vld [vmem:[#allocation8 + $0xb00] sm:$0xff]
    %v1500 = vld [vmem:[#allocation8 + $0xb08] sm:$0xff]
    %v1501 = vld [vmem:[#allocation8 + $0xb10] sm:$0xff]
    %v1502 = vld [vmem:[#allocation8 + $0xb18] sm:$0xff]
    %v1503 = vld [vmem:[#allocation8 + $0xb20] sm:$0xff]
    %v1504 = vld [vmem:[#allocation8 + $0xb28] sm:$0xff]
    %v1505 = vld [vmem:[#allocation8 + $0xb30] sm:$0xff]
    %v1506 = vld [vmem:[#allocation8 + $0xb38] sm:$0xff]
    %v1507 = vld [vmem:[#allocation8 + $0xb40] sm:$0xff]
    %v1508 = vld [vmem:[#allocation8 + $0xb48] sm:$0xff]
    %v1509 = vld [vmem:[#allocation8 + $0xb50] sm:$0xff]
    %v1510 = vld [vmem:[#allocation8 + $0xb58] sm:$0xff]
    %v1511 = vld [vmem:[#allocation8 + $0xb60] sm:$0xff]
    %v1512 = vld [vmem:[#allocation8 + $0xb68] sm:$0xff]
    %v1513 = vld [vmem:[#allocation8 + $0xb70] sm:$0xff]
    %v1514 = vld [vmem:[#allocation8 + $0xb78] sm:$0xff]
    %v1515 = vld [vmem:[#allocation8 + $0xb80] sm:$0xff]
    %v1516 = vld [vmem:[#allocation8 + $0xb88] sm:$0xff]
    %v1517 = vld [vmem:[#allocation8 + $0xb90] sm:$0xff]
    %v1518 = vld [vmem:[#allocation8 + $0xb98] sm:$0xff]
    %v1519 = vld [vmem:[#allocation8 + $0xba0] sm:$0xff]
    %v1520 = vld [vmem:[#allocation8 + $0xba8] sm:$0xff]
    %v1521 = vld [vmem:[#allocation8 + $0xbb0] sm:$0xff]
    %v1522 = vld [vmem:[#allocation8 + $0xbb8] sm:$0xff]
    %v1523 = vld [vmem:[#allocation8 + $0xbc0] sm:$0xff]
    %v1524 = vld [vmem:[#allocation8 + $0xbc8] sm:$0xff]
    %v1525 = vld [vmem:[#allocation8 + $0xbd0] sm:$0xff]
    %v1526 = vld [vmem:[#allocation8 + $0xbd8] sm:$0xff]
    %v1527 = vld [vmem:[#allocation8 + $0xbe0] sm:$0xff]
    %v1528 = vld [vmem:[#allocation8 + $0xbe8] sm:$0xff]
    %v1529 = vld [vmem:[#allocation8 + $0xbf0] sm:$0xff]
    %v1530 = vld [vmem:[#allocation8 + $0xbf8] sm:$0xff]
    %v1531 = vld [vmem:[#allocation8 + $0xc00] sm:$0xff]
    %v1532 = vld [vmem:[#allocation8 + $0xc08] sm:$0xff]
    %v1533 = vld [vmem:[#allocation8 + $0xc10] sm:$0xff]
    %v1534 = vld [vmem:[#allocation8 + $0xc18] sm:$0xff]
    %v1535 = vld [vmem:[#allocation8 + $0xc20] sm:$0xff]
    %v1536 = vld [vmem:[#allocation8 + $0xc28] sm:$0xff]
    %v1537 = vld [vmem:[#allocation8 + $0xc30] sm:$0xff]
    %v1538 = vld [vmem:[#allocation8 + $0xc38] sm:$0xff]
    %v1539 = vld [vmem:[#allocation8 + $0xc40] sm:$0xff]
    %v1540 = vld [vmem:[#allocation8 + $0xc48] sm:$0xff]
    %v1541 = vld [vmem:[#allocation8 + $0xc50] sm:$0xff]
    %v1542 = vld [vmem:[#allocation8 + $0xc58] sm:$0xff]
    %v1543 = vld [vmem:[#allocation8 + $0xc60] sm:$0xff]
    %v1544 = vld [vmem:[#allocation8 + $0xc68] sm:$0xff]
    %v1545 = vld [vmem:[#allocation8 + $0xc70] sm:$0xff]
    %v1546 = vld [vmem:[#allocation8 + $0xc78] sm:$0xff]
    %v1547 = vld [vmem:[#allocation8 + $0xc80] sm:$0xff]
    %v1548 = vld [vmem:[#allocation8 + $0xc88] sm:$0xff]
    %v1549 = vld [vmem:[#allocation8 + $0xc90] sm:$0xff]
    %v1550 = vld [vmem:[#allocation8 + $0xc98] sm:$0xff]
    %v1551 = vld [vmem:[#allocation8 + $0xca0] sm:$0xff]
    %v1552 = vld [vmem:[#allocation8 + $0xca8] sm:$0xff]
    %v1553 = vld [vmem:[#allocation8 + $0xcb0] sm:$0xff]
    %v1554 = vld [vmem:[#allocation8 + $0xcb8] sm:$0xff]
    %v1555 = vld [vmem:[#allocation8 + $0xcc0] sm:$0xff]
    %v1556 = vld [vmem:[#allocation8 + $0xcc8] sm:$0xff]
    %v1557 = vld [vmem:[#allocation8 + $0xcd0] sm:$0xff]
    %v1558 = vld [vmem:[#allocation8 + $0xcd8] sm:$0xff]
    %v1559 = vld [vmem:[#allocation8 + $0xce0] sm:$0xff]
    %v1560 = vld [vmem:[#allocation8 + $0xce8] sm:$0xff]
    %v1561 = vld [vmem:[#allocation8 + $0xcf0] sm:$0xff]
    %v1562 = vld [vmem:[#allocation8 + $0xcf8] sm:$0xff]
    %v1563 = vld [vmem:[#allocation8 + $0xd00] sm:$0xff]
    %v1564 = vld [vmem:[#allocation8 + $0xd08] sm:$0xff]
    %v1565 = vld [vmem:[#allocation8 + $0xd10] sm:$0xff]
    %v1566 = vld [vmem:[#allocation8 + $0xd18] sm:$0xff]
    %v1567 = vld [vmem:[#allocation8 + $0xd20] sm:$0xff]
    %v1568 = vld [vmem:[#allocation8 + $0xd28] sm:$0xff]
    %v1569 = vld [vmem:[#allocation8 + $0xd30] sm:$0xff]
    %v1570 = vld [vmem:[#allocation8 + $0xd38] sm:$0xff]
    %v1571 = vld [vmem:[#allocation8 + $0xd40] sm:$0xff]
    %v1572 = vld [vmem:[#allocation8 + $0xd48] sm:$0xff]
    %v1573 = vld [vmem:[#allocation8 + $0xd50] sm:$0xff]
    %v1574 = vld [vmem:[#allocation8 + $0xd58] sm:$0xff]
    %v1575 = vld [vmem:[#allocation8 + $0xd60] sm:$0xff]
    %v1576 = vld [vmem:[#allocation8 + $0xd68] sm:$0xff]
    %v1577 = vld [vmem:[#allocation8 + $0xd70] sm:$0xff]
    %v1578 = vld [vmem:[#allocation8 + $0xd78] sm:$0xff]
    %v1579 = vld [vmem:[#allocation8 + $0xd80] sm:$0xff]
    %v1580 = vld [vmem:[#allocation8 + $0xd88] sm:$0xff]
    %v1581 = vld [vmem:[#allocation8 + $0xd90] sm:$0xff]
    %v1582 = vld [vmem:[#allocation8 + $0xd98] sm:$0xff]
    %v1583 = vld [vmem:[#allocation8 + $0xda0] sm:$0xff]
    %v1584 = vld [vmem:[#allocation8 + $0xda8] sm:$0xff]
    %v1585 = vld [vmem:[#allocation8 + $0xdb0] sm:$0xff]
    %v1586 = vld [vmem:[#allocation8 + $0xdb8] sm:$0xff]
    %v1587 = vld [vmem:[#allocation8 + $0xdc0] sm:$0xff]
    %v1588 = vld [vmem:[#allocation8 + $0xdc8] sm:$0xff]
    %v1589 = vld [vmem:[#allocation8 + $0xdd0] sm:$0xff]
    %v1590 = vld [vmem:[#allocation8 + $0xdd8] sm:$0xff]
    %v1591 = vld [vmem:[#allocation8 + $0xde0] sm:$0xff]
    %v1592 = vld [vmem:[#allocation8 + $0xde8] sm:$0xff]
    %v1593 = vld [vmem:[#allocation8 + $0xdf0] sm:$0xff]
    %v1594 = vld [vmem:[#allocation8 + $0xdf8] sm:$0xff]
    %v1595 = vld [vmem:[#allocation8 + $0xe00] sm:$0xff]
    %v1596 = vld [vmem:[#allocation8 + $0xe08] sm:$0xff]
    %v1597 = vld [vmem:[#allocation8 + $0xe10] sm:$0xff]
    %v1598 = vld [vmem:[#allocation8 + $0xe18] sm:$0xff]
    %v1599 = vld [vmem:[#allocation8 + $0xe20] sm:$0xff]
    %v1600 = vld [vmem:[#allocation8 + $0xe28] sm:$0xff]
    %v1601 = vld [vmem:[#allocation8 + $0xe30] sm:$0xff]
    %v1602 = vld [vmem:[#allocation8 + $0xe38] sm:$0xff]
    %v1603 = vld [vmem:[#allocation8 + $0xe40] sm:$0xff]
    %v1604 = vld [vmem:[#allocation8 + $0xe48] sm:$0xff]
    %v1605 = vld [vmem:[#allocation8 + $0xe50] sm:$0xff]
    %v1606 = vld [vmem:[#allocation8 + $0xe58] sm:$0xff]
    %v1607 = vld [vmem:[#allocation8 + $0xe60] sm:$0xff]
    %v1608 = vld [vmem:[#allocation8 + $0xe68] sm:$0xff]
    %v1609 = vld [vmem:[#allocation8 + $0xe70] sm:$0xff]
    %v1610 = vld [vmem:[#allocation8 + $0xe78] sm:$0xff]
    %v1611 = vld [vmem:[#allocation8 + $0xe80] sm:$0xff]
    %v1612 = vld [vmem:[#allocation8 + $0xe88] sm:$0xff]
    %v1613 = vld [vmem:[#allocation8 + $0xe90] sm:$0xff]
    %v1614 = vld [vmem:[#allocation8 + $0xe98] sm:$0xff]
    %v1615 = vld [vmem:[#allocation8 + $0xea0] sm:$0xff]
    %v1616 = vld [vmem:[#allocation8 + $0xea8] sm:$0xff]
    %v1617 = vld [vmem:[#allocation8 + $0xeb0] sm:$0xff]
    %v1618 = vld [vmem:[#allocation8 + $0xeb8] sm:$0xff]
    %v1619 = vld [vmem:[#allocation8 + $0xec0] sm:$0xff]
    %v1620 = vld [vmem:[#allocation8 + $0xec8] sm:$0xff]
    %v1621 = vld [vmem:[#allocation8 + $0xed0] sm:$0xff]
    %v1622 = vld [vmem:[#allocation8 + $0xed8] sm:$0xff]
    %v1623 = vld [vmem:[#allocation8 + $0xee0] sm:$0xff]
    %v1624 = vld [vmem:[#allocation8 + $0xee8] sm:$0xff]
    %v1625 = vld [vmem:[#allocation8 + $0xef0] sm:$0xff]
    %v1626 = vld [vmem:[#allocation8 + $0xef8] sm:$0xff]
    %v1627 = vld [vmem:[#allocation8 + $0xf00] sm:$0xff]
    %v1628 = vld [vmem:[#allocation8 + $0xf08] sm:$0xff]
    %v1629 = vld [vmem:[#allocation8 + $0xf10] sm:$0xff]
    %v1630 = vld [vmem:[#allocation8 + $0xf18] sm:$0xff]
    %v1631 = vld [vmem:[#allocation8 + $0xf20] sm:$0xff]
    %v1632 = vld [vmem:[#allocation8 + $0xf28] sm:$0xff]
    %v1633 = vld [vmem:[#allocation8 + $0xf30] sm:$0xff]
    %v1634 = vld [vmem:[#allocation8 + $0xf38] sm:$0xff]
    %v1635 = vld [vmem:[#allocation8 + $0xf40] sm:$0xff]
    %v1636 = vld [vmem:[#allocation8 + $0xf48] sm:$0xff]
    %v1637 = vld [vmem:[#allocation8 + $0xf50] sm:$0xff]
    %v1638 = vld [vmem:[#allocation8 + $0xf58] sm:$0xff]
    %v1639 = vld [vmem:[#allocation8 + $0xf60] sm:$0xff]
    %v1640 = vld [vmem:[#allocation8 + $0xf68] sm:$0xff]
    %v1641 = vld [vmem:[#allocation8 + $0xf70] sm:$0xff]
    %v1642 = vld [vmem:[#allocation8 + $0xf78] sm:$0xff]
    %v1643 = vld [vmem:[#allocation8 + $0xf80] sm:$0xff]
    %v1644 = vld [vmem:[#allocation8 + $0xf88] sm:$0xff]
    %v1645 = vld [vmem:[#allocation8 + $0xf90] sm:$0xff]
    %v1646 = vld [vmem:[#allocation8 + $0xf98] sm:$0xff]
    %v1647 = vld [vmem:[#allocation8 + $0xfa0] sm:$0xff]
    %v1648 = vld [vmem:[#allocation8 + $0xfa8] sm:$0xff]
    %v1649 = vld [vmem:[#allocation8 + $0xfb0] sm:$0xff]
    %v1650 = vld [vmem:[#allocation8 + $0xfb8] sm:$0xff]
    %v1651 = vld [vmem:[#allocation8 + $0xfc0] sm:$0xff]
    %v1652 = vld [vmem:[#allocation8 + $0xfc8] sm:$0xff]
    %v1653 = vld [vmem:[#allocation8 + $0xfd0] sm:$0xff]
    %v1654 = vld [vmem:[#allocation8 + $0xfd8] sm:$0xff]
    %v1655 = vld [vmem:[#allocation8 + $0xfe0] sm:$0xff]
    %v1656 = vld [vmem:[#allocation8 + $0xfe8] sm:$0xff]
    %v1657 = vld [vmem:[#allocation8 + $0xff0] sm:$0xff]
    %v1658 = vld [vmem:[#allocation8 + $0xff8] sm:$0xff]
    %v1659 = vld [vmem:[#allocation9] sm:$0x1]
    %v1661 = vlaneseq
    %v1662 = vshrl.u32 %v1661, 7
    %v1663 = vsub.s32 0, %v1662
    %v1664 = vrot.slane %v1659, %v1663
    %v1674 = vcombine.high %v1139, %v1139
    %v1676 = vunpack.c.l.s4 1983009808
    %v1677 = vunpack.c.0.s8 %v1676
    %v1678 = vlaneseq
    %v1679 = vshrl.u32 %v1678, 7
    %v1680 = vsub.s32 %v1677, %v1679
    %v1681 = vrot.slane %v1139, %v1680
    %v1683 = vunpack.c.l.s4 1983009808
    %v1684 = vunpack.c.0.s8 %v1683
    %v1685 = vlaneseq
    %v1686 = vshrl.u32 %v1685, 7
    %v1687 = vsub.s32 %v1684, %v1686
    %v1688 = vrot.slane %v1674, %v1687
    %v1689 = vcombine.high %v1681, %v1681
    %v1690 = vcombine.high %v1688, %v1688
    %v1691 = vcombine.high %v1140, %v1140
    %v1693 = vunpack.c.l.s4 1983009808
    %v1694 = vunpack.c.0.s8 %v1693
    %v1695 = vlaneseq
    %v1696 = vshrl.u32 %v1695, 7
    %v1697 = vsub.s32 %v1694, %v1696
    %v1698 = vrot.slane %v1140, %v1697
    %v1700 = vunpack.c.l.s4 1983009808
    %v1701 = vunpack.c.0.s8 %v1700
    %v1702 = vlaneseq
    %v1703 = vshrl.u32 %v1702, 7
    %v1704 = vsub.s32 %v1701, %v1703
    %v1705 = vrot.slane %v1691, %v1704
    %v1706 = vcombine.high %v1698, %v1698
    %v1707 = vcombine.high %v1705, %v1705
    %v1708 = vcombine.high %v1141, %v1141
    %v1710 = vunpack.c.l.s4 1983009808
    %v1711 = vunpack.c.0.s8 %v1710
    %v1712 = vlaneseq
    %v1713 = vshrl.u32 %v1712, 7
    %v1714 = vsub.s32 %v1711, %v1713
    %v1715 = vrot.slane %v1141, %v1714
    %v1717 = vunpack.c.l.s4 1983009808
    %v1718 = vunpack.c.0.s8 %v1717
    %v1719 = vlaneseq
    %v1720 = vshrl.u32 %v1719, 7
    %v1721 = vsub.s32 %v1718, %v1720
    %v1722 = vrot.slane %v1708, %v1721
    %v1723 = vcombine.high %v1715, %v1715
    %v1724 = vcombine.high %v1722, %v1722
    %v1725 = vcombine.high %v1142, %v1142
    %v1727 = vunpack.c.l.s4 1983009808
    %v1728 = vunpack.c.0.s8 %v1727
    %v1729 = vlaneseq
    %v1730 = vshrl.u32 %v1729, 7
    %v1731 = vsub.s32 %v1728, %v1730
    %v1732 = vrot.slane %v1142, %v1731
    %v1734 = vunpack.c.l.s4 1983009808
    %v1735 = vunpack.c.0.s8 %v1734
    %v1736 = vlaneseq
    %v1737 = vshrl.u32 %v1736, 7
    %v1738 = vsub.s32 %v1735, %v1737
    %v1739 = vrot.slane %v1725, %v1738
    %v1740 = vcombine.high %v1732, %v1732
    %v1741 = vcombine.high %v1739, %v1739
    %v1742 = vcombine.high %v1143, %v1143
    %v1744 = vunpack.c.l.s4 1983009808
    %v1745 = vunpack.c.0.s8 %v1744
    %v1746 = vlaneseq
    %v1747 = vshrl.u32 %v1746, 7
    %v1748 = vsub.s32 %v1745, %v1747
    %v1749 = vrot.slane %v1143, %v1748
    %v1751 = vunpack.c.l.s4 1983009808
    %v1752 = vunpack.c.0.s8 %v1751
    %v1753 = vlaneseq
    %v1754 = vshrl.u32 %v1753, 7
    %v1755 = vsub.s32 %v1752, %v1754
    %v1756 = vrot.slane %v1742, %v1755
    %v1757 = vcombine.high %v1749, %v1749
    %v1758 = vcombine.high %v1756, %v1756
    %v1759 = vcombine.high %v1144, %v1144
    %v1761 = vunpack.c.l.s4 1983009808
    %v1762 = vunpack.c.0.s8 %v1761
    %v1763 = vlaneseq
    %v1764 = vshrl.u32 %v1763, 7
    %v1765 = vsub.s32 %v1762, %v1764
    %v1766 = vrot.slane %v1144, %v1765
    %v1768 = vunpack.c.l.s4 1983009808
    %v1769 = vunpack.c.0.s8 %v1768
    %v1770 = vlaneseq
    %v1771 = vshrl.u32 %v1770, 7
    %v1772 = vsub.s32 %v1769, %v1771
    %v1773 = vrot.slane %v1759, %v1772
    %v1774 = vcombine.high %v1766, %v1766
    %v1775 = vcombine.high %v1773, %v1773
    %v1776 = vcombine.high %v1145, %v1145
    %v1778 = vunpack.c.l.s4 1983009808
    %v1779 = vunpack.c.0.s8 %v1778
    %v1780 = vlaneseq
    %v1781 = vshrl.u32 %v1780, 7
    %v1782 = vsub.s32 %v1779, %v1781
    %v1783 = vrot.slane %v1145, %v1782
    %v1785 = vunpack.c.l.s4 1983009808
    %v1786 = vunpack.c.0.s8 %v1785
    %v1787 = vlaneseq
    %v1788 = vshrl.u32 %v1787, 7
    %v1789 = vsub.s32 %v1786, %v1788
    %v1790 = vrot.slane %v1776, %v1789
    %v1791 = vcombine.high %v1783, %v1783
    %v1792 = vcombine.high %v1790, %v1790
    %v1793 = vcombine.high %v1146, %v1146
    %v1795 = vunpack.c.l.s4 1983009808
    %v1796 = vunpack.c.0.s8 %v1795
    %v1797 = vlaneseq
    %v1798 = vshrl.u32 %v1797, 7
    %v1799 = vsub.s32 %v1796, %v1798
    %v1800 = vrot.slane %v1146, %v1799
    %v1802 = vunpack.c.l.s4 1983009808
    %v1803 = vunpack.c.0.s8 %v1802
    %v1804 = vlaneseq
    %v1805 = vshrl.u32 %v1804, 7
    %v1806 = vsub.s32 %v1803, %v1805
    %v1807 = vrot.slane %v1793, %v1806
    %v1808 = vcombine.high %v1800, %v1800
    %v1809 = vcombine.high %v1807, %v1807
    %1842 = vmatprep.subr.mxu0 0.0
    %1843 = vmatpush1.msra.mxu0 %v1147
    %1844 = vmatprep.subr.mxu0 0.0
    %1845 = vmatpush1.msra.mxu0 %v1148
    %1846 = vmatprep.subr.mxu0 0.0
    %1847 = vmatpush1.msra.mxu0 %v1149
    %1848 = vmatprep.subr.mxu0 0.0
    %1849 = vmatpush1.msra.mxu0 %v1150
    %1850 = vmatprep.subr.mxu0 0.0
    %1851 = vmatpush1.msra.mxu0 %v1151
    %1852 = vmatprep.subr.mxu0 0.0
    %1853 = vmatpush1.msra.mxu0 %v1152
    %1854 = vmatprep.subr.mxu0 0.0
    %1855 = vmatpush1.msra.mxu0 %v1153
    %1856 = vmatprep.subr.mxu0 0.0
    %1857 = vmatpush1.msra.mxu0 %v1154
    %1858 = vmatprep.subr.mxu0 0.0
    %1859 = vmatpush1.msra.mxu0 %v1155
    %1860 = vmatprep.subr.mxu0 0.0
    %1861 = vmatpush1.msra.mxu0 %v1156
    %1862 = vmatprep.subr.mxu0 0.0
    %1863 = vmatpush1.msra.mxu0 %v1157
    %1864 = vmatprep.subr.mxu0 0.0
    %1865 = vmatpush1.msra.mxu0 %v1158
    %1866 = vmatprep.subr.mxu0 0.0
    %1867 = vmatpush1.msra.mxu0 %v1159
    %1868 = vmatprep.subr.mxu0 0.0
    %1869 = vmatpush1.msra.mxu0 %v1160
    %1870 = vmatprep.subr.mxu0 0.0
    %1871 = vmatpush1.msra.mxu0 %v1161
    %1872 = vmatprep.subr.mxu0 0.0
    %1873 = vmatpush1.msra.mxu0 %v1162
    %1874 = vmatprep.subr.mxu0 0.0
    %1875 = vmatpush1.msra.mxu0 %v1163
    %1876 = vmatprep.subr.mxu0 0.0
    %1877 = vmatpush1.msra.mxu0 %v1164
    %1878 = vmatprep.subr.mxu0 0.0
    %1879 = vmatpush1.msra.mxu0 %v1165
    %1880 = vmatprep.subr.mxu0 0.0
    %1881 = vmatpush1.msra.mxu0 %v1166
    %1882 = vmatprep.subr.mxu0 0.0
    %1883 = vmatpush1.msra.mxu0 %v1167
    %1884 = vmatprep.subr.mxu0 0.0
    %1885 = vmatpush1.msra.mxu0 %v1168
    %1886 = vmatprep.subr.mxu0 0.0
    %1887 = vmatpush1.msra.mxu0 %v1169
    %1888 = vmatprep.subr.mxu0 0.0
    %1889 = vmatpush1.msra.mxu0 %v1170
    %1890 = vmatprep.subr.mxu0 0.0
    %1891 = vmatpush1.msra.mxu0 %v1171
    %1892 = vmatprep.subr.mxu0 0.0
    %1893 = vmatpush1.msra.mxu0 %v1172
    %1894 = vmatprep.subr.mxu0 0.0
    %1895 = vmatpush1.msra.mxu0 %v1173
    %1896 = vmatprep.subr.mxu0 0.0
    %1897 = vmatpush1.msra.mxu0 %v1174
    %1898 = vmatprep.subr.mxu0 0.0
    %1899 = vmatpush1.msra.mxu0 %v1175
    %1900 = vmatprep.subr.mxu0 0.0
    %1901 = vmatpush1.msra.mxu0 %v1176
    %1902 = vmatprep.subr.mxu0 0.0
    %1903 = vmatpush1.msra.mxu0 %v1177
    %1904 = vmatprep.subr.mxu0 0.0
    %1905 = vmatpush1.msra.mxu0 %v1178
    %1906 = vmatprep.mubr.f32.mxu0 %v1689
    %1907 = vmatmul.mubr.f32.gmra.mrb[0].mxu0 %v1681
    %v1908 = vpop.f32.mrb[0].mxu0
    %v1909 = vadd.f32 %v1664, %v1908
    %v1910 = vpop.f32.mrb[0].mxu0
    %1911 = vdwg.mxu0
    %1912 = vmatprep.subr.mxu0 0.0
    %1913 = vmatpush1.msra.mxu0 %v1179
    %1914 = vmatprep.subr.mxu0 0.0
    %1915 = vmatpush1.msra.mxu0 %v1180
    %1916 = vmatprep.subr.mxu0 0.0
    %1917 = vmatpush1.msra.mxu0 %v1181
    %1918 = vmatprep.subr.mxu0 0.0
    %1919 = vmatpush1.msra.mxu0 %v1182
    %1920 = vmatprep.subr.mxu0 0.0
    %1921 = vmatpush1.msra.mxu0 %v1183
    %1922 = vmatprep.subr.mxu0 0.0
    %1923 = vmatpush1.msra.mxu0 %v1184
    %1924 = vmatprep.subr.mxu0 0.0
    %1925 = vmatpush1.msra.mxu0 %v1185
    %1926 = vmatprep.subr.mxu0 0.0
    %1927 = vmatpush1.msra.mxu0 %v1186
    %1928 = vmatprep.subr.mxu0 0.0
    %1929 = vmatpush1.msra.mxu0 %v1187
    %1930 = vmatprep.subr.mxu0 0.0
    %1931 = vmatpush1.msra.mxu0 %v1188
    %1932 = vmatprep.subr.mxu0 0.0
    %1933 = vmatpush1.msra.mxu0 %v1189
    %1934 = vmatprep.subr.mxu0 0.0
    %1935 = vmatpush1.msra.mxu0 %v1190
    %1936 = vmatprep.subr.mxu0 0.0
    %1937 = vmatpush1.msra.mxu0 %v1191
    %1938 = vmatprep.subr.mxu0 0.0
    %1939 = vmatpush1.msra.mxu0 %v1192
    %1940 = vmatprep.subr.mxu0 0.0
    %1941 = vmatpush1.msra.mxu0 %v1193
    %1942 = vmatprep.subr.mxu0 0.0
    %1943 = vmatpush1.msra.mxu0 %v1194
    %1944 = vmatprep.subr.mxu0 0.0
    %1945 = vmatpush1.msra.mxu0 %v1195
    %1946 = vmatprep.subr.mxu0 0.0
    %1947 = vmatpush1.msra.mxu0 %v1196
    %1948 = vmatprep.subr.mxu0 0.0
    %1949 = vmatpush1.msra.mxu0 %v1197
    %1950 = vmatprep.subr.mxu0 0.0
    %1951 = vmatpush1.msra.mxu0 %v1198
    %1952 = vmatprep.subr.mxu0 0.0
    %1953 = vmatpush1.msra.mxu0 %v1199
    %1954 = vmatprep.subr.mxu0 0.0
    %1955 = vmatpush1.msra.mxu0 %v1200
    %1956 = vmatprep.subr.mxu0 0.0
    %1957 = vmatpush1.msra.mxu0 %v1201
    %1958 = vmatprep.subr.mxu0 0.0
    %1959 = vmatpush1.msra.mxu0 %v1202
    %1960 = vmatprep.subr.mxu0 0.0
    %1961 = vmatpush1.msra.mxu0 %v1203
    %1962 = vmatprep.subr.mxu0 0.0
    %1963 = vmatpush1.msra.mxu0 %v1204
    %1964 = vmatprep.subr.mxu0 0.0
    %1965 = vmatpush1.msra.mxu0 %v1205
    %1966 = vmatprep.subr.mxu0 0.0
    %1967 = vmatpush1.msra.mxu0 %v1206
    %1968 = vmatprep.subr.mxu0 0.0
    %1969 = vmatpush1.msra.mxu0 %v1207
    %1970 = vmatprep.subr.mxu0 0.0
    %1971 = vmatpush1.msra.mxu0 %v1208
    %1972 = vmatprep.subr.mxu0 0.0
    %1973 = vmatpush1.msra.mxu0 %v1209
    %1974 = vmatprep.subr.mxu0 0.0
    %1975 = vmatpush1.msra.mxu0 %v1210
    %1976 = vmatprep.mubr.f32.mxu0 %v1690
    %1977 = vmatmul.mubr.f32.gmra.mrb[0].mxu0 %v1688
    %v1978 = vpop.f32.mrb[0].mxu0
    %v1979 = vadd.f32 %v1909, %v1978
    %v1980 = vpop.f32.mrb[0].mxu0
    %1981 = vdwg.mxu0
    %1982 = vmatprep.subr.mxu0 0.0
    %1983 = vmatpush1.msra.mxu0 %v1211
    %1984 = vmatprep.subr.mxu0 0.0
    %1985 = vmatpush1.msra.mxu0 %v1212
    %1986 = vmatprep.subr.mxu0 0.0
    %1987 = vmatpush1.msra.mxu0 %v1213
    %1988 = vmatprep.subr.mxu0 0.0
    %1989 = vmatpush1.msra.mxu0 %v1214
    %1990 = vmatprep.subr.mxu0 0.0
    %1991 = vmatpush1.msra.mxu0 %v1215
    %1992 = vmatprep.subr.mxu0 0.0
    %1993 = vmatpush1.msra.mxu0 %v1216
    %1994 = vmatprep.subr.mxu0 0.0
    %1995 = vmatpush1.msra.mxu0 %v1217
    %1996 = vmatprep.subr.mxu0 0.0
    %1997 = vmatpush1.msra.mxu0 %v1218
    %1998 = vmatprep.subr.mxu0 0.0
    %1999 = vmatpush1.msra.mxu0 %v1219
    %2000 = vmatprep.subr.mxu0 0.0
    %2001 = vmatpush1.msra.mxu0 %v1220
    %2002 = vmatprep.subr.mxu0 0.0
    %2003 = vmatpush1.msra.mxu0 %v1221
    %2004 = vmatprep.subr.mxu0 0.0
    %2005 = vmatpush1.msra.mxu0 %v1222
    %2006 = vmatprep.subr.mxu0 0.0
    %2007 = vmatpush1.msra.mxu0 %v1223
    %2008 = vmatprep.subr.mxu0 0.0
    %2009 = vmatpush1.msra.mxu0 %v1224
    %2010 = vmatprep.subr.mxu0 0.0
    %2011 = vmatpush1.msra.mxu0 %v1225
    %2012 = vmatprep.subr.mxu0 0.0
    %2013 = vmatpush1.msra.mxu0 %v1226
    %2014 = vmatprep.subr.mxu0 0.0
    %2015 = vmatpush1.msra.mxu0 %v1227
    %2016 = vmatprep.subr.mxu0 0.0
    %2017 = vmatpush1.msra.mxu0 %v1228
    %2018 = vmatprep.subr.mxu0 0.0
    %2019 = vmatpush1.msra.mxu0 %v1229
    %2020 = vmatprep.subr.mxu0 0.0
    %2021 = vmatpush1.msra.mxu0 %v1230
    %2022 = vmatprep.subr.mxu0 0.0
    %2023 = vmatpush1.msra.mxu0 %v1231
    %2024 = vmatprep.subr.mxu0 0.0
    %2025 = vmatpush1.msra.mxu0 %v1232
    %2026 = vmatprep.subr.mxu0 0.0
    %2027 = vmatpush1.msra.mxu0 %v1233
    %2028 = vmatprep.subr.mxu0 0.0
    %2029 = vmatpush1.msra.mxu0 %v1234
    %2030 = vmatprep.subr.mxu0 0.0
    %2031 = vmatpush1.msra.mxu0 %v1235
    %2032 = vmatprep.subr.mxu0 0.0
    %2033 = vmatpush1.msra.mxu0 %v1236
    %2034 = vmatprep.subr.mxu0 0.0
    %2035 = vmatpush1.msra.mxu0 %v1237
    %2036 = vmatprep.subr.mxu0 0.0
    %2037 = vmatpush1.msra.mxu0 %v1238
    %2038 = vmatprep.subr.mxu0 0.0
    %2039 = vmatpush1.msra.mxu0 %v1239
    %2040 = vmatprep.subr.mxu0 0.0
    %2041 = vmatpush1.msra.mxu0 %v1240
    %2042 = vmatprep.subr.mxu0 0.0
    %2043 = vmatpush1.msra.mxu0 %v1241
    %2044 = vmatprep.subr.mxu0 0.0
    %2045 = vmatpush1.msra.mxu0 %v1242
    %2046 = vmatprep.mubr.f32.mxu0 %v1706
    %2047 = vmatmul.mubr.f32.gmra.mrb[0].mxu0 %v1698
    %v2048 = vpop.f32.mrb[0].mxu0
    %v2049 = vadd.f32 %v1979, %v2048
    %v2050 = vpop.f32.mrb[0].mxu0
    %2051 = vdwg.mxu0
    %2052 = vmatprep.subr.mxu0 0.0
    %2053 = vmatpush1.msra.mxu0 %v1243
    %2054 = vmatprep.subr.mxu0 0.0
    %2055 = vmatpush1.msra.mxu0 %v1244
    %2056 = vmatprep.subr.mxu0 0.0
    %2057 = vmatpush1.msra.mxu0 %v1245
    %2058 = vmatprep.subr.mxu0 0.0
    %2059 = vmatpush1.msra.mxu0 %v1246
    %2060 = vmatprep.subr.mxu0 0.0
    %2061 = vmatpush1.msra.mxu0 %v1247
    %2062 = vmatprep.subr.mxu0 0.0
    %2063 = vmatpush1.msra.mxu0 %v1248
    %2064 = vmatprep.subr.mxu0 0.0
    %2065 = vmatpush1.msra.mxu0 %v1249
    %2066 = vmatprep.subr.mxu0 0.0
    %2067 = vmatpush1.msra.mxu0 %v1250
    %2068 = vmatprep.subr.mxu0 0.0
    %2069 = vmatpush1.msra.mxu0 %v1251
    %2070 = vmatprep.subr.mxu0 0.0
    %2071 = vmatpush1.msra.mxu0 %v1252
    %2072 = vmatprep.subr.mxu0 0.0
    %2073 = vmatpush1.msra.mxu0 %v1253
    %2074 = vmatprep.subr.mxu0 0.0
    %2075 = vmatpush1.msra.mxu0 %v1254
    %2076 = vmatprep.subr.mxu0 0.0
    %2077 = vmatpush1.msra.mxu0 %v1255
    %2078 = vmatprep.subr.mxu0 0.0
    %2079 = vmatpush1.msra.mxu0 %v1256
    %2080 = vmatprep.subr.mxu0 0.0
    %2081 = vmatpush1.msra.mxu0 %v1257
    %2082 = vmatprep.subr.mxu0 0.0
    %2083 = vmatpush1.msra.mxu0 %v1258
    %2084 = vmatprep.subr.mxu0 0.0
    %2085 = vmatpush1.msra.mxu0 %v1259
    %2086 = vmatprep.subr.mxu0 0.0
    %2087 = vmatpush1.msra.mxu0 %v1260
    %2088 = vmatprep.subr.mxu0 0.0
    %2089 = vmatpush1.msra.mxu0 %v1261
    %2090 = vmatprep.subr.mxu0 0.0
    %2091 = vmatpush1.msra.mxu0 %v1262
    %2092 = vmatprep.subr.mxu0 0.0
    %2093 = vmatpush1.msra.mxu0 %v1263
    %2094 = vmatprep.subr.mxu0 0.0
    %2095 = vmatpush1.msra.mxu0 %v1264
    %2096 = vmatprep.subr.mxu0 0.0
    %2097 = vmatpush1.msra.mxu0 %v1265
    %2098 = vmatprep.subr.mxu0 0.0
    %2099 = vmatpush1.msra.mxu0 %v1266
    %2100 = vmatprep.subr.mxu0 0.0
    %2101 = vmatpush1.msra.mxu0 %v1267
    %2102 = vmatprep.subr.mxu0 0.0
    %2103 = vmatpush1.msra.mxu0 %v1268
    %2104 = vmatprep.subr.mxu0 0.0
    %2105 = vmatpush1.msra.mxu0 %v1269
    %2106 = vmatprep.subr.mxu0 0.0
    %2107 = vmatpush1.msra.mxu0 %v1270
    %2108 = vmatprep.subr.mxu0 0.0
    %2109 = vmatpush1.msra.mxu0 %v1271
    %2110 = vmatprep.subr.mxu0 0.0
    %2111 = vmatpush1.msra.mxu0 %v1272
    %2112 = vmatprep.subr.mxu0 0.0
    %2113 = vmatpush1.msra.mxu0 %v1273
    %2114 = vmatprep.subr.mxu0 0.0
    %2115 = vmatpush1.msra.mxu0 %v1274
    %2116 = vmatprep.mubr.f32.mxu0 %v1707
    %2117 = vmatmul.mubr.f32.gmra.mrb[0].mxu0 %v1705
    %v2118 = vpop.f32.mrb[0].mxu0
    %v2119 = vadd.f32 %v2049, %v2118
    %v2120 = vpop.f32.mrb[0].mxu0
    %2121 = vdwg.mxu0
    %2122 = vmatprep.subr.mxu0 0.0
    %2123 = vmatpush1.msra.mxu0 %v1275
    %2124 = vmatprep.subr.mxu0 0.0
    %2125 = vmatpush1.msra.mxu0 %v1276
    %2126 = vmatprep.subr.mxu0 0.0
    %2127 = vmatpush1.msra.mxu0 %v1277
    %2128 = vmatprep.subr.mxu0 0.0
    %2129 = vmatpush1.msra.mxu0 %v1278
    %2130 = vmatprep.subr.mxu0 0.0
    %2131 = vmatpush1.msra.mxu0 %v1279
    %2132 = vmatprep.subr.mxu0 0.0
    %2133 = vmatpush1.msra.mxu0 %v1280
    %2134 = vmatprep.subr.mxu0 0.0
    %2135 = vmatpush1.msra.mxu0 %v1281
    %2136 = vmatprep.subr.mxu0 0.0
    %2137 = vmatpush1.msra.mxu0 %v1282
    %2138 = vmatprep.subr.mxu0 0.0
    %2139 = vmatpush1.msra.mxu0 %v1283
    %2140 = vmatprep.subr.mxu0 0.0
    %2141 = vmatpush1.msra.mxu0 %v1284
    %2142 = vmatprep.subr.mxu0 0.0
    %2143 = vmatpush1.msra.mxu0 %v1285
    %2144 = vmatprep.subr.mxu0 0.0
    %2145 = vmatpush1.msra.mxu0 %v1286
    %2146 = vmatprep.subr.mxu0 0.0
    %2147 = vmatpush1.msra.mxu0 %v1287
    %2148 = vmatprep.subr.mxu0 0.0
    %2149 = vmatpush1.msra.mxu0 %v1288
    %2150 = vmatprep.subr.mxu0 0.0
    %2151 = vmatpush1.msra.mxu0 %v1289
    %2152 = vmatprep.subr.mxu0 0.0
    %2153 = vmatpush1.msra.mxu0 %v1290
    %2154 = vmatprep.subr.mxu0 0.0
    %2155 = vmatpush1.msra.mxu0 %v1291
    %2156 = vmatprep.subr.mxu0 0.0
    %2157 = vmatpush1.msra.mxu0 %v1292
    %2158 = vmatprep.subr.mxu0 0.0
    %2159 = vmatpush1.msra.mxu0 %v1293
    %2160 = vmatprep.subr.mxu0 0.0
    %2161 = vmatpush1.msra.mxu0 %v1294
    %2162 = vmatprep.subr.mxu0 0.0
    %2163 = vmatpush1.msra.mxu0 %v1295
    %2164 = vmatprep.subr.mxu0 0.0
    %2165 = vmatpush1.msra.mxu0 %v1296
    %2166 = vmatprep.subr.mxu0 0.0
    %2167 = vmatpush1.msra.mxu0 %v1297
    %2168 = vmatprep.subr.mxu0 0.0
    %2169 = vmatpush1.msra.mxu0 %v1298
    %2170 = vmatprep.subr.mxu0 0.0
    %2171 = vmatpush1.msra.mxu0 %v1299
    %2172 = vmatprep.subr.mxu0 0.0
    %2173 = vmatpush1.msra.mxu0 %v1300
    %2174 = vmatprep.subr.mxu0 0.0
    %2175 = vmatpush1.msra.mxu0 %v1301
    %2176 = vmatprep.subr.mxu0 0.0
    %2177 = vmatpush1.msra.mxu0 %v1302
    %2178 = vmatprep.subr.mxu0 0.0
    %2179 = vmatpush1.msra.mxu0 %v1303
    %2180 = vmatprep.subr.mxu0 0.0
    %2181 = vmatpush1.msra.mxu0 %v1304
    %2182 = vmatprep.subr.mxu0 0.0
    %2183 = vmatpush1.msra.mxu0 %v1305
    %2184 = vmatprep.subr.mxu0 0.0
    %2185 = vmatpush1.msra.mxu0 %v1306
    %2186 = vmatprep.mubr.f32.mxu0 %v1723
    %2187 = vmatmul.mubr.f32.gmra.mrb[0].mxu0 %v1715
    %v2188 = vpop.f32.mrb[0].mxu0
    %v2189 = vadd.f32 %v2119, %v2188
    %v2190 = vpop.f32.mrb[0].mxu0
    %2191 = vdwg.mxu0
    %2192 = vmatprep.subr.mxu0 0.0
    %2193 = vmatpush1.msra.mxu0 %v1307
    %2194 = vmatprep.subr.mxu0 0.0
    %2195 = vmatpush1.msra.mxu0 %v1308
    %2196 = vmatprep.subr.mxu0 0.0
    %2197 = vmatpush1.msra.mxu0 %v1309
    %2198 = vmatprep.subr.mxu0 0.0
    %2199 = vmatpush1.msra.mxu0 %v1310
    %2200 = vmatprep.subr.mxu0 0.0
    %2201 = vmatpush1.msra.mxu0 %v1311
    %2202 = vmatprep.subr.mxu0 0.0
    %2203 = vmatpush1.msra.mxu0 %v1312
    %2204 = vmatprep.subr.mxu0 0.0
    %2205 = vmatpush1.msra.mxu0 %v1313
    %2206 = vmatprep.subr.mxu0 0.0
    %2207 = vmatpush1.msra.mxu0 %v1314
    %2208 = vmatprep.subr.mxu0 0.0
    %2209 = vmatpush1.msra.mxu0 %v1315
    %2210 = vmatprep.subr.mxu0 0.0
    %2211 = vmatpush1.msra.mxu0 %v1316
    %2212 = vmatprep.subr.mxu0 0.0
    %2213 = vmatpush1.msra.mxu0 %v1317
    %2214 = vmatprep.subr.mxu0 0.0
    %2215 = vmatpush1.msra.mxu0 %v1318
    %2216 = vmatprep.subr.mxu0 0.0
    %2217 = vmatpush1.msra.mxu0 %v1319
    %2218 = vmatprep.subr.mxu0 0.0
    %2219 = vmatpush1.msra.mxu0 %v1320
    %2220 = vmatprep.subr.mxu0 0.0
    %2221 = vmatpush1.msra.mxu0 %v1321
    %2222 = vmatprep.subr.mxu0 0.0
    %2223 = vmatpush1.msra.mxu0 %v1322
    %2224 = vmatprep.subr.mxu0 0.0
    %2225 = vmatpush1.msra.mxu0 %v1323
    %2226 = vmatprep.subr.mxu0 0.0
    %2227 = vmatpush1.msra.mxu0 %v1324
    %2228 = vmatprep.subr.mxu0 0.0
    %2229 = vmatpush1.msra.mxu0 %v1325
    %2230 = vmatprep.subr.mxu0 0.0
    %2231 = vmatpush1.msra.mxu0 %v1326
    %2232 = vmatprep.subr.mxu0 0.0
    %2233 = vmatpush1.msra.mxu0 %v1327
    %2234 = vmatprep.subr.mxu0 0.0
    %2235 = vmatpush1.msra.mxu0 %v1328
    %2236 = vmatprep.subr.mxu0 0.0
    %2237 = vmatpush1.msra.mxu0 %v1329
    %2238 = vmatprep.subr.mxu0 0.0
    %2239 = vmatpush1.msra.mxu0 %v1330
    %2240 = vmatprep.subr.mxu0 0.0
    %2241 = vmatpush1.msra.mxu0 %v1331
    %2242 = vmatprep.subr.mxu0 0.0
    %2243 = vmatpush1.msra.mxu0 %v1332
    %2244 = vmatprep.subr.mxu0 0.0
    %2245 = vmatpush1.msra.mxu0 %v1333
    %2246 = vmatprep.subr.mxu0 0.0
    %2247 = vmatpush1.msra.mxu0 %v1334
    %2248 = vmatprep.subr.mxu0 0.0
    %2249 = vmatpush1.msra.mxu0 %v1335
    %2250 = vmatprep.subr.mxu0 0.0
    %2251 = vmatpush1.msra.mxu0 %v1336
    %2252 = vmatprep.subr.mxu0 0.0
    %2253 = vmatpush1.msra.mxu0 %v1337
    %2254 = vmatprep.subr.mxu0 0.0
    %2255 = vmatpush1.msra.mxu0 %v1338
    %2256 = vmatprep.mubr.f32.mxu0 %v1724
    %2257 = vmatmul.mubr.f32.gmra.mrb[0].mxu0 %v1722
    %v2258 = vpop.f32.mrb[0].mxu0
    %v2259 = vadd.f32 %v2189, %v2258
    %v2260 = vpop.f32.mrb[0].mxu0
    %2261 = vdwg.mxu0
    %2262 = vmatprep.subr.mxu0 0.0
    %2263 = vmatpush1.msra.mxu0 %v1339
    %2264 = vmatprep.subr.mxu0 0.0
    %2265 = vmatpush1.msra.mxu0 %v1340
    %2266 = vmatprep.subr.mxu0 0.0
    %2267 = vmatpush1.msra.mxu0 %v1341
    %2268 = vmatprep.subr.mxu0 0.0
    %2269 = vmatpush1.msra.mxu0 %v1342
    %2270 = vmatprep.subr.mxu0 0.0
    %2271 = vmatpush1.msra.mxu0 %v1343
    %2272 = vmatprep.subr.mxu0 0.0
    %2273 = vmatpush1.msra.mxu0 %v1344
    %2274 = vmatprep.subr.mxu0 0.0
    %2275 = vmatpush1.msra.mxu0 %v1345
    %2276 = vmatprep.subr.mxu0 0.0
    %2277 = vmatpush1.msra.mxu0 %v1346
    %2278 = vmatprep.subr.mxu0 0.0
    %2279 = vmatpush1.msra.mxu0 %v1347
    %2280 = vmatprep.subr.mxu0 0.0
    %2281 = vmatpush1.msra.mxu0 %v1348
    %2282 = vmatprep.subr.mxu0 0.0
    %2283 = vmatpush1.msra.mxu0 %v1349
    %2284 = vmatprep.subr.mxu0 0.0
    %2285 = vmatpush1.msra.mxu0 %v1350
    %2286 = vmatprep.subr.mxu0 0.0
    %2287 = vmatpush1.msra.mxu0 %v1351
    %2288 = vmatprep.subr.mxu0 0.0
    %2289 = vmatpush1.msra.mxu0 %v1352
    %2290 = vmatprep.subr.mxu0 0.0
    %2291 = vmatpush1.msra.mxu0 %v1353
    %2292 = vmatprep.subr.mxu0 0.0
    %2293 = vmatpush1.msra.mxu0 %v1354
    %2294 = vmatprep.subr.mxu0 0.0
    %2295 = vmatpush1.msra.mxu0 %v1355
    %2296 = vmatprep.subr.mxu0 0.0
    %2297 = vmatpush1.msra.mxu0 %v1356
    %2298 = vmatprep.subr.mxu0 0.0
    %2299 = vmatpush1.msra.mxu0 %v1357
    %2300 = vmatprep.subr.mxu0 0.0
    %2301 = vmatpush1.msra.mxu0 %v1358
    %2302 = vmatprep.subr.mxu0 0.0
    %2303 = vmatpush1.msra.mxu0 %v1359
    %2304 = vmatprep.subr.mxu0 0.0
    %2305 = vmatpush1.msra.mxu0 %v1360
    %2306 = vmatprep.subr.mxu0 0.0
    %2307 = vmatpush1.msra.mxu0 %v1361
    %2308 = vmatprep.subr.mxu0 0.0
    %2309 = vmatpush1.msra.mxu0 %v1362
    %2310 = vmatprep.subr.mxu0 0.0
    %2311 = vmatpush1.msra.mxu0 %v1363
    %2312 = vmatprep.subr.mxu0 0.0
    %2313 = vmatpush1.msra.mxu0 %v1364
    %2314 = vmatprep.subr.mxu0 0.0
    %2315 = vmatpush1.msra.mxu0 %v1365
    %2316 = vmatprep.subr.mxu0 0.0
    %2317 = vmatpush1.msra.mxu0 %v1366
    %2318 = vmatprep.subr.mxu0 0.0
    %2319 = vmatpush1.msra.mxu0 %v1367
    %2320 = vmatprep.subr.mxu0 0.0
    %2321 = vmatpush1.msra.mxu0 %v1368
    %2322 = vmatprep.subr.mxu0 0.0
    %2323 = vmatpush1.msra.mxu0 %v1369
    %2324 = vmatprep.subr.mxu0 0.0
    %2325 = vmatpush1.msra.mxu0 %v1370
    %2326 = vmatprep.mubr.f32.mxu0 %v1740
    %2327 = vmatmul.mubr.f32.gmra.mrb[0].mxu0 %v1732
    %v2328 = vpop.f32.mrb[0].mxu0
    %v2329 = vadd.f32 %v2259, %v2328
    %v2330 = vpop.f32.mrb[0].mxu0
    %2331 = vdwg.mxu0
    %2332 = vmatprep.subr.mxu0 0.0
    %2333 = vmatpush1.msra.mxu0 %v1371
    %2334 = vmatprep.subr.mxu0 0.0
    %2335 = vmatpush1.msra.mxu0 %v1372
    %2336 = vmatprep.subr.mxu0 0.0
    %2337 = vmatpush1.msra.mxu0 %v1373
    %2338 = vmatprep.subr.mxu0 0.0
    %2339 = vmatpush1.msra.mxu0 %v1374
    %2340 = vmatprep.subr.mxu0 0.0
    %2341 = vmatpush1.msra.mxu0 %v1375
    %2342 = vmatprep.subr.mxu0 0.0
    %2343 = vmatpush1.msra.mxu0 %v1376
    %2344 = vmatprep.subr.mxu0 0.0
    %2345 = vmatpush1.msra.mxu0 %v1377
    %2346 = vmatprep.subr.mxu0 0.0
    %2347 = vmatpush1.msra.mxu0 %v1378
    %2348 = vmatprep.subr.mxu0 0.0
    %2349 = vmatpush1.msra.mxu0 %v1379
    %2350 = vmatprep.subr.mxu0 0.0
    %2351 = vmatpush1.msra.mxu0 %v1380
    %2352 = vmatprep.subr.mxu0 0.0
    %2353 = vmatpush1.msra.mxu0 %v1381
    %2354 = vmatprep.subr.mxu0 0.0
    %2355 = vmatpush1.msra.mxu0 %v1382
    %2356 = vmatprep.subr.mxu0 0.0
    %2357 = vmatpush1.msra.mxu0 %v1383
    %2358 = vmatprep.subr.mxu0 0.0
    %2359 = vmatpush1.msra.mxu0 %v1384
    %2360 = vmatprep.subr.mxu0 0.0
    %2361 = vmatpush1.msra.mxu0 %v1385
    %2362 = vmatprep.subr.mxu0 0.0
    %2363 = vmatpush1.msra.mxu0 %v1386
    %2364 = vmatprep.subr.mxu0 0.0
    %2365 = vmatpush1.msra.mxu0 %v1387
    %2366 = vmatprep.subr.mxu0 0.0
    %2367 = vmatpush1.msra.mxu0 %v1388
    %2368 = vmatprep.subr.mxu0 0.0
    %2369 = vmatpush1.msra.mxu0 %v1389
    %2370 = vmatprep.subr.mxu0 0.0
    %2371 = vmatpush1.msra.mxu0 %v1390
    %2372 = vmatprep.subr.mxu0 0.0
    %2373 = vmatpush1.msra.mxu0 %v1391
    %2374 = vmatprep.subr.mxu0 0.0
    %2375 = vmatpush1.msra.mxu0 %v1392
    %2376 = vmatprep.subr.mxu0 0.0
    %2377 = vmatpush1.msra.mxu0 %v1393
    %2378 = vmatprep.subr.mxu0 0.0
    %2379 = vmatpush1.msra.mxu0 %v1394
    %2380 = vmatprep.subr.mxu0 0.0
    %2381 = vmatpush1.msra.mxu0 %v1395
    %2382 = vmatprep.subr.mxu0 0.0
    %2383 = vmatpush1.msra.mxu0 %v1396
    %2384 = vmatprep.subr.mxu0 0.0
    %2385 = vmatpush1.msra.mxu0 %v1397
    %2386 = vmatprep.subr.mxu0 0.0
    %2387 = vmatpush1.msra.mxu0 %v1398
    %2388 = vmatprep.subr.mxu0 0.0
    %2389 = vmatpush1.msra.mxu0 %v1399
    %2390 = vmatprep.subr.mxu0 0.0
    %2391 = vmatpush1.msra.mxu0 %v1400
    %2392 = vmatprep.subr.mxu0 0.0
    %2393 = vmatpush1.msra.mxu0 %v1401
    %2394 = vmatprep.subr.mxu0 0.0
    %2395 = vmatpush1.msra.mxu0 %v1402
    %2396 = vmatprep.mubr.f32.mxu0 %v1741
    %2397 = vmatmul.mubr.f32.gmra.mrb[0].mxu0 %v1739
    %v2398 = vpop.f32.mrb[0].mxu0
    %v2399 = vadd.f32 %v2329, %v2398
    %v2400 = vpop.f32.mrb[0].mxu0
    %2401 = vdwg.mxu0
    %2402 = vmatprep.subr.mxu0 0.0
    %2403 = vmatpush1.msra.mxu0 %v1403
    %2404 = vmatprep.subr.mxu0 0.0
    %2405 = vmatpush1.msra.mxu0 %v1404
    %2406 = vmatprep.subr.mxu0 0.0
    %2407 = vmatpush1.msra.mxu0 %v1405
    %2408 = vmatprep.subr.mxu0 0.0
    %2409 = vmatpush1.msra.mxu0 %v1406
    %2410 = vmatprep.subr.mxu0 0.0
    %2411 = vmatpush1.msra.mxu0 %v1407
    %2412 = vmatprep.subr.mxu0 0.0
    %2413 = vmatpush1.msra.mxu0 %v1408
    %2414 = vmatprep.subr.mxu0 0.0
    %2415 = vmatpush1.msra.mxu0 %v1409
    %2416 = vmatprep.subr.mxu0 0.0
    %2417 = vmatpush1.msra.mxu0 %v1410
    %2418 = vmatprep.subr.mxu0 0.0
    %2419 = vmatpush1.msra.mxu0 %v1411
    %2420 = vmatprep.subr.mxu0 0.0
    %2421 = vmatpush1.msra.mxu0 %v1412
    %2422 = vmatprep.subr.mxu0 0.0
    %2423 = vmatpush1.msra.mxu0 %v1413
    %2424 = vmatprep.subr.mxu0 0.0
    %2425 = vmatpush1.msra.mxu0 %v1414
    %2426 = vmatprep.subr.mxu0 0.0
    %2427 = vmatpush1.msra.mxu0 %v1415
    %2428 = vmatprep.subr.mxu0 0.0
    %2429 = vmatpush1.msra.mxu0 %v1416
    %2430 = vmatprep.subr.mxu0 0.0
    %2431 = vmatpush1.msra.mxu0 %v1417
    %2432 = vmatprep.subr.mxu0 0.0
    %2433 = vmatpush1.msra.mxu0 %v1418
    %2434 = vmatprep.subr.mxu0 0.0
    %2435 = vmatpush1.msra.mxu0 %v1419
    %2436 = vmatprep.subr.mxu0 0.0
    %2437 = vmatpush1.msra.mxu0 %v1420
    %2438 = vmatprep.subr.mxu0 0.0
    %2439 = vmatpush1.msra.mxu0 %v1421
    %2440 = vmatprep.subr.mxu0 0.0
    %2441 = vmatpush1.msra.mxu0 %v1422
    %2442 = vmatprep.subr.mxu0 0.0
    %2443 = vmatpush1.msra.mxu0 %v1423
    %2444 = vmatprep.subr.mxu0 0.0
    %2445 = vmatpush1.msra.mxu0 %v1424
    %2446 = vmatprep.subr.mxu0 0.0
    %2447 = vmatpush1.msra.mxu0 %v1425
    %2448 = vmatprep.subr.mxu0 0.0
    %2449 = vmatpush1.msra.mxu0 %v1426
    %2450 = vmatprep.subr.mxu0 0.0
    %2451 = vmatpush1.msra.mxu0 %v1427
    %2452 = vmatprep.subr.mxu0 0.0
    %2453 = vmatpush1.msra.mxu0 %v1428
    %2454 = vmatprep.subr.mxu0 0.0
    %2455 = vmatpush1.msra.mxu0 %v1429
    %2456 = vmatprep.subr.mxu0 0.0
    %2457 = vmatpush1.msra.mxu0 %v1430
    %2458 = vmatprep.subr.mxu0 0.0
    %2459 = vmatpush1.msra.mxu0 %v1431
    %2460 = vmatprep.subr.mxu0 0.0
    %2461 = vmatpush1.msra.mxu0 %v1432
    %2462 = vmatprep.subr.mxu0 0.0
    %2463 = vmatpush1.msra.mxu0 %v1433
    %2464 = vmatprep.subr.mxu0 0.0
    %2465 = vmatpush1.msra.mxu0 %v1434
    %2466 = vmatprep.mubr.f32.mxu0 %v1757
    %2467 = vmatmul.mubr.f32.gmra.mrb[0].mxu0 %v1749
    %v2468 = vpop.f32.mrb[0].mxu0
    %v2469 = vadd.f32 %v2399, %v2468
    %v2470 = vpop.f32.mrb[0].mxu0
    %2471 = vdwg.mxu0
    %2472 = vmatprep.subr.mxu0 0.0
    %2473 = vmatpush1.msra.mxu0 %v1435
    %2474 = vmatprep.subr.mxu0 0.0
    %2475 = vmatpush1.msra.mxu0 %v1436
    %2476 = vmatprep.subr.mxu0 0.0
    %2477 = vmatpush1.msra.mxu0 %v1437
    %2478 = vmatprep.subr.mxu0 0.0
    %2479 = vmatpush1.msra.mxu0 %v1438
    %2480 = vmatprep.subr.mxu0 0.0
    %2481 = vmatpush1.msra.mxu0 %v1439
    %2482 = vmatprep.subr.mxu0 0.0
    %2483 = vmatpush1.msra.mxu0 %v1440
    %2484 = vmatprep.subr.mxu0 0.0
    %2485 = vmatpush1.msra.mxu0 %v1441
    %2486 = vmatprep.subr.mxu0 0.0
    %2487 = vmatpush1.msra.mxu0 %v1442
    %2488 = vmatprep.subr.mxu0 0.0
    %2489 = vmatpush1.msra.mxu0 %v1443
    %2490 = vmatprep.subr.mxu0 0.0
    %2491 = vmatpush1.msra.mxu0 %v1444
    %2492 = vmatprep.subr.mxu0 0.0
    %2493 = vmatpush1.msra.mxu0 %v1445
    %2494 = vmatprep.subr.mxu0 0.0
    %2495 = vmatpush1.msra.mxu0 %v1446
    %2496 = vmatprep.subr.mxu0 0.0
    %2497 = vmatpush1.msra.mxu0 %v1447
    %2498 = vmatprep.subr.mxu0 0.0
    %2499 = vmatpush1.msra.mxu0 %v1448
    %2500 = vmatprep.subr.mxu0 0.0
    %2501 = vmatpush1.msra.mxu0 %v1449
    %2502 = vmatprep.subr.mxu0 0.0
    %2503 = vmatpush1.msra.mxu0 %v1450
    %2504 = vmatprep.subr.mxu0 0.0
    %2505 = vmatpush1.msra.mxu0 %v1451
    %2506 = vmatprep.subr.mxu0 0.0
    %2507 = vmatpush1.msra.mxu0 %v1452
    %2508 = vmatprep.subr.mxu0 0.0
    %2509 = vmatpush1.msra.mxu0 %v1453
    %2510 = vmatprep.subr.mxu0 0.0
    %2511 = vmatpush1.msra.mxu0 %v1454
    %2512 = vmatprep.subr.mxu0 0.0
    %2513 = vmatpush1.msra.mxu0 %v1455
    %2514 = vmatprep.subr.mxu0 0.0
    %2515 = vmatpush1.msra.mxu0 %v1456
    %2516 = vmatprep.subr.mxu0 0.0
    %2517 = vmatpush1.msra.mxu0 %v1457
    %2518 = vmatprep.subr.mxu0 0.0
    %2519 = vmatpush1.msra.mxu0 %v1458
    %2520 = vmatprep.subr.mxu0 0.0
    %2521 = vmatpush1.msra.mxu0 %v1459
    %2522 = vmatprep.subr.mxu0 0.0
    %2523 = vmatpush1.msra.mxu0 %v1460
    %2524 = vmatprep.subr.mxu0 0.0
    %2525 = vmatpush1.msra.mxu0 %v1461
    %2526 = vmatprep.subr.mxu0 0.0
    %2527 = vmatpush1.msra.mxu0 %v1462
    %2528 = vmatprep.subr.mxu0 0.0
    %2529 = vmatpush1.msra.mxu0 %v1463
    %2530 = vmatprep.subr.mxu0 0.0
    %2531 = vmatpush1.msra.mxu0 %v1464
    %2532 = vmatprep.subr.mxu0 0.0
    %2533 = vmatpush1.msra.mxu0 %v1465
    %2534 = vmatprep.subr.mxu0 0.0
    %2535 = vmatpush1.msra.mxu0 %v1466
    %2536 = vmatprep.mubr.f32.mxu0 %v1758
    %2537 = vmatmul.mubr.f32.gmra.mrb[0].mxu0 %v1756
    %v2538 = vpop.f32.mrb[0].mxu0
    %v2539 = vadd.f32 %v2469, %v2538
    %v2540 = vpop.f32.mrb[0].mxu0
    %2541 = vdwg.mxu0
    %2542 = vmatprep.subr.mxu0 0.0
    %2543 = vmatpush1.msra.mxu0 %v1467
    %2544 = vmatprep.subr.mxu0 0.0
    %2545 = vmatpush1.msra.mxu0 %v1468
    %2546 = vmatprep.subr.mxu0 0.0
    %2547 = vmatpush1.msra.mxu0 %v1469
    %2548 = vmatprep.subr.mxu0 0.0
    %2549 = vmatpush1.msra.mxu0 %v1470
    %2550 = vmatprep.subr.mxu0 0.0
    %2551 = vmatpush1.msra.mxu0 %v1471
    %2552 = vmatprep.subr.mxu0 0.0
    %2553 = vmatpush1.msra.mxu0 %v1472
    %2554 = vmatprep.subr.mxu0 0.0
    %2555 = vmatpush1.msra.mxu0 %v1473
    %2556 = vmatprep.subr.mxu0 0.0
    %2557 = vmatpush1.msra.mxu0 %v1474
    %2558 = vmatprep.subr.mxu0 0.0
    %2559 = vmatpush1.msra.mxu0 %v1475
    %2560 = vmatprep.subr.mxu0 0.0
    %2561 = vmatpush1.msra.mxu0 %v1476
    %2562 = vmatprep.subr.mxu0 0.0
    %2563 = vmatpush1.msra.mxu0 %v1477
    %2564 = vmatprep.subr.mxu0 0.0
    %2565 = vmatpush1.msra.mxu0 %v1478
    %2566 = vmatprep.subr.mxu0 0.0
    %2567 = vmatpush1.msra.mxu0 %v1479
    %2568 = vmatprep.subr.mxu0 0.0
    %2569 = vmatpush1.msra.mxu0 %v1480
    %2570 = vmatprep.subr.mxu0 0.0
    %2571 = vmatpush1.msra.mxu0 %v1481
    %2572 = vmatprep.subr.mxu0 0.0
    %2573 = vmatpush1.msra.mxu0 %v1482
    %2574 = vmatprep.subr.mxu0 0.0
    %2575 = vmatpush1.msra.mxu0 %v1483
    %2576 = vmatprep.subr.mxu0 0.0
    %2577 = vmatpush1.msra.mxu0 %v1484
    %2578 = vmatprep.subr.mxu0 0.0
    %2579 = vmatpush1.msra.mxu0 %v1485
    %2580 = vmatprep.subr.mxu0 0.0
    %2581 = vmatpush1.msra.mxu0 %v1486
    %2582 = vmatprep.subr.mxu0 0.0
    %2583 = vmatpush1.msra.mxu0 %v1487
    %2584 = vmatprep.subr.mxu0 0.0
    %2585 = vmatpush1.msra.mxu0 %v1488
    %2586 = vmatprep.subr.mxu0 0.0
    %2587 = vmatpush1.msra.mxu0 %v1489
    %2588 = vmatprep.subr.mxu0 0.0
    %2589 = vmatpush1.msra.mxu0 %v1490
    %2590 = vmatprep.subr.mxu0 0.0
    %2591 = vmatpush1.msra.mxu0 %v1491
    %2592 = vmatprep.subr.mxu0 0.0
    %2593 = vmatpush1.msra.mxu0 %v1492
    %2594 = vmatprep.subr.mxu0 0.0
    %2595 = vmatpush1.msra.mxu0 %v1493
    %2596 = vmatprep.subr.mxu0 0.0
    %2597 = vmatpush1.msra.mxu0 %v1494
    %2598 = vmatprep.subr.mxu0 0.0
    %2599 = vmatpush1.msra.mxu0 %v1495
    %2600 = vmatprep.subr.mxu0 0.0
    %2601 = vmatpush1.msra.mxu0 %v1496
    %2602 = vmatprep.subr.mxu0 0.0
    %2603 = vmatpush1.msra.mxu0 %v1497
    %2604 = vmatprep.subr.mxu0 0.0
    %2605 = vmatpush1.msra.mxu0 %v1498
    %2606 = vmatprep.mubr.f32.mxu0 %v1774
    %2607 = vmatmul.mubr.f32.gmra.mrb[0].mxu0 %v1766
    %v2608 = vpop.f32.mrb[0].mxu0
    %v2609 = vadd.f32 %v2539, %v2608
    %v2610 = vpop.f32.mrb[0].mxu0
    %2611 = vdwg.mxu0
    %2612 = vmatprep.subr.mxu0 0.0
    %2613 = vmatpush1.msra.mxu0 %v1499
    %2614 = vmatprep.subr.mxu0 0.0
    %2615 = vmatpush1.msra.mxu0 %v1500
    %2616 = vmatprep.subr.mxu0 0.0
    %2617 = vmatpush1.msra.mxu0 %v1501
    %2618 = vmatprep.subr.mxu0 0.0
    %2619 = vmatpush1.msra.mxu0 %v1502
    %2620 = vmatprep.subr.mxu0 0.0
    %2621 = vmatpush1.msra.mxu0 %v1503
    %2622 = vmatprep.subr.mxu0 0.0
    %2623 = vmatpush1.msra.mxu0 %v1504
    %2624 = vmatprep.subr.mxu0 0.0
    %2625 = vmatpush1.msra.mxu0 %v1505
    %2626 = vmatprep.subr.mxu0 0.0
    %2627 = vmatpush1.msra.mxu0 %v1506
    %2628 = vmatprep.subr.mxu0 0.0
    %2629 = vmatpush1.msra.mxu0 %v1507
    %2630 = vmatprep.subr.mxu0 0.0
    %2631 = vmatpush1.msra.mxu0 %v1508
    %2632 = vmatprep.subr.mxu0 0.0
    %2633 = vmatpush1.msra.mxu0 %v1509
    %2634 = vmatprep.subr.mxu0 0.0
    %2635 = vmatpush1.msra.mxu0 %v1510
    %2636 = vmatprep.subr.mxu0 0.0
    %2637 = vmatpush1.msra.mxu0 %v1511
    %2638 = vmatprep.subr.mxu0 0.0
    %2639 = vmatpush1.msra.mxu0 %v1512
    %2640 = vmatprep.subr.mxu0 0.0
    %2641 = vmatpush1.msra.mxu0 %v1513
    %2642 = vmatprep.subr.mxu0 0.0
    %2643 = vmatpush1.msra.mxu0 %v1514
    %2644 = vmatprep.subr.mxu0 0.0
    %2645 = vmatpush1.msra.mxu0 %v1515
    %2646 = vmatprep.subr.mxu0 0.0
    %2647 = vmatpush1.msra.mxu0 %v1516
    %2648 = vmatprep.subr.mxu0 0.0
    %2649 = vmatpush1.msra.mxu0 %v1517
    %2650 = vmatprep.subr.mxu0 0.0
    %2651 = vmatpush1.msra.mxu0 %v1518
    %2652 = vmatprep.subr.mxu0 0.0
    %2653 = vmatpush1.msra.mxu0 %v1519
    %2654 = vmatprep.subr.mxu0 0.0
    %2655 = vmatpush1.msra.mxu0 %v1520
    %2656 = vmatprep.subr.mxu0 0.0
    %2657 = vmatpush1.msra.mxu0 %v1521
    %2658 = vmatprep.subr.mxu0 0.0
    %2659 = vmatpush1.msra.mxu0 %v1522
    %2660 = vmatprep.subr.mxu0 0.0
    %2661 = vmatpush1.msra.mxu0 %v1523
    %2662 = vmatprep.subr.mxu0 0.0
    %2663 = vmatpush1.msra.mxu0 %v1524
    %2664 = vmatprep.subr.mxu0 0.0
    %2665 = vmatpush1.msra.mxu0 %v1525
    %2666 = vmatprep.subr.mxu0 0.0
    %2667 = vmatpush1.msra.mxu0 %v1526
    %2668 = vmatprep.subr.mxu0 0.0
    %2669 = vmatpush1.msra.mxu0 %v1527
    %2670 = vmatprep.subr.mxu0 0.0
    %2671 = vmatpush1.msra.mxu0 %v1528
    %2672 = vmatprep.subr.mxu0 0.0
    %2673 = vmatpush1.msra.mxu0 %v1529
    %2674 = vmatprep.subr.mxu0 0.0
    %2675 = vmatpush1.msra.mxu0 %v1530
    %2676 = vmatprep.mubr.f32.mxu0 %v1775
    %2677 = vmatmul.mubr.f32.gmra.mrb[0].mxu0 %v1773
    %v2678 = vpop.f32.mrb[0].mxu0
    %v2679 = vadd.f32 %v2609, %v2678
    %v2680 = vpop.f32.mrb[0].mxu0
    %2681 = vdwg.mxu0
    %2682 = vmatprep.subr.mxu0 0.0
    %2683 = vmatpush1.msra.mxu0 %v1531
    %2684 = vmatprep.subr.mxu0 0.0
    %2685 = vmatpush1.msra.mxu0 %v1532
    %2686 = vmatprep.subr.mxu0 0.0
    %2687 = vmatpush1.msra.mxu0 %v1533
    %2688 = vmatprep.subr.mxu0 0.0
    %2689 = vmatpush1.msra.mxu0 %v1534
    %2690 = vmatprep.subr.mxu0 0.0
    %2691 = vmatpush1.msra.mxu0 %v1535
    %2692 = vmatprep.subr.mxu0 0.0
    %2693 = vmatpush1.msra.mxu0 %v1536
    %2694 = vmatprep.subr.mxu0 0.0
    %2695 = vmatpush1.msra.mxu0 %v1537
    %2696 = vmatprep.subr.mxu0 0.0
    %2697 = vmatpush1.msra.mxu0 %v1538
    %2698 = vmatprep.subr.mxu0 0.0
    %2699 = vmatpush1.msra.mxu0 %v1539
    %2700 = vmatprep.subr.mxu0 0.0
    %2701 = vmatpush1.msra.mxu0 %v1540
    %2702 = vmatprep.subr.mxu0 0.0
    %2703 = vmatpush1.msra.mxu0 %v1541
    %2704 = vmatprep.subr.mxu0 0.0
    %2705 = vmatpush1.msra.mxu0 %v1542
    %2706 = vmatprep.subr.mxu0 0.0
    %2707 = vmatpush1.msra.mxu0 %v1543
    %2708 = vmatprep.subr.mxu0 0.0
    %2709 = vmatpush1.msra.mxu0 %v1544
    %2710 = vmatprep.subr.mxu0 0.0
    %2711 = vmatpush1.msra.mxu0 %v1545
    %2712 = vmatprep.subr.mxu0 0.0
    %2713 = vmatpush1.msra.mxu0 %v1546
    %2714 = vmatprep.subr.mxu0 0.0
    %2715 = vmatpush1.msra.mxu0 %v1547
    %2716 = vmatprep.subr.mxu0 0.0
    %2717 = vmatpush1.msra.mxu0 %v1548
    %2718 = vmatprep.subr.mxu0 0.0
    %2719 = vmatpush1.msra.mxu0 %v1549
    %2720 = vmatprep.subr.mxu0 0.0
    %2721 = vmatpush1.msra.mxu0 %v1550
    %2722 = vmatprep.subr.mxu0 0.0
    %2723 = vmatpush1.msra.mxu0 %v1551
    %2724 = vmatprep.subr.mxu0 0.0
    %2725 = vmatpush1.msra.mxu0 %v1552
    %2726 = vmatprep.subr.mxu0 0.0
    %2727 = vmatpush1.msra.mxu0 %v1553
    %2728 = vmatprep.subr.mxu0 0.0
    %2729 = vmatpush1.msra.mxu0 %v1554
    %2730 = vmatprep.subr.mxu0 0.0
    %2731 = vmatpush1.msra.mxu0 %v1555
    %2732 = vmatprep.subr.mxu0 0.0
    %2733 = vmatpush1.msra.mxu0 %v1556
    %2734 = vmatprep.subr.mxu0 0.0
    %2735 = vmatpush1.msra.mxu0 %v1557
    %2736 = vmatprep.subr.mxu0 0.0
    %2737 = vmatpush1.msra.mxu0 %v1558
    %2738 = vmatprep.subr.mxu0 0.0
    %2739 = vmatpush1.msra.mxu0 %v1559
    %2740 = vmatprep.subr.mxu0 0.0
    %2741 = vmatpush1.msra.mxu0 %v1560
    %2742 = vmatprep.subr.mxu0 0.0
    %2743 = vmatpush1.msra.mxu0 %v1561
    %2744 = vmatprep.subr.mxu0 0.0
    %2745 = vmatpush1.msra.mxu0 %v1562
    %2746 = vmatprep.mubr.f32.mxu0 %v1791
    %2747 = vmatmul.mubr.f32.gmra.mrb[0].mxu0 %v1783
    %v2748 = vpop.f32.mrb[0].mxu0
    %v2749 = vadd.f32 %v2679, %v2748
    %v2750 = vpop.f32.mrb[0].mxu0
    %2751 = vdwg.mxu0
    %2752 = vmatprep.subr.mxu0 0.0
    %2753 = vmatpush1.msra.mxu0 %v1563
    %2754 = vmatprep.subr.mxu0 0.0
    %2755 = vmatpush1.msra.mxu0 %v1564
    %2756 = vmatprep.subr.mxu0 0.0
    %2757 = vmatpush1.msra.mxu0 %v1565
    %2758 = vmatprep.subr.mxu0 0.0
    %2759 = vmatpush1.msra.mxu0 %v1566
    %2760 = vmatprep.subr.mxu0 0.0
    %2761 = vmatpush1.msra.mxu0 %v1567
    %2762 = vmatprep.subr.mxu0 0.0
    %2763 = vmatpush1.msra.mxu0 %v1568
    %2764 = vmatprep.subr.mxu0 0.0
    %2765 = vmatpush1.msra.mxu0 %v1569
    %2766 = vmatprep.subr.mxu0 0.0
    %2767 = vmatpush1.msra.mxu0 %v1570
    %2768 = vmatprep.subr.mxu0 0.0
    %2769 = vmatpush1.msra.mxu0 %v1571
    %2770 = vmatprep.subr.mxu0 0.0
    %2771 = vmatpush1.msra.mxu0 %v1572
    %2772 = vmatprep.subr.mxu0 0.0
    %2773 = vmatpush1.msra.mxu0 %v1573
    %2774 = vmatprep.subr.mxu0 0.0
    %2775 = vmatpush1.msra.mxu0 %v1574
    %2776 = vmatprep.subr.mxu0 0.0
    %2777 = vmatpush1.msra.mxu0 %v1575
    %2778 = vmatprep.subr.mxu0 0.0
    %2779 = vmatpush1.msra.mxu0 %v1576
    %2780 = vmatprep.subr.mxu0 0.0
    %2781 = vmatpush1.msra.mxu0 %v1577
    %2782 = vmatprep.subr.mxu0 0.0
    %2783 = vmatpush1.msra.mxu0 %v1578
    %2784 = vmatprep.subr.mxu0 0.0
    %2785 = vmatpush1.msra.mxu0 %v1579
    %2786 = vmatprep.subr.mxu0 0.0
    %2787 = vmatpush1.msra.mxu0 %v1580
    %2788 = vmatprep.subr.mxu0 0.0
    %2789 = vmatpush1.msra.mxu0 %v1581
    %2790 = vmatprep.subr.mxu0 0.0
    %2791 = vmatpush1.msra.mxu0 %v1582
    %2792 = vmatprep.subr.mxu0 0.0
    %2793 = vmatpush1.msra.mxu0 %v1583
    %2794 = vmatprep.subr.mxu0 0.0
    %2795 = vmatpush1.msra.mxu0 %v1584
    %2796 = vmatprep.subr.mxu0 0.0
    %2797 = vmatpush1.msra.mxu0 %v1585
    %2798 = vmatprep.subr.mxu0 0.0
    %2799 = vmatpush1.msra.mxu0 %v1586
    %2800 = vmatprep.subr.mxu0 0.0
    %2801 = vmatpush1.msra.mxu0 %v1587
    %2802 = vmatprep.subr.mxu0 0.0
    %2803 = vmatpush1.msra.mxu0 %v1588
    %2804 = vmatprep.subr.mxu0 0.0
    %2805 = vmatpush1.msra.mxu0 %v1589
    %2806 = vmatprep.subr.mxu0 0.0
    %2807 = vmatpush1.msra.mxu0 %v1590
    %2808 = vmatprep.subr.mxu0 0.0
    %2809 = vmatpush1.msra.mxu0 %v1591
    %2810 = vmatprep.subr.mxu0 0.0
    %2811 = vmatpush1.msra.mxu0 %v1592
    %2812 = vmatprep.subr.mxu0 0.0
    %2813 = vmatpush1.msra.mxu0 %v1593
    %2814 = vmatprep.subr.mxu0 0.0
    %2815 = vmatpush1.msra.mxu0 %v1594
    %2816 = vmatprep.mubr.f32.mxu0 %v1792
    %2817 = vmatmul.mubr.f32.gmra.mrb[0].mxu0 %v1790
    %v2818 = vpop.f32.mrb[0].mxu0
    %v2819 = vadd.f32 %v2749, %v2818
    %v2820 = vpop.f32.mrb[0].mxu0
    %2821 = vdwg.mxu0
    %2822 = vmatprep.subr.mxu0 0.0
    %2823 = vmatpush1.msra.mxu0 %v1595
    %2824 = vmatprep.subr.mxu0 0.0
    %2825 = vmatpush1.msra.mxu0 %v1596
    %2826 = vmatprep.subr.mxu0 0.0
    %2827 = vmatpush1.msra.mxu0 %v1597
    %2828 = vmatprep.subr.mxu0 0.0
    %2829 = vmatpush1.msra.mxu0 %v1598
    %2830 = vmatprep.subr.mxu0 0.0
    %2831 = vmatpush1.msra.mxu0 %v1599
    %2832 = vmatprep.subr.mxu0 0.0
    %2833 = vmatpush1.msra.mxu0 %v1600
    %2834 = vmatprep.subr.mxu0 0.0
    %2835 = vmatpush1.msra.mxu0 %v1601
    %2836 = vmatprep.subr.mxu0 0.0
    %2837 = vmatpush1.msra.mxu0 %v1602
    %2838 = vmatprep.subr.mxu0 0.0
    %2839 = vmatpush1.msra.mxu0 %v1603
    %2840 = vmatprep.subr.mxu0 0.0
    %2841 = vmatpush1.msra.mxu0 %v1604
    %2842 = vmatprep.subr.mxu0 0.0
    %2843 = vmatpush1.msra.mxu0 %v1605
    %2844 = vmatprep.subr.mxu0 0.0
    %2845 = vmatpush1.msra.mxu0 %v1606
    %2846 = vmatprep.subr.mxu0 0.0
    %2847 = vmatpush1.msra.mxu0 %v1607
    %2848 = vmatprep.subr.mxu0 0.0
    %2849 = vmatpush1.msra.mxu0 %v1608
    %2850 = vmatprep.subr.mxu0 0.0
    %2851 = vmatpush1.msra.mxu0 %v1609
    %2852 = vmatprep.subr.mxu0 0.0
    %2853 = vmatpush1.msra.mxu0 %v1610
    %2854 = vmatprep.subr.mxu0 0.0
    %2855 = vmatpush1.msra.mxu0 %v1611
    %2856 = vmatprep.subr.mxu0 0.0
    %2857 = vmatpush1.msra.mxu0 %v1612
    %2858 = vmatprep.subr.mxu0 0.0
    %2859 = vmatpush1.msra.mxu0 %v1613
    %2860 = vmatprep.subr.mxu0 0.0
    %2861 = vmatpush1.msra.mxu0 %v1614
    %2862 = vmatprep.subr.mxu0 0.0
    %2863 = vmatpush1.msra.mxu0 %v1615
    %2864 = vmatprep.subr.mxu0 0.0
    %2865 = vmatpush1.msra.mxu0 %v1616
    %2866 = vmatprep.subr.mxu0 0.0
    %2867 = vmatpush1.msra.mxu0 %v1617
    %2868 = vmatprep.subr.mxu0 0.0
    %2869 = vmatpush1.msra.mxu0 %v1618
    %2870 = vmatprep.subr.mxu0 0.0
    %2871 = vmatpush1.msra.mxu0 %v1619
    %2872 = vmatprep.subr.mxu0 0.0
    %2873 = vmatpush1.msra.mxu0 %v1620
    %2874 = vmatprep.subr.mxu0 0.0
    %2875 = vmatpush1.msra.mxu0 %v1621
    %2876 = vmatprep.subr.mxu0 0.0
    %2877 = vmatpush1.msra.mxu0 %v1622
    %2878 = vmatprep.subr.mxu0 0.0
    %2879 = vmatpush1.msra.mxu0 %v1623
    %2880 = vmatprep.subr.mxu0 0.0
    %2881 = vmatpush1.msra.mxu0 %v1624
    %2882 = vmatprep.subr.mxu0 0.0
    %2883 = vmatpush1.msra.mxu0 %v1625
    %2884 = vmatprep.subr.mxu0 0.0
    %2885 = vmatpush1.msra.mxu0 %v1626
    %2886 = vmatprep.mubr.f32.mxu0 %v1808
    %2887 = vmatmul.mubr.f32.gmra.mrb[0].mxu0 %v1800
    %v2888 = vpop.f32.mrb[0].mxu0
    %v2889 = vadd.f32 %v2819, %v2888
    %v2890 = vpop.f32.mrb[0].mxu0
    %2891 = vdwg.mxu0
    %2892 = vmatprep.subr.mxu0 0.0
    %2893 = vmatpush1.msra.mxu0 %v1627
    %2894 = vmatprep.subr.mxu0 0.0
    %2895 = vmatpush1.msra.mxu0 %v1628
    %2896 = vmatprep.subr.mxu0 0.0
    %2897 = vmatpush1.msra.mxu0 %v1629
    %2898 = vmatprep.subr.mxu0 0.0
    %2899 = vmatpush1.msra.mxu0 %v1630
    %2900 = vmatprep.subr.mxu0 0.0
    %2901 = vmatpush1.msra.mxu0 %v1631
    %2902 = vmatprep.subr.mxu0 0.0
    %2903 = vmatpush1.msra.mxu0 %v1632
    %2904 = vmatprep.subr.mxu0 0.0
    %2905 = vmatpush1.msra.mxu0 %v1633
    %2906 = vmatprep.subr.mxu0 0.0
    %2907 = vmatpush1.msra.mxu0 %v1634
    %2908 = vmatprep.subr.mxu0 0.0
    %2909 = vmatpush1.msra.mxu0 %v1635
    %2910 = vmatprep.subr.mxu0 0.0
    %2911 = vmatpush1.msra.mxu0 %v1636
    %2912 = vmatprep.subr.mxu0 0.0
    %2913 = vmatpush1.msra.mxu0 %v1637
    %2914 = vmatprep.subr.mxu0 0.0
    %2915 = vmatpush1.msra.mxu0 %v1638
    %2916 = vmatprep.subr.mxu0 0.0
    %2917 = vmatpush1.msra.mxu0 %v1639
    %2918 = vmatprep.subr.mxu0 0.0
    %2919 = vmatpush1.msra.mxu0 %v1640
    %2920 = vmatprep.subr.mxu0 0.0
    %2921 = vmatpush1.msra.mxu0 %v1641
    %2922 = vmatprep.subr.mxu0 0.0
    %2923 = vmatpush1.msra.mxu0 %v1642
    %2924 = vmatprep.subr.mxu0 0.0
    %2925 = vmatpush1.msra.mxu0 %v1643
    %2926 = vmatprep.subr.mxu0 0.0
    %2927 = vmatpush1.msra.mxu0 %v1644
    %2928 = vmatprep.subr.mxu0 0.0
    %2929 = vmatpush1.msra.mxu0 %v1645
    %2930 = vmatprep.subr.mxu0 0.0
    %2931 = vmatpush1.msra.mxu0 %v1646
    %2932 = vmatprep.subr.mxu0 0.0
    %2933 = vmatpush1.msra.mxu0 %v1647
    %2934 = vmatprep.subr.mxu0 0.0
    %2935 = vmatpush1.msra.mxu0 %v1648
    %2936 = vmatprep.subr.mxu0 0.0
    %2937 = vmatpush1.msra.mxu0 %v1649
    %2938 = vmatprep.subr.mxu0 0.0
    %2939 = vmatpush1.msra.mxu0 %v1650
    %2940 = vmatprep.subr.mxu0 0.0
    %2941 = vmatpush1.msra.mxu0 %v1651
    %2942 = vmatprep.subr.mxu0 0.0
    %2943 = vmatpush1.msra.mxu0 %v1652
    %2944 = vmatprep.subr.mxu0 0.0
    %2945 = vmatpush1.msra.mxu0 %v1653
    %2946 = vmatprep.subr.mxu0 0.0
    %2947 = vmatpush1.msra.mxu0 %v1654
    %2948 = vmatprep.subr.mxu0 0.0
    %2949 = vmatpush1.msra.mxu0 %v1655
    %2950 = vmatprep.subr.mxu0 0.0
    %2951 = vmatpush1.msra.mxu0 %v1656
    %2952 = vmatprep.subr.mxu0 0.0
    %2953 = vmatpush1.msra.mxu0 %v1657
    %2954 = vmatprep.subr.mxu0 0.0
    %2955 = vmatpush1.msra.mxu0 %v1658
    %2956 = vmatprep.mubr.f32.mxu0 %v1809
    %2957 = vmatmul.mubr.f32.gmra.mrb[0].mxu0 %v1807
    %v2958 = vpop.f32.mrb[0].mxu0
    %v2959 = vadd.f32 %v2889, %v2958
    %v2960 = vpop.f32.mrb[0].mxu0
    %2961 = vdwg.mxu0
    %2962 = vst [vmem:[#allocation11] sm:$0x3] %v2959
    // Predicated region
    $region38: #{tpu_custom_call.1} parent=1 // pred_check
      _
    $region39: #{tpu_custom_call.1} parent=1 // pred_check_branch
      %2964 = sbr.rel (0) target = $region41
    $region40: #{tpu_custom_call.1} parent=1 // pred_region
      %s2966 = ssub.s32 32, 32
      %2967 = vsyncadd [#allocation5], %s2966
      %s2969 = sshll.u32 [#allocation11], 4
      %s2970 = int_to_ptr.vmem [resolvable:$true] %s2969
      %2972 = dma.vmem_to_hbm [thread:$0]  %s2970, 32, %s5, [#allocation5]
    $region41: #{tpu_custom_call.1} parent=1 // pred_fallthru
      _
    // Predicated region
    $region42: #{tpu_custom_call.1} parent=1 // pred_check
      _
    $region43: #{tpu_custom_call.1} parent=1 // pred_check_branch
      %2974 = sbr.rel (0) target = $region45
    $region44: #{tpu_custom_call.1} parent=1 // pred_region
      %2975 = dma.done [#allocation5], 32
    $region45: #{tpu_custom_call.1} parent=1 // pred_fallthru
      _
    %2976 = vsyncpa [#allocation4], 1
    %2977 = vsyncpa [#allocation7], 1
    %2978 = vsyncpa [#allocation10], 1
    %2979 = vsyncpa [#allocation5], 1

</llo_original>
